<compile_context>
chip_gen: v5e
topology: v5e:2x2
jax: 0.10.0
libtpu: 0.0.40
codegen_flags: <defaults>
</compile_context>

<pallas_src>
import jax
import jax.numpy as jnp
from jax.experimental import pallas as pl
from jax.experimental.pallas import tpu as pltpu


def _round_up(x, m):
    return (x + m - 1) // m * m


# ----------------------------- upconv kernel --------------------------------

def _upconv_kernel(x_ref, w_ref, b_ref, o_ref):
    # (tm, Cin) @ (Cin, 4*Cmid) + bias
    o_ref[...] = (jnp.dot(x_ref[...], w_ref[...],
                          preferred_element_type=jnp.float32) + b_ref[...])


def _upconv_matmul(x_flat, w_flat, b_row, tm_cap=1024):
    m, cin = x_flat.shape
    c4 = w_flat.shape[1]
    tm = min(tm_cap, _round_up(m, 8))
    mp = _round_up(m, tm)
    if mp != m:
        x_flat = jnp.pad(x_flat, ((0, mp - m), (0, 0)))
    out = pl.pallas_call(
        _upconv_kernel,
        out_shape=jax.ShapeDtypeStruct((mp, c4), jnp.float32),
        grid_spec=pltpu.PrefetchScalarGridSpec(
            num_scalar_prefetch=0,
            grid=(mp // tm,),
            in_specs=[pl.BlockSpec((tm, cin), lambda i: (i, 0)),
                      pl.BlockSpec((cin, c4), lambda i: (0, 0)),
                      pl.BlockSpec((1, c4), lambda i: (0, 0))],
            out_specs=pl.BlockSpec((tm, c4), lambda i: (i, 0)),
        ),
        compiler_params=pltpu.CompilerParams(
            dimension_semantics=("parallel",)),
    )(x_flat, w_flat, b_row)
    return out[:m] if mp != m else out


# ---------------------- fused residual-block kernel -------------------------

def _make_resblock_kernel(th, ws, hs, cz, cout, guard=8):
    """One grid step computes `th` output rows of one image.

    z window = image rows [t*th-2, (t+1)*th+2), flattened to (rows*ws, cz),
    arrives as a TH-row main block plus a 4-row tail block.  The 3x3 convs are
    9 shifted matmuls on that flat buffer; W-boundary wrap-around taps are
    masked, H boundaries are covered by the zero rows padded into z.
    """
    l1 = (th + 2) * ws            # h1 rows (1-row halo each side), flattened
    l2 = th * ws                  # output rows of this tile, flattened

    def kernel(zmain_ref, ztail_ref, w1_ref, t1_ref, w2_ref, sh2_ref,
               wsc_ref, col_ref, row_ref, o_ref):
        t = pl.program_id(1)

        # guard zero pixel-rows on both ends keep every tap slice in bounds
        zg = jnp.zeros((guard, cz), jnp.float32)
        z_all = jnp.concatenate([zg, zmain_ref[0], ztail_ref[0], zg], axis=0)

        col = col_ref[...]                      # (l1, 1) int32: flat idx % ws
        not_left = col != 0                     # valid source for a dw=-1 tap
        not_right = col != (ws - 1)             # valid source for a dw=+1 tap

        # ---- conv1 (bn1 scale folded into w1) + shift + relu ----
        acc1 = jnp.zeros((l1, cout), jnp.float32)
        for dh in (-1, 0, 1):
            for dw in (-1, 0, 1):
                start = guard + (1 + dh) * ws + dw
                sl = z_all[start:start + l1]
                if dw == -1:
                    sl = jnp.where(not_left, sl, 0.0)
                elif dw == 1:
                    sl = jnp.where(not_right, sl, 0.0)
                acc1 = acc1 + jnp.dot(sl, w1_ref[(dh + 1) * 3 + (dw + 1)],
                                      preferred_element_type=jnp.float32)
        h1 = jnp.maximum(acc1 + t1_ref[...], 0.0)
        # h1 rows outside the image must act as conv2's zero padding
        grow = row_ref[...] + (t * th - 1)      # global image row of each h1 row
        h1 = jnp.where((grow >= 0) & (grow < hs), h1, 0.0)

        hg = jnp.zeros((guard, cout), jnp.float32)
        h1_ext = jnp.concatenate([hg, h1, hg], axis=0)

        # ---- conv2 (bn2 scale folded into w2) ----
        col2 = col[:l2]
        nl2 = col2 != 0
        nr2 = col2 != (ws - 1)
        acc2 = jnp.zeros((l2, cout), jnp.float32)
        for dh in (-1, 0, 1):
            for dw in (-1, 0, 1):
                start = guard + (1 + dh) * ws + dw
                sl = h1_ext[start:start + l2]
                if dw == -1:
                    sl = jnp.where(nl2, sl, 0.0)
                elif dw == 1:
                    sl = jnp.where(nr2, sl, 0.0)
                acc2 = acc2 + jnp.dot(sl, w2_ref[(dh + 1) * 3 + (dw + 1)],
                                      preferred_element_type=jnp.float32)

        # ---- 1x1-conv shortcut (bn_sc folded) + residual add + relu ----
        z_c = z_all[guard + 2 * ws: guard + 2 * ws + l2]
        sc = jnp.dot(z_c, wsc_ref[...], preferred_element_type=jnp.float32)
        o_ref[0] = jnp.maximum(acc2 + sc + sh2_ref[...], 0.0)

    return kernel


def _choose_tile_rows(hs, ws, cz, cout, budget_bytes=6 << 20):
    """Largest divisor of hs (multiple of 4) whose working set fits the budget."""
    best = 4
    for th in range(4, hs + 1, 4):
        if hs % th:
            continue
        work = 4 * ws * ((th + 4) * cz * 6 + (th + 2) * cout * 4)
        if work <= budget_bytes:
            best = th
    return best


# ------------------------------- forward pass --------------------------------

def _bn_fold(gamma, beta, mean, var, eps=1e-5):
    s = gamma * jax.lax.rsqrt(var + eps)
    return s, beta - mean * s


def resunet_decoder_block(x, skip, params, *, tile_rows=None):
    """x: (N, Hin, Win, Cin) NHWC;  skip: (N, Hs, Ws, Cout) NHWC."""
    N, Hin, Win, Cin = x.shape
    Cmid = params['w_up'].shape[1]
    Cout = skip.shape[-1]
    Hs, Ws = skip.shape[1], skip.shape[2]

    # --- upconv: ConvTranspose2d(k=2, s=2) as one matmul + pixel shuffle ---
    x_flat = x.reshape(N * Hin * Win, Cin)
    w_up = params['w_up'].reshape(Cin, Cmid * 4)            # (Cin, Cmid, 2, 2)
    b_up = jnp.repeat(params['b_up'], 4).reshape(1, Cmid * 4)
    y = _upconv_matmul(x_flat, w_up, b_up)
    y = y.reshape(N, Hin, Win, Cmid, 2, 2)
    y = y.transpose(0, 1, 4, 2, 5, 3).reshape(N, 2 * Hin, 2 * Win, Cmid)

    # --- optional pad so y matches skip spatially (mirrors F.pad in torch) ---
    if (y.shape[1], y.shape[2]) != (Hs, Ws):
        dY = Hs - y.shape[1]
        dX = Ws - y.shape[2]
        y = jnp.pad(y, ((0, 0), (dY // 2, dY - dY // 2),
                        (dX // 2, dX - dX // 2), (0, 0)))

    # --- concat along channels, pad H by 2 (conv halo), flatten pixel rows ---
    z = jnp.concatenate([y, skip], axis=-1)                 # (N, Hs, Ws, Cz)
    Cz = Cmid + Cout
    assert Hs % 4 == 0 and Ws % 2 == 0, "spatial dims must be /4 (H) and /2 (W)"
    zp = jnp.pad(z, ((0, 0), (2, 2), (0, 0), (0, 0)))
    zp_flat = zp.reshape(N, (Hs + 4) * Ws, Cz)

    # --- fold BatchNorm (running stats) into weights / additive shifts ---
    s1, t1 = _bn_fold(*params['bn1'])
    s2, t2 = _bn_fold(*params['bn2'])
    ssc, tsc = _bn_fold(*params['bn_sc'])
    # torch conv weight (Cout, Cin, kh, kw) -> (kh*kw, Cin, Cout), scale folded
    w1 = (params['w1'].transpose(2, 3, 1, 0) * s1).reshape(9, Cz, Cout)
    w2 = (params['w2'].transpose(2, 3, 1, 0) * s2).reshape(9, Cout, Cout)
    wsc = params['w_sc'][:, :, 0, 0].T * ssc                # (Cz, Cout)
    t1 = t1.reshape(1, Cout)
    sh2 = (t2 + tsc).reshape(1, Cout)                       # bn2 shift + shortcut shift

    # --- tiling over (batch, H row-tiles) ---
    TH = tile_rows if tile_rows is not None else _choose_tile_rows(Hs, Ws, Cz, Cout)
    assert Hs % TH == 0 and TH % 4 == 0, (Hs, TH)
    nH = Hs // TH
    L1 = (TH + 2) * Ws
    flat = jnp.arange(L1, dtype=jnp.int32).reshape(L1, 1)
    col_idx = flat % Ws
    row_idx = flat // Ws

    kernel = _make_resblock_kernel(TH, Ws, Hs, Cz, Cout)
    flops = 2 * N * Hs * Ws * (9 * Cz * Cout + 9 * Cout * Cout + Cz * Cout)
    bytes_accessed = 4 * (zp_flat.size + N * Hs * Ws * Cout
                          + w1.size + w2.size + wsc.size)
    out = pl.pallas_call(
        kernel,
        out_shape=jax.ShapeDtypeStruct((N, Hs * Ws, Cout), jnp.float32),
        grid_spec=pltpu.PrefetchScalarGridSpec(
            num_scalar_prefetch=0,
            grid=(N, nH),
            in_specs=[
                # z window = TH-row main block + 4-row tail block (the halo),
                # both plain Blocked views of the same padded/flattened array.
                pl.BlockSpec((1, TH * Ws, Cz), lambda n, t: (n, t, 0)),
                pl.BlockSpec((1, 4 * Ws, Cz),
                             lambda n, t: (n, (t + 1) * (TH // 4), 0)),
                pl.BlockSpec((9, Cz, Cout), lambda n, t: (0, 0, 0)),
                pl.BlockSpec((1, Cout), lambda n, t: (0, 0)),
                pl.BlockSpec((9, Cout, Cout), lambda n, t: (0, 0, 0)),
                pl.BlockSpec((1, Cout), lambda n, t: (0, 0)),
                pl.BlockSpec((Cz, Cout), lambda n, t: (0, 0)),
                pl.BlockSpec((L1, 1), lambda n, t: (0, 0)),
                pl.BlockSpec((L1, 1), lambda n, t: (0, 0)),
            ],
            out_specs=pl.BlockSpec((1, TH * Ws, Cout), lambda n, t: (n, t, 0)),
        ),
        compiler_params=pltpu.CompilerParams(
            dimension_semantics=("parallel", "parallel"),
            vmem_limit_bytes=32 * 1024 * 1024),
        cost_estimate=pl.CostEstimate(flops=flops, transcendentals=0,
                                      bytes_accessed=bytes_accessed),
    )(zp_flat, zp_flat, w1, t1, w2, sh2, wsc, col_idx, row_idx)
    return out.reshape(N, Hs, Ws, Cout)


# ------------------------------ pure-JAX reference ---------------------------

def _conv3x3_ref(img, w_torch):
    w = jnp.transpose(w_torch, (2, 3, 1, 0))                # HWIO
    return jax.lax.conv_general_dilated(
        img, w, window_strides=(1, 1), padding='SAME',
        dimension_numbers=('NHWC', 'HWIO', 'NHWC'))


def reference(x, skip, params):
    N, Hin, Win, _ = x.shape
    Cmid = params['w_up'].shape[1]
    y = jnp.einsum('nijc,cmab->niajbm', x, params['w_up'])
    y = y.reshape(N, 2 * Hin, 2 * Win, Cmid) + params['b_up']
    z = jnp.concatenate([y, skip], axis=-1)

    def bn(v, p, eps=1e-5):
        g, b, m, var = p
        return (v - m) * g * jax.lax.rsqrt(var + eps) + b

    h = jax.nn.relu(bn(_conv3x3_ref(z, params['w1']), params['bn1']))
    h2 = bn(_conv3x3_ref(h, params['w2']), params['bn2'])
    sc = bn(jnp.einsum('nhwc,oc->nhwo', z, params['w_sc'][:, :, 0, 0]),
            params['bn_sc'])
    return jax.nn.relu(h2 + sc)


# ----------------------------------- main ------------------------------------

if __name__ == "__main__":
    N, Cin, Cmid, Cout = 2, 8, 8, 8
    Hin = Win = 8
    Hs = Ws = 16

    key = jax.random.PRNGKey(0)
    ks = jax.random.split(key, 16)

    def nrm(k, shape, scale=0.1):
        return scale * jax.random.normal(k, shape, dtype=jnp.float32)

    params = {
        'w_up': nrm(ks[0], (Cin, Cmid, 2, 2)),
        'b_up': nrm(ks[1], (Cmid,)),
        'w1': nrm(ks[2], (Cout, Cmid + Cout, 3, 3)),
        'bn1': (1.0 + nrm(ks[3], (Cout,)), nrm(ks[4], (Cout,)),
                nrm(ks[5], (Cout,)),
                1.0 + 0.5 * jax.random.uniform(ks[6], (Cout,), dtype=jnp.float32)),
        'w2': nrm(ks[7], (Cout, Cout, 3, 3)),
        'bn2': (1.0 + nrm(ks[8], (Cout,)), nrm(ks[9], (Cout,)),
                nrm(ks[10], (Cout,)),
                1.0 + 0.5 * jax.random.uniform(ks[11], (Cout,), dtype=jnp.float32)),
        'w_sc': nrm(ks[12], (Cout, Cmid + Cout, 1, 1)),
        'bn_sc': (jnp.ones((Cout,), jnp.float32), jnp.zeros((Cout,), jnp.float32),
                  jnp.zeros((Cout,), jnp.float32), jnp.ones((Cout,), jnp.float32)),
    }

    x = jax.random.normal(ks[13], (N, Hin, Win, Cin), dtype=jnp.float32)
    skip = jax.random.normal(ks[14], (N, Hs, Ws, Cout), dtype=jnp.float32)

    ref = jax.block_until_ready(reference(x, skip, params))

    fwd = jax.jit(lambda a, b: resunet_decoder_block(a, b, params))
    out = jax.block_until_ready(fwd(x, skip))
    assert out.shape == (N, Hs, Ws, Cout), out.shape
    assert jnp.allclose(out, ref, atol=1e-2, rtol=1e-2), \
        float(jnp.max(jnp.abs(out - ref)))

    # also exercise the multi-H-tile halo path explicitly
    fwd_tiled = jax.jit(lambda a, b: resunet_decoder_block(a, b, params,
                                                           tile_rows=4))
    out_tiled = jax.block_until_ready(fwd_tiled(x, skip))
    assert jnp.allclose(out_tiled, ref, atol=1e-2, rtol=1e-2), \
        float(jnp.max(jnp.abs(out_tiled - ref)))

    print("KERNEL_OK")
</pallas_src>

<mosaic_0001>
module attributes {stable_mosaic.version = 11 : i64} {
  func.func @_upconv_kernel(%arg0: i32, %arg1: memref<128x8xf32, #tpu.memory_space<vmem>>, %arg2: memref<8x32xf32, #tpu.memory_space<vmem>>, %arg3: memref<1x32xf32, #tpu.memory_space<vmem>>, %arg4: memref<128x32xf32, #tpu.memory_space<vmem>>) attributes {dimension_semantics = [#tpu.dimension_semantics<parallel>], iteration_bounds = array<i64: 1>, scalar_prefetch = 0 : i64, scratch_operands = 0 : i64, tpu.core_type = #tpu.core_type<tc>, window_params = [{transform_indices = @transform_0, window_bounds = array<i64: 128, 8>}, {pipeline_mode = #tpu.pipeline_mode<synchronous>, transform_indices = @transform_1, window_bounds = array<i64: 8, 32>}, {pipeline_mode = #tpu.pipeline_mode<synchronous>, transform_indices = @transform_2, window_bounds = array<i64: 1, 32>}, {transform_indices = @transform_3, window_bounds = array<i64: 128, 32>}]} {
    %c0 = arith.constant 0 : index
    %c0_0 = arith.constant 0 : index
    %0 = vector.load %arg1[%c0, %c0_0] : memref<128x8xf32, #tpu.memory_space<vmem>>, vector<128x8xf32>
    %c0_1 = arith.constant 0 : index
    %c0_2 = arith.constant 0 : index
    %1 = vector.load %arg2[%c0_1, %c0_2] : memref<8x32xf32, #tpu.memory_space<vmem>>, vector<8x32xf32>
    %cst = arith.constant dense<0.000000e+00> : vector<128x32xf32>
    %2 = tpu.matmul %0, %1, %cst {dimension_numbers = #tpu.dot_dimension_numbers<[1], [0], [0], [1], [0, 0, 1, 1], [], []>} : vector<128x8xf32>, vector<8x32xf32>, vector<128x32xf32> -> vector<128x32xf32>
    %c0_3 = arith.constant 0 : index
    %c0_4 = arith.constant 0 : index
    %3 = vector.load %arg3[%c0_3, %c0_4] : memref<1x32xf32, #tpu.memory_space<vmem>>, vector<1x32xf32>
    %4 = vector.broadcast %3 : vector<1x32xf32> to vector<128x32xf32>
    %5 = arith.addf %2, %4 : vector<128x32xf32>
    %c0_5 = arith.constant 0 : index
    %c0_6 = arith.constant 0 : index
    %6 = vector.load %arg4[%c0_5, %c0_6] : memref<128x32xf32, #tpu.memory_space<vmem>>, vector<128x32xf32>
    tpu.vector_store %arg4[%c0_5, %c0_6], %5 {strides = array<i32>} : memref<128x32xf32, #tpu.memory_space<vmem>>, vector<128x32xf32>,
    return
  }
  func.func @transform_0(%arg0: i32) -> (i32, i32) {
    %c0_i32 = arith.constant 0 : i32
    %c0_i32_0 = arith.constant 0 : i32
    return %arg0, %c0_i32 : i32, i32
  }
  func.func @transform_1(%arg0: i32) -> (i32, i32) {
    %c0_i32 = arith.constant 0 : i32
    %c0_i32_0 = arith.constant 0 : i32
    %c0_i32_1 = arith.constant 0 : i32
    return %c0_i32, %c0_i32_0 : i32, i32
  }
  func.func @transform_2(%arg0: i32) -> (i32, i32) {
    %c0_i32 = arith.constant 0 : i32
    %c0_i32_0 = arith.constant 0 : i32
    %c0_i32_1 = arith.constant 0 : i32
    return %c0_i32, %c0_i32_0 : i32, i32
  }
  func.func @transform_3(%arg0: i32) -> (i32, i32) {
    %c0_i32 = arith.constant 0 : i32
    %c0_i32_0 = arith.constant 0 : i32
    return %arg0, %c0_i32 : i32, i32
  }
}

module attributes {stable_mosaic.version = 11 : i64} {
  func.func @kernel(%arg0: i32, %arg1: i32, %arg2: memref<1x256x16xf32, #tpu.memory_space<vmem>>, %arg3: memref<1x64x16xf32, #tpu.memory_space<vmem>>, %arg4: memref<9x16x8xf32, #tpu.memory_space<vmem>>, %arg5: memref<1x8xf32, #tpu.memory_space<vmem>>, %arg6: memref<9x8x8xf32, #tpu.memory_space<vmem>>, %arg7: memref<1x8xf32, #tpu.memory_space<vmem>>, %arg8: memref<16x8xf32, #tpu.memory_space<vmem>>, %arg9: memref<288x1xi32, #tpu.memory_space<vmem>>, %arg10: memref<288x1xi32, #tpu.memory_space<vmem>>, %arg11: memref<1x256x8xf32, #tpu.memory_space<vmem>>) attributes {dimension_semantics = [#tpu.dimension_semantics<parallel>, #tpu.dimension_semantics<parallel>], iteration_bounds = array<i64: 2, 1>, scalar_prefetch = 0 : i64, scratch_operands = 0 : i64, tpu.core_type = #tpu.core_type<tc>, window_params = [{transform_indices = @transform_0, window_bounds = array<i64: 1, 256, 16>}, {transform_indices = @transform_1, window_bounds = array<i64: 1, 64, 16>}, {pipeline_mode = #tpu.pipeline_mode<synchronous>, transform_indices = @transform_2, window_bounds = array<i64: 9, 16, 8>}, {pipeline_mode = #tpu.pipeline_mode<synchronous>, transform_indices = @transform_3, window_bounds = array<i64: 1, 8>}, {pipeline_mode = #tpu.pipeline_mode<synchronous>, transform_indices = @transform_4, window_bounds = array<i64: 9, 8, 8>}, {pipeline_mode = #tpu.pipeline_mode<synchronous>, transform_indices = @transform_5, window_bounds = array<i64: 1, 8>}, {pipeline_mode = #tpu.pipeline_mode<synchronous>, transform_indices = @transform_6, window_bounds = array<i64: 16, 8>}, {pipeline_mode = #tpu.pipeline_mode<synchronous>, transform_indices = @transform_7, window_bounds = array<i64: 288, 1>}, {pipeline_mode = #tpu.pipeline_mode<synchronous>, transform_indices = @transform_8, window_bounds = array<i64: 288, 1>}, {transform_indices = @transform_9, window_bounds = array<i64: 1, 256, 8>}]} {
    %cst = arith.constant 0.000000e+00 : f32
    %0 = vector.broadcast %cst : f32 to vector<8x16xf32>
    %c0 = arith.constant 0 : index
    %c0_0 = arith.constant 0 : index
    %c0_1 = arith.constant 0 : index
    %1 = vector.load %arg2[%c0, %c0_0, %c0_1] : memref<1x256x16xf32, #tpu.memory_space<vmem>>, vector<1x256x16xf32>
    %2 = vector.shape_cast %1 : vector<1x256x16xf32> to vector<256x16xf32>
    %c0_2 = arith.constant 0 : index
    %c0_3 = arith.constant 0 : index
    %c0_4 = arith.constant 0 : index
    %3 = vector.load %arg3[%c0_2, %c0_3, %c0_4] : memref<1x64x16xf32, #tpu.memory_space<vmem>>, vector<1x64x16xf32>
    %4 = vector.shape_cast %3 : vector<1x64x16xf32> to vector<64x16xf32>
    %5 = tpu.concatenate %0, %2, %4, %0 in 0 : vector<8x16xf32>, vector<256x16xf32>, vector<64x16xf32>, vector<8x16xf32> -> vector<336x16xf32>
    %c0_5 = arith.constant 0 : index
    %c0_6 = arith.constant 0 : index
    %6 = vector.load %arg9[%c0_5, %c0_6] : memref<288x1xi32, #tpu.memory_space<vmem>>, vector<288x1xi32>
    %c0_i32 = arith.constant 0 : i32
    %7 = vector.broadcast %c0_i32 : i32 to vector<288x1xi32>
    %8 = arith.cmpi ne, %6, %7 : vector<288x1xi32>
    %c15_i32 = arith.constant 15 : i32
    %9 = vector.broadcast %c15_i32 : i32 to vector<288x1xi32>
    %10 = arith.cmpi ne, %6, %9 : vector<288x1xi32>
    %cst_7 = arith.constant 0.000000e+00 : f32
    %11 = vector.broadcast %cst_7 : f32 to vector<288x8xf32>
    %12 = vector.extract_strided_slice %5 {offsets = [7, 0], sizes = [288, 16], strides = [1, 1]} : vector<336x16xf32> to vector<288x16xf32>
    %cst_8 = arith.constant 0.000000e+00 : f32
    %13 = vector.shape_cast %8 : vector<288x1xi1> to vector<288x1xi1>
    %14 = vector.broadcast %13 : vector<288x1xi1> to vector<288x16xi1>
    %15 = vector.broadcast %cst_8 : f32 to vector<288x16xf32>
    %16 = arith.select %14, %12, %15 : vector<288x16xi1>, vector<288x16xf32>
    %c0_9 = arith.constant 0 : index
    %c0_10 = arith.constant 0 : index
    %c0_11 = arith.constant 0 : index
    %17 = vector.load %arg4[%c0_9, %c0_10, %c0_11] : memref<9x16x8xf32, #tpu.memory_space<vmem>>, vector<1x16x8xf32>
    %18 = vector.shape_cast %17 : vector<1x16x8xf32> to vector<16x8xf32>
    %cst_12 = arith.constant dense<0.000000e+00> : vector<288x8xf32>
    %19 = tpu.matmul %16, %18, %cst_12 {dimension_numbers = #tpu.dot_dimension_numbers<[1], [0], [0], [1], [0, 0, 1, 1], [], []>} : vector<288x16xf32>, vector<16x8xf32>, vector<288x8xf32> -> vector<288x8xf32>
    %20 = arith.addf %11, %19 : vector<288x8xf32>
    %21 = vector.extract_strided_slice %5 {offsets = [8, 0], sizes = [288, 16], strides = [1, 1]} : vector<336x16xf32> to vector<288x16xf32>
    %c1 = arith.constant 1 : index
    %c0_13 = arith.constant 0 : index
    %c0_14 = arith.constant 0 : index
    %22 = vector.load %arg4[%c1, %c0_13, %c0_14] : memref<9x16x8xf32, #tpu.memory_space<vmem>>, vector<1x16x8xf32>
    %23 = vector.shape_cast %22 : vector<1x16x8xf32> to vector<16x8xf32>
    %cst_15 = arith.constant dense<0.000000e+00> : vector<288x8xf32>
    %24 = tpu.matmul %21, %23, %cst_15 {dimension_numbers = #tpu.dot_dimension_numbers<[1], [0], [0], [1], [0, 0, 1, 1], [], []>} : vector<288x16xf32>, vector<16x8xf32>, vector<288x8xf32> -> vector<288x8xf32>
    %25 = arith.addf %20, %24 : vector<288x8xf32>
    %26 = vector.extract_strided_slice %5 {offsets = [9, 0], sizes = [288, 16], strides = [1, 1]} : vector<336x16xf32> to vector<288x16xf32>
    %cst_16 = arith.constant 0.000000e+00 : f32
    %27 = vector.shape_cast %10 : vector<288x1xi1> to vector<288x1xi1>
    %28 = vector.broadcast %27 : vector<288x1xi1> to vector<288x16xi1>
    %29 = vector.broadcast %cst_16 : f32 to vector<288x16xf32>
    %30 = arith.select %28, %26, %29 : vector<288x16xi1>, vector<288x16xf32>
    %c2 = arith.constant 2 : index
    %c0_17 = arith.constant 0 : index
    %c0_18 = arith.constant 0 : index
    %31 = vector.load %arg4[%c2, %c0_17, %c0_18] : memref<9x16x8xf32, #tpu.memory_space<vmem>>, vector<1x16x8xf32>
    %32 = vector.shape_cast %31 : vector<1x16x8xf32> to vector<16x8xf32>
    %cst_19 = arith.constant dense<0.000000e+00> : vector<288x8xf32>
    %33 = tpu.matmul %30, %32, %cst_19 {dimension_numbers = #tpu.dot_dimension_numbers<[1], [0], [0], [1], [0, 0, 1, 1], [], []>} : vector<288x16xf32>, vector<16x8xf32>, vector<288x8xf32> -> vector<288x8xf32>
    %34 = arith.addf %25, %33 : vector<288x8xf32>
    %35 = vector.extract_strided_slice %5 {offsets = [23, 0], sizes = [288, 16], strides = [1, 1]} : vector<336x16xf32> to vector<288x16xf32>
    %cst_20 = arith.constant 0.000000e+00 : f32
    %36 = vector.shape_cast %8 : vector<288x1xi1> to vector<288x1xi1>
    %37 = vector.broadcast %36 : vector<288x1xi1> to vector<288x16xi1>
    %38 = vector.broadcast %cst_20 : f32 to vector<288x16xf32>
    %39 = arith.select %37, %35, %38 : vector<288x16xi1>, vector<288x16xf32>
    %c3 = arith.constant 3 : index
    %c0_21 = arith.constant 0 : index
    %c0_22 = arith.constant 0 : index
    %40 = vector.load %arg4[%c3, %c0_21, %c0_22] : memref<9x16x8xf32, #tpu.memory_space<vmem>>, vector<1x16x8xf32>
    %41 = vector.shape_cast %40 : vector<1x16x8xf32> to vector<16x8xf32>
    %cst_23 = arith.constant dense<0.000000e+00> : vector<288x8xf32>
    %42 = tpu.matmul %39, %41, %cst_23 {dimension_numbers = #tpu.dot_dimension_numbers<[1], [0], [0], [1], [0, 0, 1, 1], [], []>} : vector<288x16xf32>, vector<16x8xf32>, vector<288x8xf32> -> vector<288x8xf32>
    %43 = arith.addf %34, %42 : vector<288x8xf32>
    %44 = vector.extract_strided_slice %5 {offsets = [24, 0], sizes = [288, 16], strides = [1, 1]} : vector<336x16xf32> to vector<288x16xf32>
    %c4 = arith.constant 4 : index
    %c0_24 = arith.constant 0 : index
    %c0_25 = arith.constant 0 : index
    %45 = vector.load %arg4[%c4, %c0_24, %c0_25] : memref<9x16x8xf32, #tpu.memory_space<vmem>>, vector<1x16x8xf32>
    %46 = vector.shape_cast %45 : vector<1x16x8xf32> to vector<16x8xf32>
    %cst_26 = arith.constant dense<0.000000e+00> : vector<288x8xf32>
    %47 = tpu.matmul %44, %46, %cst_26 {dimension_numbers = #tpu.dot_dimension_numbers<[1], [0], [0], [1], [0, 0, 1, 1], [], []>} : vector<288x16xf32>, vector<16x8xf32>, vector<288x8xf32> -> vector<288x8xf32>
    %48 = arith.addf %43, %47 : vector<288x8xf32>
    %49 = vector.extract_strided_slice %5 {offsets = [25, 0], sizes = [288, 16], strides = [1, 1]} : vector<336x16xf32> to vector<288x16xf32>
    %cst_27 = arith.constant 0.000000e+00 : f32
    %50 = vector.shape_cast %10 : vector<288x1xi1> to vector<288x1xi1>
    %51 = vector.broadcast %50 : vector<288x1xi1> to vector<288x16xi1>
    %52 = vector.broadcast %cst_27 : f32 to vector<288x16xf32>
    %53 = arith.select %51, %49, %52 : vector<288x16xi1>, vector<288x16xf32>
    %c5 = arith.constant 5 : index
    %c0_28 = arith.constant 0 : index
    %c0_29 = arith.constant 0 : index
    %54 = vector.load %arg4[%c5, %c0_28, %c0_29] : memref<9x16x8xf32, #tpu.memory_space<vmem>>, vector<1x16x8xf32>
    %55 = vector.shape_cast %54 : vector<1x16x8xf32> to vector<16x8xf32>
    %cst_30 = arith.constant dense<0.000000e+00> : vector<288x8xf32>
    %56 = tpu.matmul %53, %55, %cst_30 {dimension_numbers = #tpu.dot_dimension_numbers<[1], [0], [0], [1], [0, 0, 1, 1], [], []>} : vector<288x16xf32>, vector<16x8xf32>, vector<288x8xf32> -> vector<288x8xf32>
    %57 = arith.addf %48, %56 : vector<288x8xf32>
    %58 = vector.extract_strided_slice %5 {offsets = [39, 0], sizes = [288, 16], strides = [1, 1]} : vector<336x16xf32> to vector<288x16xf32>
    %cst_31 = arith.constant 0.000000e+00 : f32
    %59 = vector.shape_cast %8 : vector<288x1xi1> to vector<288x1xi1>
    %60 = vector.broadcast %59 : vector<288x1xi1> to vector<288x16xi1>
    %61 = vector.broadcast %cst_31 : f32 to vector<288x16xf32>
    %62 = arith.select %60, %58, %61 : vector<288x16xi1>, vector<288x16xf32>
    %c6 = arith.constant 6 : index
    %c0_32 = arith.constant 0 : index
    %c0_33 = arith.constant 0 : index
    %63 = vector.load %arg4[%c6, %c0_32, %c0_33] : memref<9x16x8xf32, #tpu.memory_space<vmem>>, vector<1x16x8xf32>
    %64 = vector.shape_cast %63 : vector<1x16x8xf32> to vector<16x8xf32>
    %cst_34 = arith.constant dense<0.000000e+00> : vector<288x8xf32>
    %65 = tpu.matmul %62, %64, %cst_34 {dimension_numbers = #tpu.dot_dimension_numbers<[1], [0], [0], [1], [0, 0, 1, 1], [], []>} : vector<288x16xf32>, vector<16x8xf32>, vector<288x8xf32> -> vector<288x8xf32>
    %66 = arith.addf %57, %65 : vector<288x8xf32>
    %67 = vector.extract_strided_slice %5 {offsets = [40, 0], sizes = [288, 16], strides = [1, 1]} : vector<336x16xf32> to vector<288x16xf32>
    %c7 = arith.constant 7 : index
    %c0_35 = arith.constant 0 : index
    %c0_36 = arith.constant 0 : index
    %68 = vector.load %arg4[%c7, %c0_35, %c0_36] : memref<9x16x8xf32, #tpu.memory_space<vmem>>, vector<1x16x8xf32>
    %69 = vector.shape_cast %68 : vector<1x16x8xf32> to vector<16x8xf32>
    %cst_37 = arith.constant dense<0.000000e+00> : vector<288x8xf32>
    %70 = tpu.matmul %67, %69, %cst_37 {dimension_numbers = #tpu.dot_dimension_numbers<[1], [0], [0], [1], [0, 0, 1, 1], [], []>} : vector<288x16xf32>, vector<16x8xf32>, vector<288x8xf32> -> vector<288x8xf32>
    %71 = arith.addf %66, %70 : vector<288x8xf32>
    %72 = vector.extract_strided_slice %5 {offsets = [41, 0], sizes = [288, 16], strides = [1, 1]} : vector<336x16xf32> to vector<288x16xf32>
    %cst_38 = arith.constant 0.000000e+00 : f32
    %73 = vector.shape_cast %10 : vector<288x1xi1> to vector<288x1xi1>
    %74 = vector.broadcast %73 : vector<288x1xi1> to vector<288x16xi1>
    %75 = vector.broadcast %cst_38 : f32 to vector<288x16xf32>
    %76 = arith.select %74, %72, %75 : vector<288x16xi1>, vector<288x16xf32>
    %c8 = arith.constant 8 : index
    %c0_39 = arith.constant 0 : index
    %c0_40 = arith.constant 0 : index
    %77 = vector.load %arg4[%c8, %c0_39, %c0_40] : memref<9x16x8xf32, #tpu.memory_space<vmem>>, vector<1x16x8xf32>
    %78 = vector.shape_cast %77 : vector<1x16x8xf32> to vector<16x8xf32>
    %cst_41 = arith.constant dense<0.000000e+00> : vector<288x8xf32>
    %79 = tpu.matmul %76, %78, %cst_41 {dimension_numbers = #tpu.dot_dimension_numbers<[1], [0], [0], [1], [0, 0, 1, 1], [], []>} : vector<288x16xf32>, vector<16x8xf32>, vector<288x8xf32> -> vector<288x8xf32>
    %80 = arith.addf %71, %79 : vector<288x8xf32>
    %c0_42 = arith.constant 0 : index
    %c0_43 = arith.constant 0 : index
    %81 = vector.load %arg5[%c0_42, %c0_43] : memref<1x8xf32, #tpu.memory_space<vmem>>, vector<1x8xf32>
    %82 = vector.broadcast %81 : vector<1x8xf32> to vector<288x8xf32>
    %83 = arith.addf %80, %82 : vector<288x8xf32>
    %cst_44 = arith.constant 0.000000e+00 : f32
    %84 = vector.broadcast %cst_44 : f32 to vector<288x8xf32>
    %85 = arith.maximumf %83, %84 : vector<288x8xf32>
    %c0_45 = arith.constant 0 : index
    %c0_46 = arith.constant 0 : index
    %86 = vector.load %arg10[%c0_45, %c0_46] : memref<288x1xi32, #tpu.memory_space<vmem>>, vector<288x1xi32>
    %c16_i32 = arith.constant 16 : i32
    %87 = arith.muli %arg1, %c16_i32 : i32
    %c1_i32 = arith.constant 1 : i32
    %88 = arith.subi %87, %c1_i32 : i32
    %89 = vector.broadcast %88 : i32 to vector<288x1xi32>
    %90 = arith.addi %86, %89 : vector<288x1xi32>
    %c0_i32_47 = arith.constant 0 : i32
    %91 = vector.broadcast %c0_i32_47 : i32 to vector<288x1xi32>
    %92 = arith.cmpi sge, %90, %91 : vector<288x1xi32>
    %c16_i32_48 = arith.constant 16 : i32
    %93 = vector.broadcast %c16_i32_48 : i32 to vector<288x1xi32>
    %94 = arith.cmpi slt, %90, %93 : vector<288x1xi32>
    %95 = arith.andi %92, %94 : vector<288x1xi1>
    %cst_49 = arith.constant 0.000000e+00 : f32
    %96 = vector.shape_cast %95 : vector<288x1xi1> to vector<288x1xi1>
    %97 = vector.broadcast %96 : vector<288x1xi1> to vector<288x8xi1>
    %98 = vector.broadcast %cst_49 : f32 to vector<288x8xf32>
    %99 = arith.select %97, %85, %98 : vector<288x8xi1>, vector<288x8xf32>
    %cst_50 = arith.constant 0.000000e+00 : f32
    %100 = vector.broadcast %cst_50 : f32 to vector<8x8xf32>
    %101 = tpu.concatenate %100, %99, %100 in 0 : vector<8x8xf32>, vector<288x8xf32>, vector<8x8xf32> -> vector<304x8xf32>
    %102 = vector.extract_strided_slice %6 {offsets = [0, 0], sizes = [256, 1], strides = [1, 1]} : vector<288x1xi32> to vector<256x1xi32>
    %c0_i32_51 = arith.constant 0 : i32
    %103 = vector.broadcast %c0_i32_51 : i32 to vector<256x1xi32>
    %104 = arith.cmpi ne, %102, %103 : vector<256x1xi32>
    %c15_i32_52 = arith.constant 15 : i32
    %105 = vector.broadcast %c15_i32_52 : i32 to vector<256x1xi32>
    %106 = arith.cmpi ne, %102, %105 : vector<256x1xi32>
    %cst_53 = arith.constant 0.000000e+00 : f32
    %107 = vector.broadcast %cst_53 : f32 to vector<256x8xf32>
    %108 = vector.extract_strided_slice %101 {offsets = [7, 0], sizes = [256, 8], strides = [1, 1]} : vector<304x8xf32> to vector<256x8xf32>
    %cst_54 = arith.constant 0.000000e+00 : f32
    %109 = vector.shape_cast %104 : vector<256x1xi1> to vector<256x1xi1>
    %110 = vector.broadcast %109 : vector<256x1xi1> to vector<256x8xi1>
    %111 = vector.broadcast %cst_54 : f32 to vector<256x8xf32>
    %112 = arith.select %110, %108, %111 : vector<256x8xi1>, vector<256x8xf32>
    %c0_55 = arith.constant 0 : index
    %c0_56 = arith.constant 0 : index
    %c0_57 = arith.constant 0 : index
    %113 = vector.load %arg6[%c0_55, %c0_56, %c0_57] : memref<9x8x8xf32, #tpu.memory_space<vmem>>, vector<1x8x8xf32>
    %114 = vector.shape_cast %113 : vector<1x8x8xf32> to vector<8x8xf32>
    %cst_58 = arith.constant dense<0.000000e+00> : vector<256x8xf32>
    %115 = tpu.matmul %112, %114, %cst_58 {dimension_numbers = #tpu.dot_dimension_numbers<[1], [0], [0], [1], [0, 0, 1, 1], [], []>} : vector<256x8xf32>, vector<8x8xf32>, vector<256x8xf32> -> vector<256x8xf32>
    %116 = arith.addf %107, %115 : vector<256x8xf32>
    %117 = vector.extract_strided_slice %101 {offsets = [8, 0], sizes = [256, 8], strides = [1, 1]} : vector<304x8xf32> to vector<256x8xf32>
    %c1_59 = arith.constant 1 : index
    %c0_60 = arith.constant 0 : index
    %c0_61 = arith.constant 0 : index
    %118 = vector.load %arg6[%c1_59, %c0_60, %c0_61] : memref<9x8x8xf32, #tpu.memory_space<vmem>>, vector<1x8x8xf32>
    %119 = vector.shape_cast %118 : vector<1x8x8xf32> to vector<8x8xf32>
    %cst_62 = arith.constant dense<0.000000e+00> : vector<256x8xf32>
    %120 = tpu.matmul %117, %119, %cst_62 {dimension_numbers = #tpu.dot_dimension_numbers<[1], [0], [0], [1], [0, 0, 1, 1], [], []>} : vector<256x8xf32>, vector<8x8xf32>, vector<256x8xf32> -> vector<256x8xf32>
    %121 = arith.addf %116, %120 : vector<256x8xf32>
    %122 = vector.extract_strided_slice %101 {offsets = [9, 0], sizes = [256, 8], strides = [1, 1]} : vector<304x8xf32> to vector<256x8xf32>
    %cst_63 = arith.constant 0.000000e+00 : f32
    %123 = vector.shape_cast %106 : vector<256x1xi1> to vector<256x1xi1>
    %124 = vector.broadcast %123 : vector<256x1xi1> to vector<256x8xi1>
    %125 = vector.broadcast %cst_63 : f32 to vector<256x8xf32>
    %126 = arith.select %124, %122, %125 : vector<256x8xi1>, vector<256x8xf32>
    %c2_64 = arith.constant 2 : index
    %c0_65 = arith.constant 0 : index
    %c0_66 = arith.constant 0 : index
    %127 = vector.load %arg6[%c2_64, %c0_65, %c0_66] : memref<9x8x8xf32, #tpu.memory_space<vmem>>, vector<1x8x8xf32>
    %128 = vector.shape_cast %127 : vector<1x8x8xf32> to vector<8x8xf32>
    %cst_67 = arith.constant dense<0.000000e+00> : vector<256x8xf32>
    %129 = tpu.matmul %126, %128, %cst_67 {dimension_numbers = #tpu.dot_dimension_numbers<[1], [0], [0], [1], [0, 0, 1, 1], [], []>} : vector<256x8xf32>, vector<8x8xf32>, vector<256x8xf32> -> vector<256x8xf32>
    %130 = arith.addf %121, %129 : vector<256x8xf32>
    %131 = vector.extract_strided_slice %101 {offsets = [23, 0], sizes = [256, 8], strides = [1, 1]} : vector<304x8xf32> to vector<256x8xf32>
    %cst_68 = arith.constant 0.000000e+00 : f32
    %132 = vector.shape_cast %104 : vector<256x1xi1> to vector<256x1xi1>
    %133 = vector.broadcast %132 : vector<256x1xi1> to vector<256x8xi1>
    %134 = vector.broadcast %cst_68 : f32 to vector<256x8xf32>
    %135 = arith.select %133, %131, %134 : vector<256x8xi1>, vector<256x8xf32>
    %c3_69 = arith.constant 3 : index
    %c0_70 = arith.constant 0 : index
    %c0_71 = arith.constant 0 : index
    %136 = vector.load %arg6[%c3_69, %c0_70, %c0_71] : memref<9x8x8xf32, #tpu.memory_space<vmem>>, vector<1x8x8xf32>
    %137 = vector.shape_cast %136 : vector<1x8x8xf32> to vector<8x8xf32>
    %cst_72 = arith.constant dense<0.000000e+00> : vector<256x8xf32>
    %138 = tpu.matmul %135, %137, %cst_72 {dimension_numbers = #tpu.dot_dimension_numbers<[1], [0], [0], [1], [0, 0, 1, 1], [], []>} : vector<256x8xf32>, vector<8x8xf32>, vector<256x8xf32> -> vector<256x8xf32>
    %139 = arith.addf %130, %138 : vector<256x8xf32>
    %140 = vector.extract_strided_slice %101 {offsets = [24, 0], sizes = [256, 8], strides = [1, 1]} : vector<304x8xf32> to vector<256x8xf32>
    %c4_73 = arith.constant 4 : index
    %c0_74 = arith.constant 0 : index
    %c0_75 = arith.constant 0 : index
    %141 = vector.load %arg6[%c4_73, %c0_74, %c0_75] : memref<9x8x8xf32, #tpu.memory_space<vmem>>, vector<1x8x8xf32>
    %142 = vector.shape_cast %141 : vector<1x8x8xf32> to vector<8x8xf32>
    %cst_76 = arith.constant dense<0.000000e+00> : vector<256x8xf32>
    %143 = tpu.matmul %140, %142, %cst_76 {dimension_numbers = #tpu.dot_dimension_numbers<[1], [0], [0], [1], [0, 0, 1, 1], [], []>} : vector<256x8xf32>, vector<8x8xf32>, vector<256x8xf32> -> vector<256x8xf32>
    %144 = arith.addf %139, %143 : vector<256x8xf32>
    %145 = vector.extract_strided_slice %101 {offsets = [25, 0], sizes = [256, 8], strides = [1, 1]} : vector<304x8xf32> to vector<256x8xf32>
    %cst_77 = arith.constant 0.000000e+00 : f32
    %146 = vector.shape_cast %106 : vector<256x1xi1> to vector<256x1xi1>
    %147 = vector.broadcast %146 : vector<256x1xi1> to vector<256x8xi1>
    %148 = vector.broadcast %cst_77 : f32 to vector<256x8xf32>
    %149 = arith.select %147, %145, %148 : vector<256x8xi1>, vector<256x8xf32>
    %c5_78 = arith.constant 5 : index
    %c0_79 = arith.constant 0 : index
    %c0_80 = arith.constant 0 : index
    %150 = vector.load %arg6[%c5_78, %c0_79, %c0_80] : memref<9x8x8xf32, #tpu.memory_space<vmem>>, vector<1x8x8xf32>
    %151 = vector.shape_cast %150 : vector<1x8x8xf32> to vector<8x8xf32>
    %cst_81 = arith.constant dense<0.000000e+00> : vector<256x8xf32>
    %152 = tpu.matmul %149, %151, %cst_81 {dimension_numbers = #tpu.dot_dimension_numbers<[1], [0], [0], [1], [0, 0, 1, 1], [], []>} : vector<256x8xf32>, vector<8x8xf32>, vector<256x8xf32> -> vector<256x8xf32>
    %153 = arith.addf %144, %152 : vector<256x8xf32>
    %154 = vector.extract_strided_slice %101 {offsets = [39, 0], sizes = [256, 8], strides = [1, 1]} : vector<304x8xf32> to vector<256x8xf32>
    %cst_82 = arith.constant 0.000000e+00 : f32
    %155 = vector.shape_cast %104 : vector<256x1xi1> to vector<256x1xi1>
    %156 = vector.broadcast %155 : vector<256x1xi1> to vector<256x8xi1>
    %157 = vector.broadcast %cst_82 : f32 to vector<256x8xf32>
    %158 = arith.select %156, %154, %157 : vector<256x8xi1>, vector<256x8xf32>
    %c6_83 = arith.constant 6 : index
    %c0_84 = arith.constant 0 : index
    %c0_85 = arith.constant 0 : index
    %159 = vector.load %arg6[%c6_83, %c0_84, %c0_85] : memref<9x8x8xf32, #tpu.memory_space<vmem>>, vector<1x8x8xf32>
    %160 = vector.shape_cast %159 : vector<1x8x8xf32> to vector<8x8xf32>
    %cst_86 = arith.constant dense<0.000000e+00> : vector<256x8xf32>
    %161 = tpu.matmul %158, %160, %cst_86 {dimension_numbers = #tpu.dot_dimension_numbers<[1], [0], [0], [1], [0, 0, 1, 1], [], []>} : vector<256x8xf32>, vector<8x8xf32>, vector<256x8xf32> -> vector<256x8xf32>
    %162 = arith.addf %153, %161 : vector<256x8xf32>
    %163 = vector.extract_strided_slice %101 {offsets = [40, 0], sizes = [256, 8], strides = [1, 1]} : vector<304x8xf32> to vector<256x8xf32>
    %c7_87 = arith.constant 7 : index
    %c0_88 = arith.constant 0 : index
    %c0_89 = arith.constant 0 : index
    %164 = vector.load %arg6[%c7_87, %c0_88, %c0_89] : memref<9x8x8xf32, #tpu.memory_space<vmem>>, vector<1x8x8xf32>
    %165 = vector.shape_cast %164 : vector<1x8x8xf32> to vector<8x8xf32>
    %cst_90 = arith.constant dense<0.000000e+00> : vector<256x8xf32>
    %166 = tpu.matmul %163, %165, %cst_90 {dimension_numbers = #tpu.dot_dimension_numbers<[1], [0], [0], [1], [0, 0, 1, 1], [], []>} : vector<256x8xf32>, vector<8x8xf32>, vector<256x8xf32> -> vector<256x8xf32>
    %167 = arith.addf %162, %166 : vector<256x8xf32>
    %168 = vector.extract_strided_slice %101 {offsets = [41, 0], sizes = [256, 8], strides = [1, 1]} : vector<304x8xf32> to vector<256x8xf32>
    %cst_91 = arith.constant 0.000000e+00 : f32
    %169 = vector.shape_cast %106 : vector<256x1xi1> to vector<256x1xi1>
    %170 = vector.broadcast %169 : vector<256x1xi1> to vector<256x8xi1>
    %171 = vector.broadcast %cst_91 : f32 to vector<256x8xf32>
    %172 = arith.select %170, %168, %171 : vector<256x8xi1>, vector<256x8xf32>
    %c8_92 = arith.constant 8 : index
    %c0_93 = arith.constant 0 : index
    %c0_94 = arith.constant 0 : index
    %173 = vector.load %arg6[%c8_92, %c0_93, %c0_94] : memref<9x8x8xf32, #tpu.memory_space<vmem>>, vector<1x8x8xf32>
    %174 = vector.shape_cast %173 : vector<1x8x8xf32> to vector<8x8xf32>
    %cst_95 = arith.constant dense<0.000000e+00> : vector<256x8xf32>
    %175 = tpu.matmul %172, %174, %cst_95 {dimension_numbers = #tpu.dot_dimension_numbers<[1], [0], [0], [1], [0, 0, 1, 1], [], []>} : vector<256x8xf32>, vector<8x8xf32>, vector<256x8xf32> -> vector<256x8xf32>
    %176 = arith.addf %167, %175 : vector<256x8xf32>
    %177 = vector.extract_strided_slice %5 {offsets = [40, 0], sizes = [256, 16], strides = [1, 1]} : vector<336x16xf32> to vector<256x16xf32>
    %c0_96 = arith.constant 0 : index
    %c0_97 = arith.constant 0 : index
    %178 = vector.load %arg8[%c0_96, %c0_97] : memref<16x8xf32, #tpu.memory_space<vmem>>, vector<16x8xf32>
    %cst_98 = arith.constant dense<0.000000e+00> : vector<256x8xf32>
    %179 = tpu.matmul %177, %178, %cst_98 {dimension_numbers = #tpu.dot_dimension_numbers<[1], [0], [0], [1], [0, 0, 1, 1], [], []>} : vector<256x16xf32>, vector<16x8xf32>, vector<256x8xf32> -> vector<256x8xf32>
    %180 = arith.addf %176, %179 : vector<256x8xf32>
    %c0_99 = arith.constant 0 : index
    %c0_100 = arith.constant 0 : index
    %181 = vector.load %arg7[%c0_99, %c0_100] : memref<1x8xf32, #tpu.memory_space<vmem>>, vector<1x8xf32>
    %182 = vector.broadcast %181 : vector<1x8xf32> to vector<256x8xf32>
    %183 = arith.addf %180, %182 : vector<256x8xf32>
    %cst_101 = arith.constant 0.000000e+00 : f32
    %184 = vector.broadcast %cst_101 : f32 to vector<256x8xf32>
    %185 = arith.maximumf %183, %184 : vector<256x8xf32>
    %c0_102 = arith.constant 0 : index
    %c0_103 = arith.constant 0 : index
    %c0_104 = arith.constant 0 : index
    %186 = vector.load %arg11[%c0_102, %c0_103, %c0_104] : memref<1x256x8xf32, #tpu.memory_space<vmem>>, vector<1x256x8xf32>
    %187 = vector.shape_cast %186 : vector<1x256x8xf32> to vector<256x8xf32>
    %188 = vector.shape_cast %185 : vector<256x8xf32> to vector<1x256x8xf32>
    tpu.vector_store %arg11[%c0_102, %c0_103, %c0_104], %188 {strides = array<i32>} : memref<1x256x8xf32, #tpu.memory_space<vmem>>, vector<1x256x8xf32>,
    return
  }
  func.func @transform_0(%arg0: i32, %arg1: i32) -> (i32, i32, i32) {
    %c0_i32 = arith.constant 0 : i32
    %c0_i32_0 = arith.constant 0 : i32
    return %arg0, %arg1, %c0_i32 : i32, i32, i32
  }
  func.func @transform_1(%arg0: i32, %arg1: i32) -> (i32, i32, i32) {
    %c1_i32 = arith.constant 1 : i32
    %0 = arith.addi %arg1, %c1_i32 : i32
    %c4_i32 = arith.constant 4 : i32
    %1 = arith.muli %0, %c4_i32 : i32
    %c0_i32 = arith.constant 0 : i32
    %c0_i32_0 = arith.constant 0 : i32
    return %arg0, %1, %c0_i32 : i32, i32, i32
  }
  func.func @transform_2(%arg0: i32, %arg1: i32) -> (i32, i32, i32) {
    %c0_i32 = arith.constant 0 : i32
    %c0_i32_0 = arith.constant 0 : i32
    %c0_i32_1 = arith.constant 0 : i32
    %c0_i32_2 = arith.constant 0 : i32
    return %c0_i32, %c0_i32_0, %c0_i32_1 : i32, i32, i32
  }
  func.func @transform_3(%arg0: i32, %arg1: i32) -> (i32, i32) {
    %c0_i32 = arith.constant 0 : i32
    %c0_i32_0 = arith.constant 0 : i32
    %c0_i32_1 = arith.constant 0 : i32
    return %c0_i32, %c0_i32_0 : i32, i32
  }
  func.func @transform_4(%arg0: i32, %arg1: i32) -> (i32, i32, i32) {
    %c0_i32 = arith.constant 0 : i32
    %c0_i32_0 = arith.constant 0 : i32
    %c0_i32_1 = arith.constant 0 : i32
    %c0_i32_2 = arith.constant 0 : i32
    return %c0_i32, %c0_i32_0, %c0_i32_1 : i32, i32, i32
  }
  func.func @transform_5(%arg0: i32, %arg1: i32) -> (i32, i32) {
    %c0_i32 = arith.constant 0 : i32
    %c0_i32_0 = arith.constant 0 : i32
    %c0_i32_1 = arith.constant 0 : i32
    return %c0_i32, %c0_i32_0 : i32, i32
  }
  func.func @transform_6(%arg0: i32, %arg1: i32) -> (i32, i32) {
    %c0_i32 = arith.constant 0 : i32
    %c0_i32_0 = arith.constant 0 : i32
    %c0_i32_1 = arith.constant 0 : i32
    return %c0_i32, %c0_i32_0 : i32, i32
  }
  func.func @transform_7(%arg0: i32, %arg1: i32) -> (i32, i32) {
    %c0_i32 = arith.constant 0 : i32
    %c0_i32_0 = arith.constant 0 : i32
    %c0_i32_1 = arith.constant 0 : i32
    return %c0_i32, %c0_i32_0 : i32, i32
  }
  func.func @transform_8(%arg0: i32, %arg1: i32) -> (i32, i32) {
    %c0_i32 = arith.constant 0 : i32
    %c0_i32_0 = arith.constant 0 : i32
    %c0_i32_1 = arith.constant 0 : i32
    return %c0_i32, %c0_i32_0 : i32, i32
  }
  func.func @transform_9(%arg0: i32, %arg1: i32) -> (i32, i32, i32) {
    %c0_i32 = arith.constant 0 : i32
    %c0_i32_0 = arith.constant 0 : i32
    return %arg0, %arg1, %c0_i32 : i32, i32, i32
  }
}

</mosaic_0001>

<llo_original>
// kernel: _lambda_.2
$region0: #{_lambda_.2}
  #allocation0 [shape = 'u32[]', space=smem, size = 0x4, offset = 0x4, fixed_abs, tag = 'smem constant byte address 0x4 - core index']
  #allocation1 [shape = 'u32[72,128]{1,0:T(1,128)}', space=vmem, size = 0x9000, scoped, tag = 'internal scratch']
  %s0 = inlined_call_operand.hbm [shape: f32[128,8], index: 0, kind: input, shape index: {}]
  %s1 = inlined_call_operand.vmem [shape: f32[8,32], index: 1, kind: input, shape index: {}]
  %s2 = inlined_call_operand.vmem [shape: f32[1,32], index: 2, kind: input, shape index: {}]
  %s3 = inlined_call_operand.vmem [shape: f32[128,32], index: 3, kind: output, shape index: {}]
  %s4 = sld [smem:[#allocation0]]
  $region26: #{_lambda_.2} parent=0
    _
  %s6 = ssub.s32 1, %s4
  %s7 = scalar_select 0, %s6, %s4
  $region1: #{_lambda_.2} parent=0
    #allocation2 [shape = 'u8[65536]{0}', space=vmem, size = 0x10000, scoped, tag = 'input window, operand 0, single buffered']
    #allocation3 [shape = 's32[1]{0}', space=sflag, size = 0x4, scoped, tag = 'scoped memory for _lambda_.2']
    %8 = vsyncpa [#allocation3], 0
    // Predicated region
    $region2: #{_lambda_.2} parent=1 // pred_check
      _
    $region3: #{_lambda_.2} parent=1 // pred_check_branch
      %10 = sbr.rel (0) target = $region5
    $region4: #{_lambda_.2} parent=1 // pred_region
      %12 = vsyncadd [#allocation3], 0
      %s13 = sshll.u32 %s0, 4
      %s14 = int_to_ptr.hbm [resolvable:$true] %s13
      %s15 = sshll.u32 [#allocation2], 4
      %s16 = int_to_ptr.vmem [resolvable:$true] %s15
      %21 = dma.hbm_to_vmem [thread:$0]  %s14, 2048, %s16, [#allocation3], 128, 128, 8
    $region5: #{_lambda_.2} parent=1 // pred_fallthru
      _
    // Predicated region
    $region6: #{_lambda_.2} parent=1 // pred_check
      _
    $region7: #{_lambda_.2} parent=1 // pred_check_branch
      %23 = sbr.rel (0) target = $region9
    $region8: #{_lambda_.2} parent=1 // pred_region
      _
    $region9: #{_lambda_.2} parent=1 // pred_fallthru
      _
    // Predicated region
    $region10: #{_lambda_.2} parent=1 // pred_check
      _
    $region11: #{_lambda_.2} parent=1 // pred_check_branch
      %25 = sbr.rel (0) target = $region13
    $region12: #{_lambda_.2} parent=1 // pred_region
      _
    $region13: #{_lambda_.2} parent=1 // pred_fallthru
      _
    // Predicated region
    $region14: #{_lambda_.2} parent=1 // pred_check
      _
    $region15: #{_lambda_.2} parent=1 // pred_check_branch
      %27 = sbr.rel (0) target = $region17
    $region16: #{_lambda_.2} parent=1 // pred_region
      %29 = dma.done [#allocation3], 2048
    $region17: #{_lambda_.2} parent=1 // pred_fallthru
      _
    %v30 = vld [vmem:[#allocation2] sm:$0xff]
    %v31 = vld [vmem:[#allocation2 + $0x8] sm:$0xff]
    %v32 = vld [vmem:[#allocation2 + $0x10] sm:$0xff]
    %v33 = vld [vmem:[#allocation2 + $0x18] sm:$0xff]
    %v34 = vld [vmem:[#allocation2 + $0x20] sm:$0xff]
    %v35 = vld [vmem:[#allocation2 + $0x28] sm:$0xff]
    %v36 = vld [vmem:[#allocation2 + $0x30] sm:$0xff]
    %v37 = vld [vmem:[#allocation2 + $0x38] sm:$0xff]
    %v38 = vld [vmem:[#allocation2 + $0x40] sm:$0xff]
    %v39 = vld [vmem:[#allocation2 + $0x48] sm:$0xff]
    %v40 = vld [vmem:[#allocation2 + $0x50] sm:$0xff]
    %v41 = vld [vmem:[#allocation2 + $0x58] sm:$0xff]
    %v42 = vld [vmem:[#allocation2 + $0x60] sm:$0xff]
    %v43 = vld [vmem:[#allocation2 + $0x68] sm:$0xff]
    %v44 = vld [vmem:[#allocation2 + $0x70] sm:$0xff]
    %v45 = vld [vmem:[#allocation2 + $0x78] sm:$0xff]
    %v46 = vld [vmem:[%s1] sm:$0xff]
    %v47 = vld [vmem:[%s2] sm:$0x1]
    %v49 = vperm.slane %v47, 0
    %vm51 = vcmask 64512
    %v53 = vsel %vm51, %v30, 0
    %v56 = vsel %vm51, %v31, 0
    %v59 = vsel %vm51, %v32, 0
    %v62 = vsel %vm51, %v33, 0
    %v65 = vsel %vm51, %v34, 0
    %v68 = vsel %vm51, %v35, 0
    %v71 = vsel %vm51, %v36, 0
    %v74 = vsel %vm51, %v37, 0
    %v77 = vsel %vm51, %v38, 0
    %v80 = vsel %vm51, %v39, 0
    %v83 = vsel %vm51, %v40, 0
    %v86 = vsel %vm51, %v41, 0
    %v89 = vsel %vm51, %v42, 0
    %v92 = vsel %vm51, %v43, 0
    %v95 = vsel %vm51, %v44, 0
    %v98 = vsel %vm51, %v45, 0
    %100 = vmatpush.msra.mxu0 0.0
    %101 = vmatpush.msra.mxu0 0.0
    %102 = vmatpush.msra.mxu0 0.0
    %103 = vmatpush.msra.mxu0 0.0
    %104 = vmatpush.msra.mxu0 0.0
    %105 = vmatpush.msra.mxu0 0.0
    %106 = vmatpush.msra.mxu0 0.0
    %107 = vmatpush.msra.mxu0 0.0
    %108 = vmatpush.msra.mxu0 0.0
    %109 = vmatpush.msra.mxu0 0.0
    %110 = vmatpush.msra.mxu0 0.0
    %111 = vmatpush.msra.mxu0 0.0
    %112 = vmatpush.msra.mxu0 0.0
    %113 = vmatpush.msra.mxu0 0.0
    %114 = vmatpush.msra.mxu0 0.0
    %115 = vmatpush.msra.mxu0 %v46
    %116 = vmatmul.f32.gmra.mxu0 %v53
    %v117 = vpop.f32.mrf.mxu0
    %v118 = vadd.f32 %v49, %v117
    %119 = vmatmul.f32.gmra.mxu0 %v56
    %v120 = vpop.f32.mrf.mxu0
    %v121 = vadd.f32 %v49, %v120
    %122 = vmatmul.f32.gmra.mxu0 %v59
    %v123 = vpop.f32.mrf.mxu0
    %v124 = vadd.f32 %v49, %v123
    %125 = vmatmul.f32.gmra.mxu0 %v62
    %v126 = vpop.f32.mrf.mxu0
    %v127 = vadd.f32 %v49, %v126
    %128 = vmatmul.f32.gmra.mxu0 %v65
    %v129 = vpop.f32.mrf.mxu0
    %v130 = vadd.f32 %v49, %v129
    %131 = vmatmul.f32.gmra.mxu0 %v68
    %v132 = vpop.f32.mrf.mxu0
    %v133 = vadd.f32 %v49, %v132
    %134 = vmatmul.f32.gmra.mxu0 %v71
    %v135 = vpop.f32.mrf.mxu0
    %v136 = vadd.f32 %v49, %v135
    %137 = vmatmul.f32.gmra.mxu0 %v74
    %v138 = vpop.f32.mrf.mxu0
    %v139 = vadd.f32 %v49, %v138
    %140 = vmatmul.f32.gmra.mxu0 %v77
    %v141 = vpop.f32.mrf.mxu0
    %v142 = vadd.f32 %v49, %v141
    %143 = vmatmul.f32.gmra.mxu0 %v80
    %v144 = vpop.f32.mrf.mxu0
    %v145 = vadd.f32 %v49, %v144
    %146 = vmatmul.f32.gmra.mxu0 %v83
    %v147 = vpop.f32.mrf.mxu0
    %v148 = vadd.f32 %v49, %v147
    %149 = vmatmul.f32.gmra.mxu0 %v86
    %v150 = vpop.f32.mrf.mxu0
    %v151 = vadd.f32 %v49, %v150
    %152 = vmatmul.f32.gmra.mxu0 %v89
    %v153 = vpop.f32.mrf.mxu0
    %v154 = vadd.f32 %v49, %v153
    %155 = vmatmul.f32.gmra.mxu0 %v92
    %v156 = vpop.f32.mrf.mxu0
    %v157 = vadd.f32 %v49, %v156
    %158 = vmatmul.f32.gmra.mxu0 %v95
    %v159 = vpop.f32.mrf.mxu0
    %v160 = vadd.f32 %v49, %v159
    %161 = vmatmul.f32.gmra.mxu0 %v98
    %v162 = vpop.f32.mrf.mxu0
    %v163 = vadd.f32 %v49, %v162
    %164 = vdwg.mxu0
    %vm165 = vcmask 261120
    %166 = vst.msk [vmem:[%s3] sm:$0xff] %vm165, %v118
    %167 = vst.msk [vmem:[%s3 + $0x8] sm:$0xff] %vm165, %v121
    %168 = vst.msk [vmem:[%s3 + $0x10] sm:$0xff] %vm165, %v124
    %169 = vst.msk [vmem:[%s3 + $0x18] sm:$0xff] %vm165, %v127
    %170 = vst.msk [vmem:[%s3 + $0x20] sm:$0xff] %vm165, %v130
    %171 = vst.msk [vmem:[%s3 + $0x28] sm:$0xff] %vm165, %v133
    %172 = vst.msk [vmem:[%s3 + $0x30] sm:$0xff] %vm165, %v136
    %173 = vst.msk [vmem:[%s3 + $0x38] sm:$0xff] %vm165, %v139
    %174 = vst.msk [vmem:[%s3 + $0x40] sm:$0xff] %vm165, %v142
    %175 = vst.msk [vmem:[%s3 + $0x48] sm:$0xff] %vm165, %v145
    %176 = vst.msk [vmem:[%s3 + $0x50] sm:$0xff] %vm165, %v148
    %177 = vst.msk [vmem:[%s3 + $0x58] sm:$0xff] %vm165, %v151
    %178 = vst.msk [vmem:[%s3 + $0x60] sm:$0xff] %vm165, %v154
    %179 = vst.msk [vmem:[%s3 + $0x68] sm:$0xff] %vm165, %v157
    %180 = vst.msk [vmem:[%s3 + $0x70] sm:$0xff] %vm165, %v160
    %181 = vst.msk [vmem:[%s3 + $0x78] sm:$0xff] %vm165, %v163
    // Predicated region
    $region18: #{_lambda_.2} parent=1 // pred_check
      _
    $region19: #{_lambda_.2} parent=1 // pred_check_branch
      %183 = sbr.rel (0) target = $region21
    $region20: #{_lambda_.2} parent=1 // pred_region
      _
    $region21: #{_lambda_.2} parent=1 // pred_fallthru
      _
    // Predicated region
    $region22: #{_lambda_.2} parent=1 // pred_check
      _
    $region23: #{_lambda_.2} parent=1 // pred_check_branch
      %185 = sbr.rel (0) target = $region25
    $region24: #{_lambda_.2} parent=1 // pred_region
      _
    $region25: #{_lambda_.2} parent=1 // pred_fallthru
      _
    %186 = vsyncpa [#allocation3], 1

// kernel: _lambda_.3
$region0: #{_lambda_.3}
  #allocation0 [shape = 'u32[]', space=smem, size = 0x4, offset = 0x4, fixed_abs, tag = 'smem constant byte address 0x4 - core index']
  #allocation1 [shape = 'u32[72,128]{1,0:T(1,128)}', space=vmem, size = 0x9000, scoped, tag = 'internal scratch']
  %s0 = inlined_call_operand.vmem [shape: f32[2,320,16], index: 0, kind: input, shape index: {}, may-alias: {0,1}]
  %s1 = inlined_call_operand.vmem [shape: f32[2,320,16], index: 1, kind: input, shape index: {}, may-alias: {0,1}]
  %s2 = inlined_call_operand.vmem [shape: f32[9,16,8], index: 2, kind: input, shape index: {}]
  %s3 = inlined_call_operand.vmem [shape: f32[1,8], index: 3, kind: input, shape index: {}]
  %s4 = inlined_call_operand.vmem [shape: f32[9,8,8], index: 4, kind: input, shape index: {}]
  %s5 = inlined_call_operand.vmem [shape: f32[1,8], index: 5, kind: input, shape index: {}]
  %s6 = inlined_call_operand.vmem [shape: f32[16,8], index: 6, kind: input, shape index: {}]
  %s7 = inlined_call_operand.vmem [shape: s32[288,1], index: 7, kind: input, shape index: {}]
  %s8 = inlined_call_operand.vmem [shape: s32[288,1], index: 8, kind: input, shape index: {}]
  %s9 = inlined_call_operand.vmem [shape: f32[2,256,8], index: 9, kind: output, shape index: {}]
  %s10 = sld [smem:[#allocation0]]
  $region69: #{_lambda_.3} parent=0
    _
  %s12 = ssub.s32 1, %s10
  %s13 = scalar_select 0, %s12, %s10
  loop: start=0, step=1, limit=4
  $region2: #{_lambda_.3} parent=0 // loop_pre_header
    _
  $region3: #{_lambda_.3} parent=0 // loop_header
    %s15 = sphi 0, %s19
    %p16 = scmp.ge.s32.totalorder %s15, 4
    %s22 = sphi 0, %s34
    %s23 = sphi 0, %s30
    %s24 = sphi 0, %s22
    %s25 = sphi 0, %s23
    %s26 = sphi 0, %s24
    %s27 = sphi 0, %s25
    %s39 = sphi 0, %s41
    %s42 = sphi 0, %s39
    %s43 = sphi 0, %s42
    %s59 = sphi 0, %s43
    %s71 = sphi 0, %s73
    %s74 = sphi 0, %s71
    %s75 = sphi 0, %s74
    %s91 = sphi 0, %s75
    %s95 = sphi 0, %s95
    %s97 = sphi 0, %s95
    %s98 = sphi 0, %s97
    %s112 = sphi 0, %s98
    %s116 = sphi 0, %s116
    %s118 = sphi 0, %s116
    %s119 = sphi 0, %s118
    %s133 = sphi 0, %s119
    %s137 = sphi 0, %s137
    %s139 = sphi 0, %s137
    %s140 = sphi 0, %s139
    %s154 = sphi 0, %s140
    %s158 = sphi 0, %s158
    %s160 = sphi 0, %s158
    %s161 = sphi 0, %s160
    %s175 = sphi 0, %s161
    %s179 = sphi 0, %s179
    %s181 = sphi 0, %s179
    %s182 = sphi 0, %s181
    %s196 = sphi 0, %s182
    %s200 = sphi 0, %s200
    %s202 = sphi 0, %s200
    %s203 = sphi 0, %s202
    %s217 = sphi 0, %s203
    %s221 = sphi 0, %s221
    %s223 = sphi 0, %s221
    %s224 = sphi 0, %s223
    %s238 = sphi 0, %s224
    %s246 = sphi 0, %s248
    %s249 = sphi 0, %s246
    %s250 = sphi 0, %s249
    %s266 = sphi 0, %s250
  $region4: #{_lambda_.3} parent=0 // loop_header_branch
    %18 = sbr.rel (%p16) target = $region8
  $region5: #{_lambda_.3} parent=0 // loop_body
    %s20 = ssub.s32 %s15, 1
    %s21 = ssub.s32 %s15, 2
    %s28 = sadd.s32 1, %s23
    %p29 = scmp.ge.s32.totalorder %s28, 1
    %s30 = scalar_select %p29, 0, %s28
    %s31 = sadd.s32 1, %s22
    %s32 = scalar_select %p29, %s31, %s22
    %p33 = scmp.ge.s32.totalorder %s32, 2
    %s34 = scalar_select %p33, 0, %s32
    %s35 = ssub.s32 %s22, %s34
    %s36 = ssub.s32 %s23, %s30
    %s37 = sor.u32 %s35, %s36
    %p38 = scmp.eq.s32.totalorder %s37, 0
    %s40 = sadd.s32 %s39, 1
    %s41 = scalar_select %p38, %s39, %s40
    %p44 = pneg %p38
    %p45 = scmp.eq.s32.totalorder %s15, 1
    %p46 = por %p44, %p45
    %p47 = scmp.ne.s32.totalorder %s39, %s42
    %p48 = scmp.eq.s32.totalorder %s15, 0
    %p49 = por %p47, %p48
    %p50 = scmp.ne.s32.totalorder %s39, %s42
    %p51 = scmp.eq.s32.totalorder %s20, 1
    %p52 = por %p50, %p51
    %p53 = scmp.ne.s32.totalorder %s42, %s43
    %p54 = scmp.eq.s32.totalorder %s20, 0
    %p55 = por %p53, %p54
    %p56 = scmp.ne.s32.totalorder %s42, %s43
    %p57 = scmp.eq.s32.totalorder %s21, 1
    %p58 = por %p56, %p57
    %p60 = scmp.ne.s32.totalorder %s43, %s59
    %p61 = scmp.eq.s32.totalorder %s21, 0
    %p62 = por %p60, %p61
    %s63 = sadd.s32 %s23, 1
    %s64 = smul.u32 %s63, 4
    %s65 = sadd.s32 %s30, 1
    %s66 = smul.u32 %s65, 4
    %s67 = ssub.s32 %s22, %s34
    %s68 = ssub.s32 %s64, %s66
    %s69 = sor.u32 %s67, %s68
    %p70 = scmp.eq.s32.totalorder %s69, 0
    %s72 = sadd.s32 %s71, 1
    %s73 = scalar_select %p70, %s71, %s72
    %p76 = pneg %p70
    %p77 = scmp.eq.s32.totalorder %s15, 1
    %p78 = por %p76, %p77
    %p79 = scmp.ne.s32.totalorder %s71, %s74
    %p80 = scmp.eq.s32.totalorder %s15, 0
    %p81 = por %p79, %p80
    %p82 = scmp.ne.s32.totalorder %s71, %s74
    %p83 = scmp.eq.s32.totalorder %s20, 1
    %p84 = por %p82, %p83
    %p85 = scmp.ne.s32.totalorder %s74, %s75
    %p86 = scmp.eq.s32.totalorder %s20, 0
    %p87 = por %p85, %p86
    %p88 = scmp.ne.s32.totalorder %s74, %s75
    %p89 = scmp.eq.s32.totalorder %s21, 1
    %p90 = por %p88, %p89
    %p92 = scmp.ne.s32.totalorder %s75, %s91
    %p93 = scmp.eq.s32.totalorder %s21, 0
    %p94 = por %p92, %p93
    %s96 = sadd.s32 %s95, 1
    %p99 = scmp.eq.s32.totalorder %s15, 1
    %p100 = scmp.ne.s32.totalorder %s95, %s97
    %p101 = scmp.eq.s32.totalorder %s15, 0
    %p102 = por %p100, %p101
    %p103 = scmp.ne.s32.totalorder %s95, %s97
    %p104 = scmp.eq.s32.totalorder %s20, 1
    %p105 = por %p103, %p104
    %p106 = scmp.ne.s32.totalorder %s97, %s98
    %p107 = scmp.eq.s32.totalorder %s20, 0
    %p108 = por %p106, %p107
    %p109 = scmp.ne.s32.totalorder %s97, %s98
    %p110 = scmp.eq.s32.totalorder %s21, 1
    %p111 = por %p109, %p110
    %p113 = scmp.ne.s32.totalorder %s98, %s112
    %p114 = scmp.eq.s32.totalorder %s21, 0
    %p115 = por %p113, %p114
    %s117 = sadd.s32 %s116, 1
    %p120 = scmp.eq.s32.totalorder %s15, 1
    %p121 = scmp.ne.s32.totalorder %s116, %s118
    %p122 = scmp.eq.s32.totalorder %s15, 0
    %p123 = por %p121, %p122
    %p124 = scmp.ne.s32.totalorder %s116, %s118
    %p125 = scmp.eq.s32.totalorder %s20, 1
    %p126 = por %p124, %p125
    %p127 = scmp.ne.s32.totalorder %s118, %s119
    %p128 = scmp.eq.s32.totalorder %s20, 0
    %p129 = por %p127, %p128
    %p130 = scmp.ne.s32.totalorder %s118, %s119
    %p131 = scmp.eq.s32.totalorder %s21, 1
    %p132 = por %p130, %p131
    %p134 = scmp.ne.s32.totalorder %s119, %s133
    %p135 = scmp.eq.s32.totalorder %s21, 0
    %p136 = por %p134, %p135
    %s138 = sadd.s32 %s137, 1
    %p141 = scmp.eq.s32.totalorder %s15, 1
    %p142 = scmp.ne.s32.totalorder %s137, %s139
    %p143 = scmp.eq.s32.totalorder %s15, 0
    %p144 = por %p142, %p143
    %p145 = scmp.ne.s32.totalorder %s137, %s139
    %p146 = scmp.eq.s32.totalorder %s20, 1
    %p147 = por %p145, %p146
    %p148 = scmp.ne.s32.totalorder %s139, %s140
    %p149 = scmp.eq.s32.totalorder %s20, 0
    %p150 = por %p148, %p149
    %p151 = scmp.ne.s32.totalorder %s139, %s140
    %p152 = scmp.eq.s32.totalorder %s21, 1
    %p153 = por %p151, %p152
    %p155 = scmp.ne.s32.totalorder %s140, %s154
    %p156 = scmp.eq.s32.totalorder %s21, 0
    %p157 = por %p155, %p156
    %s159 = sadd.s32 %s158, 1
    %p162 = scmp.eq.s32.totalorder %s15, 1
    %p163 = scmp.ne.s32.totalorder %s158, %s160
    %p164 = scmp.eq.s32.totalorder %s15, 0
    %p165 = por %p163, %p164
    %p166 = scmp.ne.s32.totalorder %s158, %s160
    %p167 = scmp.eq.s32.totalorder %s20, 1
    %p168 = por %p166, %p167
    %p169 = scmp.ne.s32.totalorder %s160, %s161
    %p170 = scmp.eq.s32.totalorder %s20, 0
    %p171 = por %p169, %p170
    %p172 = scmp.ne.s32.totalorder %s160, %s161
    %p173 = scmp.eq.s32.totalorder %s21, 1
    %p174 = por %p172, %p173
    %p176 = scmp.ne.s32.totalorder %s161, %s175
    %p177 = scmp.eq.s32.totalorder %s21, 0
    %p178 = por %p176, %p177
    %s180 = sadd.s32 %s179, 1
    %p183 = scmp.eq.s32.totalorder %s15, 1
    %p184 = scmp.ne.s32.totalorder %s179, %s181
    %p185 = scmp.eq.s32.totalorder %s15, 0
    %p186 = por %p184, %p185
    %p187 = scmp.ne.s32.totalorder %s179, %s181
    %p188 = scmp.eq.s32.totalorder %s20, 1
    %p189 = por %p187, %p188
    %p190 = scmp.ne.s32.totalorder %s181, %s182
    %p191 = scmp.eq.s32.totalorder %s20, 0
    %p192 = por %p190, %p191
    %p193 = scmp.ne.s32.totalorder %s181, %s182
    %p194 = scmp.eq.s32.totalorder %s21, 1
    %p195 = por %p193, %p194
    %p197 = scmp.ne.s32.totalorder %s182, %s196
    %p198 = scmp.eq.s32.totalorder %s21, 0
    %p199 = por %p197, %p198
    %s201 = sadd.s32 %s200, 1
    %p204 = scmp.eq.s32.totalorder %s15, 1
    %p205 = scmp.ne.s32.totalorder %s200, %s202
    %p206 = scmp.eq.s32.totalorder %s15, 0
    %p207 = por %p205, %p206
    %p208 = scmp.ne.s32.totalorder %s200, %s202
    %p209 = scmp.eq.s32.totalorder %s20, 1
    %p210 = por %p208, %p209
    %p211 = scmp.ne.s32.totalorder %s202, %s203
    %p212 = scmp.eq.s32.totalorder %s20, 0
    %p213 = por %p211, %p212
    %p214 = scmp.ne.s32.totalorder %s202, %s203
    %p215 = scmp.eq.s32.totalorder %s21, 1
    %p216 = por %p214, %p215
    %p218 = scmp.ne.s32.totalorder %s203, %s217
    %p219 = scmp.eq.s32.totalorder %s21, 0
    %p220 = por %p218, %p219
    %s222 = sadd.s32 %s221, 1
    %p225 = scmp.eq.s32.totalorder %s15, 1
    %p226 = scmp.ne.s32.totalorder %s221, %s223
    %p227 = scmp.eq.s32.totalorder %s15, 0
    %p228 = por %p226, %p227
    %p229 = scmp.ne.s32.totalorder %s221, %s223
    %p230 = scmp.eq.s32.totalorder %s20, 1
    %p231 = por %p229, %p230
    %p232 = scmp.ne.s32.totalorder %s223, %s224
    %p233 = scmp.eq.s32.totalorder %s20, 0
    %p234 = por %p232, %p233
    %p235 = scmp.ne.s32.totalorder %s223, %s224
    %p236 = scmp.eq.s32.totalorder %s21, 1
    %p237 = por %p235, %p236
    %p239 = scmp.ne.s32.totalorder %s224, %s238
    %p240 = scmp.eq.s32.totalorder %s21, 0
    %p241 = por %p239, %p240
    %s242 = ssub.s32 %s22, %s34
    %s243 = ssub.s32 %s23, %s30
    %s244 = sor.u32 %s242, %s243
    %p245 = scmp.eq.s32.totalorder %s244, 0
    %s247 = sadd.s32 %s246, 1
    %s248 = scalar_select %p245, %s246, %s247
    %p251 = pneg %p245
    %p252 = scmp.eq.s32.totalorder %s15, 1
    %p253 = por %p251, %p252
    %p254 = scmp.ne.s32.totalorder %s246, %s249
    %p255 = scmp.eq.s32.totalorder %s15, 0
    %p256 = por %p254, %p255
    %p257 = scmp.ne.s32.totalorder %s246, %s249
    %p258 = scmp.eq.s32.totalorder %s20, 1
    %p259 = por %p257, %p258
    %p260 = scmp.ne.s32.totalorder %s249, %s250
    %p261 = scmp.eq.s32.totalorder %s20, 0
    %p262 = por %p260, %p261
    %p263 = scmp.ne.s32.totalorder %s249, %s250
    %p264 = scmp.eq.s32.totalorder %s21, 1
    %p265 = por %p263, %p264
    %p267 = scmp.ne.s32.totalorder %s250, %s266
    %p268 = scmp.eq.s32.totalorder %s21, 0
    %p269 = por %p267, %p268
    %p270 = scmp.le.s32.totalorder 1, %s15
    %p271 = scmp.lt.s32.totalorder %s15, 3
    %p272 = pnand %p270, %p271
    %p273 = pneg %p272
    // Predicated region
    $region9: #{_lambda_.3} parent=5 // pred_check
      _
    $region10: #{_lambda_.3} parent=5 // pred_check_branch
      %275 = sbr.rel (%p272) target = $region12
    $region11: #{_lambda_.3} parent=5 // pred_region
      %s276 = ssub.s32 %s15, 1
      // Predicated region
      $region13: #{_lambda_.3} parent=11 // pred_check
        %p277 = pneg %p108
      $region14: #{_lambda_.3} parent=11 // pred_check_branch
        %279 = sbr.rel (%p277) target = $region16
      $region15: #{_lambda_.3} parent=11 // pred_region
        _
      $region16: #{_lambda_.3} parent=11 // pred_fallthru
        _
      // Predicated region
      $region17: #{_lambda_.3} parent=11 // pred_check
        %p280 = pneg %p129
      $region18: #{_lambda_.3} parent=11 // pred_check_branch
        %282 = sbr.rel (%p280) target = $region20
      $region19: #{_lambda_.3} parent=11 // pred_region
        _
      $region20: #{_lambda_.3} parent=11 // pred_fallthru
        _
      // Predicated region
      $region21: #{_lambda_.3} parent=11 // pred_check
        %p283 = pneg %p150
      $region22: #{_lambda_.3} parent=11 // pred_check_branch
        %285 = sbr.rel (%p283) target = $region24
      $region23: #{_lambda_.3} parent=11 // pred_region
        _
      $region24: #{_lambda_.3} parent=11 // pred_fallthru
        _
      // Predicated region
      $region25: #{_lambda_.3} parent=11 // pred_check
        %p286 = pneg %p171
      $region26: #{_lambda_.3} parent=11 // pred_check_branch
        %288 = sbr.rel (%p286) target = $region28
      $region27: #{_lambda_.3} parent=11 // pred_region
        _
      $region28: #{_lambda_.3} parent=11 // pred_fallthru
        _
      // Predicated region
      $region29: #{_lambda_.3} parent=11 // pred_check
        %p289 = pneg %p192
      $region30: #{_lambda_.3} parent=11 // pred_check_branch
        %291 = sbr.rel (%p289) target = $region32
      $region31: #{_lambda_.3} parent=11 // pred_region
        _
      $region32: #{_lambda_.3} parent=11 // pred_fallthru
        _
      // Predicated region
      $region33: #{_lambda_.3} parent=11 // pred_check
        %p292 = pneg %p213
      $region34: #{_lambda_.3} parent=11 // pred_check_branch
        %294 = sbr.rel (%p292) target = $region36
      $region35: #{_lambda_.3} parent=11 // pred_region
        _
      $region36: #{_lambda_.3} parent=11 // pred_fallthru
        _
      // Predicated region
      $region37: #{_lambda_.3} parent=11 // pred_check
        %p295 = pneg %p234
      $region38: #{_lambda_.3} parent=11 // pred_check_branch
        %297 = sbr.rel (%p295) target = $region40
      $region39: #{_lambda_.3} parent=11 // pred_region
        _
      $region40: #{_lambda_.3} parent=11 // pred_fallthru
        _
    $region12: #{_lambda_.3} parent=5 // pred_fallthru
      _
    %p298 = scmp.lt.s32.totalorder %s15, 2
    // Predicated region
    $region41: #{_lambda_.3} parent=5 // pred_check
      %p299 = pneg %p298
    $region42: #{_lambda_.3} parent=5 // pred_check_branch
      %301 = sbr.rel (%p299) target = $region44
    $region43: #{_lambda_.3} parent=5 // pred_region
      // Predicated region
      $region45: #{_lambda_.3} parent=43 // pred_check
        %p302 = pneg %p49
      $region46: #{_lambda_.3} parent=43 // pred_check_branch
        %304 = sbr.rel (%p302) target = $region48
      $region47: #{_lambda_.3} parent=43 // pred_region
        %s305 = smul.u32 32, %s23
        %s306 = ssub.s32 40, %s305
        %p307 = scmp.lt.s32.totalorder %s306, 32
        %s308 = scalar_select %p307, %s306, 32
        %s309 = smul.u32 8, %s308
        %p310 = scmp.lt.s32.totalorder %s22, 1
        %s311 = scalar_select %p310, %s22, 1
        %p312 = scmp.lt.s32.totalorder %s305, 39
        %s313 = scalar_select %p312, %s305, 39
        %s314 = smul.addr %s311, 40
        %s315 = sadd.s32 %s313, %s314
        %s316 = smul.addr %s315, 8
        %s317 = scalar_lea.vmem %s0, %s316
        %s318 = smul.u32 32, %s23
        %s319 = ssub.s32 40, %s318
        %p320 = scmp.lt.s32.totalorder %s319, 32
        %s321 = scalar_select %p320, %s319, 32
        %s322 = smul.u32 8, %s321
      $region48: #{_lambda_.3} parent=43 // pred_fallthru
        _
      // Predicated region
      $region49: #{_lambda_.3} parent=43 // pred_check
        %p323 = pneg %p81
      $region50: #{_lambda_.3} parent=43 // pred_check_branch
        %325 = sbr.rel (%p323) target = $region52
      $region51: #{_lambda_.3} parent=43 // pred_region
        %s326 = sadd.s32 %s23, 1
        %s327 = smul.u32 %s326, 4
        %s328 = smul.u32 8, %s327
        %p329 = scmp.lt.s32.totalorder %s22, 1
        %s330 = scalar_select %p329, %s22, 1
        %p331 = scmp.lt.s32.totalorder %s328, 39
        %s332 = scalar_select %p331, %s328, 39
        %s333 = smul.addr %s330, 40
        %s334 = sadd.s32 %s332, %s333
        %s335 = smul.addr %s334, 8
        %s336 = scalar_lea.vmem %s1, %s335
        %s337 = sadd.s32 %s23, 1
        %s338 = smul.u32 %s337, 4
        %s339 = smul.u32 8, %s338
      $region52: #{_lambda_.3} parent=43 // pred_fallthru
        _
    $region44: #{_lambda_.3} parent=5 // pred_fallthru
      _
    %p340 = scmp.le.s32.totalorder 1, %s15
    %p341 = scmp.lt.s32.totalorder %s15, 3
    %p342 = pnand %p340, %p341
    %p343 = pneg %p342
    // Predicated region
    $region53: #{_lambda_.3} parent=5 // pred_check
      _
    $region54: #{_lambda_.3} parent=5 // pred_check_branch
      %345 = sbr.rel (%p342) target = $region56
    $region55: #{_lambda_.3} parent=5 // pred_region
      %s346 = ssub.s32 %s15, 1
      %s347 = smul.u32 32, %s25
      %s348 = ssub.s32 40, %s347
      %p349 = scmp.lt.s32.totalorder %s348, 32
      %s350 = scalar_select %p349, %s348, 32
      %s351 = smul.u32 8, %s350
      %p352 = scmp.lt.s32.totalorder %s24, 1
      %s353 = scalar_select %p352, %s24, 1
      %p354 = scmp.lt.s32.totalorder %s347, 39
      %s355 = scalar_select %p354, %s347, 39
      %s356 = smul.addr %s353, 40
      %s357 = sadd.s32 %s355, %s356
      %s358 = smul.addr %s357, 8
      %s359 = scalar_lea.vmem %s0, %s358
      %p360 = pneg %p55
      %p361 = pneg %p52
      %s362 = sadd.s32 %s25, 1
      %s363 = smul.u32 %s362, 4
      %s364 = smul.u32 8, %s363
      %p365 = scmp.lt.s32.totalorder %s24, 1
      %s366 = scalar_select %p365, %s24, 1
      %p367 = scmp.lt.s32.totalorder %s364, 39
      %s368 = scalar_select %p367, %s364, 39
      %s369 = smul.addr %s366, 40
      %s370 = sadd.s32 %s368, %s369
      %s371 = smul.addr %s370, 8
      %s372 = scalar_lea.vmem %s1, %s371
      %p373 = pneg %p87
      %p374 = pneg %p84
      %p375 = pneg %p108
      %p376 = pneg %p105
      %p377 = pneg %p129
      %p378 = pneg %p126
      %p379 = pneg %p150
      %p380 = pneg %p147
      %p381 = pneg %p171
      %p382 = pneg %p168
      %p383 = pneg %p192
      %p384 = pneg %p189
      %p385 = pneg %p213
      %p386 = pneg %p210
      %p387 = pneg %p234
      %p388 = pneg %p231
      %p389 = pneg %p262
      %p390 = pneg %p259
      %s391 = smul.u32 32, %s25
      %p392 = scmp.lt.s32.totalorder %s24, 1
      %s393 = scalar_select %p392, %s24, 1
      %p394 = scmp.lt.s32.totalorder %s391, 31
      %s395 = scalar_select %p394, %s391, 31
      %s396 = smul.addr %s393, 32
      %s397 = sadd.s32 %s395, %s396
      %s398 = smul.addr %s397, 8
      %s399 = scalar_lea.vmem %s9, %s398
      %s400 = smul.u32 32, %s25
      %s401 = ssub.s32 40, %s400
      %p402 = scmp.lt.s32.totalorder %s401, 32
      %s403 = scalar_select %p402, %s401, 32
      %s404 = smul.u32 8, %s403
      %p405 = scmp.lt.s32.totalorder %s24, 1
      %s406 = scalar_select %p405, %s24, 1
      %p407 = scmp.lt.s32.totalorder %s400, 39
      %s408 = scalar_select %p407, %s400, 39
      %s409 = smul.addr %s406, 40
      %s410 = sadd.s32 %s408, %s409
      %s411 = smul.addr %s410, 8
      %s412 = scalar_lea.vmem %s0, %s411
      %s413 = smul.u32 32, %s25
      %s414 = ssub.s32 40, %s413
      %p415 = scmp.lt.s32.totalorder %s414, 32
      %s416 = scalar_select %p415, %s414, 32
      %s417 = smul.u32 8, %s416
      %s418 = sadd.s32 %s25, 1
      %s419 = smul.u32 %s418, 4
      %s420 = smul.u32 8, %s419
      %p421 = scmp.lt.s32.totalorder %s24, 1
      %s422 = scalar_select %p421, %s24, 1
      %p423 = scmp.lt.s32.totalorder %s420, 39
      %s424 = scalar_select %p423, %s420, 39
      %s425 = smul.addr %s422, 40
      %s426 = sadd.s32 %s424, %s425
      %s427 = smul.addr %s426, 8
      %s428 = scalar_lea.vmem %s1, %s427
      %s429 = sadd.s32 %s25, 1
      %s430 = smul.u32 %s429, 4
      %s431 = smul.u32 8, %s430
      %s432 = smul.u32 32, %s25
      %p433 = scmp.lt.s32.totalorder %s24, 1
      %s434 = scalar_select %p433, %s24, 1
      %p435 = scmp.lt.s32.totalorder %s432, 31
      %s436 = scalar_select %p435, %s432, 31
      %s437 = smul.addr %s434, 32
      %s438 = sadd.s32 %s436, %s437
      %s439 = smul.addr %s438, 8
      %s440 = scalar_lea.vmem %s9, %s439
      %s441 = smul.u32 32, %s25
      %v442 = vld [vmem:[%s412] sm:$0xff]
      %v443 = vld [vmem:[%s412 + $0x8] sm:$0xff]
      %v444 = vld [vmem:[%s412 + $0x10] sm:$0xff]
      %v445 = vld [vmem:[%s412 + $0x18] sm:$0xff]
      %v446 = vld [vmem:[%s412 + $0x20] sm:$0xff]
      %v447 = vld [vmem:[%s412 + $0x28] sm:$0xff]
      %v448 = vld [vmem:[%s412 + $0x30] sm:$0xff]
      %v449 = vld [vmem:[%s412 + $0x38] sm:$0xff]
      %v450 = vld [vmem:[%s412 + $0x40] sm:$0xff]
      %v451 = vld [vmem:[%s412 + $0x48] sm:$0xff]
      %v452 = vld [vmem:[%s412 + $0x50] sm:$0xff]
      %v453 = vld [vmem:[%s412 + $0x58] sm:$0xff]
      %v454 = vld [vmem:[%s412 + $0x60] sm:$0xff]
      %v455 = vld [vmem:[%s412 + $0x68] sm:$0xff]
      %v456 = vld [vmem:[%s412 + $0x70] sm:$0xff]
      %v457 = vld [vmem:[%s412 + $0x78] sm:$0xff]
      %v458 = vld [vmem:[%s412 + $0x80] sm:$0xff]
      %v459 = vld [vmem:[%s412 + $0x88] sm:$0xff]
      %v460 = vld [vmem:[%s412 + $0x90] sm:$0xff]
      %v461 = vld [vmem:[%s412 + $0x98] sm:$0xff]
      %v462 = vld [vmem:[%s412 + $0xa0] sm:$0xff]
      %v463 = vld [vmem:[%s412 + $0xa8] sm:$0xff]
      %v464 = vld [vmem:[%s412 + $0xb0] sm:$0xff]
      %v465 = vld [vmem:[%s412 + $0xb8] sm:$0xff]
      %v466 = vld [vmem:[%s412 + $0xc0] sm:$0xff]
      %v467 = vld [vmem:[%s412 + $0xc8] sm:$0xff]
      %v468 = vld [vmem:[%s412 + $0xd0] sm:$0xff]
      %v469 = vld [vmem:[%s412 + $0xd8] sm:$0xff]
      %v470 = vld [vmem:[%s412 + $0xe0] sm:$0xff]
      %v471 = vld [vmem:[%s412 + $0xe8] sm:$0xff]
      %v472 = vld [vmem:[%s412 + $0xf0] sm:$0xff]
      %v473 = vld [vmem:[%s412 + $0xf8] sm:$0xff]
      %v474 = vld [vmem:[%s428] sm:$0xff]
      %v475 = vld [vmem:[%s428 + $0x8] sm:$0xff]
      %v476 = vld [vmem:[%s428 + $0x10] sm:$0xff]
      %v477 = vld [vmem:[%s428 + $0x18] sm:$0xff]
      %v478 = vld [vmem:[%s428 + $0x20] sm:$0xff]
      %v479 = vld [vmem:[%s428 + $0x28] sm:$0xff]
      %v480 = vld [vmem:[%s428 + $0x30] sm:$0xff]
      %v481 = vld [vmem:[%s428 + $0x38] sm:$0xff]
      %v482 = vld [vmem:[%s7] sm:$0xff]
      %v483 = vld [vmem:[%s7 + $0x8] sm:$0xff]
      %v484 = vld [vmem:[%s7 + $0x10] sm:$0xff]
      %v485 = vld [vmem:[%s7 + $0x18] sm:$0xff]
      %v486 = vld [vmem:[%s7 + $0x20] sm:$0xff]
      %v487 = vld [vmem:[%s7 + $0x28] sm:$0xff]
      %v488 = vld [vmem:[%s7 + $0x30] sm:$0xff]
      %v489 = vld [vmem:[%s7 + $0x38] sm:$0xff]
      %v490 = vld [vmem:[%s7 + $0x40] sm:$0xff]
      %v491 = vld [vmem:[%s7 + $0x48] sm:$0xff]
      %v492 = vld [vmem:[%s7 + $0x50] sm:$0xff]
      %v493 = vld [vmem:[%s7 + $0x58] sm:$0xff]
      %v494 = vld [vmem:[%s7 + $0x60] sm:$0xff]
      %v495 = vld [vmem:[%s7 + $0x68] sm:$0xff]
      %v496 = vld [vmem:[%s7 + $0x70] sm:$0xff]
      %v497 = vld [vmem:[%s7 + $0x78] sm:$0xff]
      %v498 = vld [vmem:[%s7 + $0x80] sm:$0xff]
      %v499 = vld [vmem:[%s7 + $0x88] sm:$0xff]
      %v500 = vld [vmem:[%s7 + $0x90] sm:$0xff]
      %v501 = vld [vmem:[%s7 + $0x98] sm:$0xff]
      %v502 = vld [vmem:[%s7 + $0xa0] sm:$0xff]
      %v503 = vld [vmem:[%s7 + $0xa8] sm:$0xff]
      %v504 = vld [vmem:[%s7 + $0xb0] sm:$0xff]
      %v505 = vld [vmem:[%s7 + $0xb8] sm:$0xff]
      %v506 = vld [vmem:[%s7 + $0xc0] sm:$0xff]
      %v507 = vld [vmem:[%s7 + $0xc8] sm:$0xff]
      %v508 = vld [vmem:[%s7 + $0xd0] sm:$0xff]
      %v509 = vld [vmem:[%s7 + $0xd8] sm:$0xff]
      %v510 = vld [vmem:[%s7 + $0xe0] sm:$0xff]
      %v511 = vld [vmem:[%s7 + $0xe8] sm:$0xff]
      %v512 = vld [vmem:[%s7 + $0xf0] sm:$0xff]
      %v513 = vld [vmem:[%s7 + $0xf8] sm:$0xff]
      %v514 = vld [vmem:[%s7 + $0x100] sm:$0xff]
      %v515 = vld [vmem:[%s7 + $0x108] sm:$0xff]
      %v516 = vld [vmem:[%s7 + $0x110] sm:$0xff]
      %v517 = vld [vmem:[%s7 + $0x118] sm:$0xff]
      %vm518 = vcmp.ne.s32.totalorder %v482, 0
      %vm519 = vcmp.ne.s32.totalorder %v483, 0
      %vm520 = vcmp.ne.s32.totalorder %v484, 0
      %vm521 = vcmp.ne.s32.totalorder %v485, 0
      %vm522 = vcmp.ne.s32.totalorder %v486, 0
      %vm523 = vcmp.ne.s32.totalorder %v487, 0
      %vm524 = vcmp.ne.s32.totalorder %v488, 0
      %vm525 = vcmp.ne.s32.totalorder %v489, 0
      %vm526 = vcmp.ne.s32.totalorder %v490, 0
      %vm527 = vcmp.ne.s32.totalorder %v491, 0
      %vm528 = vcmp.ne.s32.totalorder %v492, 0
      %vm529 = vcmp.ne.s32.totalorder %v493, 0
      %vm530 = vcmp.ne.s32.totalorder %v494, 0
      %vm531 = vcmp.ne.s32.totalorder %v495, 0
      %vm532 = vcmp.ne.s32.totalorder %v496, 0
      %vm533 = vcmp.ne.s32.totalorder %v497, 0
      %vm534 = vcmp.ne.s32.totalorder %v498, 0
      %vm535 = vcmp.ne.s32.totalorder %v499, 0
      %vm536 = vcmp.ne.s32.totalorder %v500, 0
      %vm537 = vcmp.ne.s32.totalorder %v501, 0
      %vm538 = vcmp.ne.s32.totalorder %v502, 0
      %vm539 = vcmp.ne.s32.totalorder %v503, 0
      %vm540 = vcmp.ne.s32.totalorder %v504, 0
      %vm541 = vcmp.ne.s32.totalorder %v505, 0
      %vm542 = vcmp.ne.s32.totalorder %v506, 0
      %vm543 = vcmp.ne.s32.totalorder %v507, 0
      %vm544 = vcmp.ne.s32.totalorder %v508, 0
      %vm545 = vcmp.ne.s32.totalorder %v509, 0
      %vm546 = vcmp.ne.s32.totalorder %v510, 0
      %vm547 = vcmp.ne.s32.totalorder %v511, 0
      %vm548 = vcmp.ne.s32.totalorder %v512, 0
      %vm549 = vcmp.ne.s32.totalorder %v513, 0
      %vm550 = vcmp.ne.s32.totalorder %v514, 0
      %vm551 = vcmp.ne.s32.totalorder %v515, 0
      %vm552 = vcmp.ne.s32.totalorder %v516, 0
      %vm553 = vcmp.ne.s32.totalorder %v517, 0
      %vm554 = vcmp.ne.s32.totalorder %v482, 15
      %vm555 = vcmp.ne.s32.totalorder %v483, 15
      %vm556 = vcmp.ne.s32.totalorder %v484, 15
      %vm557 = vcmp.ne.s32.totalorder %v485, 15
      %vm558 = vcmp.ne.s32.totalorder %v486, 15
      %vm559 = vcmp.ne.s32.totalorder %v487, 15
      %vm560 = vcmp.ne.s32.totalorder %v488, 15
      %vm561 = vcmp.ne.s32.totalorder %v489, 15
      %vm562 = vcmp.ne.s32.totalorder %v490, 15
      %vm563 = vcmp.ne.s32.totalorder %v491, 15
      %vm564 = vcmp.ne.s32.totalorder %v492, 15
      %vm565 = vcmp.ne.s32.totalorder %v493, 15
      %vm566 = vcmp.ne.s32.totalorder %v494, 15
      %vm567 = vcmp.ne.s32.totalorder %v495, 15
      %vm568 = vcmp.ne.s32.totalorder %v496, 15
      %vm569 = vcmp.ne.s32.totalorder %v497, 15
      %vm570 = vcmp.ne.s32.totalorder %v498, 15
      %vm571 = vcmp.ne.s32.totalorder %v499, 15
      %vm572 = vcmp.ne.s32.totalorder %v500, 15
      %vm573 = vcmp.ne.s32.totalorder %v501, 15
      %vm574 = vcmp.ne.s32.totalorder %v502, 15
      %vm575 = vcmp.ne.s32.totalorder %v503, 15
      %vm576 = vcmp.ne.s32.totalorder %v504, 15
      %vm577 = vcmp.ne.s32.totalorder %v505, 15
      %vm578 = vcmp.ne.s32.totalorder %v506, 15
      %vm579 = vcmp.ne.s32.totalorder %v507, 15
      %vm580 = vcmp.ne.s32.totalorder %v508, 15
      %vm581 = vcmp.ne.s32.totalorder %v509, 15
      %vm582 = vcmp.ne.s32.totalorder %v510, 15
      %vm583 = vcmp.ne.s32.totalorder %v511, 15
      %vm584 = vcmp.ne.s32.totalorder %v512, 15
      %vm585 = vcmp.ne.s32.totalorder %v513, 15
      %vm586 = vcmp.ne.s32.totalorder %v514, 15
      %vm587 = vcmp.ne.s32.totalorder %v515, 15
      %vm588 = vcmp.ne.s32.totalorder %v516, 15
      %vm589 = vcmp.ne.s32.totalorder %v517, 15
      %v590 = vsel %vm518, 1, 0
      %v591 = vsel %vm519, 1, 0
      %v592 = vsel %vm520, 1, 0
      %v593 = vsel %vm521, 1, 0
      %v594 = vsel %vm522, 1, 0
      %v595 = vsel %vm523, 1, 0
      %v596 = vsel %vm524, 1, 0
      %v597 = vsel %vm525, 1, 0
      %v598 = vsel %vm526, 1, 0
      %v599 = vsel %vm527, 1, 0
      %v600 = vsel %vm528, 1, 0
      %v601 = vsel %vm529, 1, 0
      %v602 = vsel %vm530, 1, 0
      %v603 = vsel %vm531, 1, 0
      %v604 = vsel %vm532, 1, 0
      %v605 = vsel %vm533, 1, 0
      %v606 = vsel %vm534, 1, 0
      %v607 = vsel %vm535, 1, 0
      %v608 = vsel %vm536, 1, 0
      %v609 = vsel %vm537, 1, 0
      %v610 = vsel %vm538, 1, 0
      %v611 = vsel %vm539, 1, 0
      %v612 = vsel %vm540, 1, 0
      %v613 = vsel %vm541, 1, 0
      %v614 = vsel %vm542, 1, 0
      %v615 = vsel %vm543, 1, 0
      %v616 = vsel %vm544, 1, 0
      %v617 = vsel %vm545, 1, 0
      %v618 = vsel %vm546, 1, 0
      %v619 = vsel %vm547, 1, 0
      %v620 = vsel %vm548, 1, 0
      %v621 = vsel %vm549, 1, 0
      %v622 = vsel %vm550, 1, 0
      %v623 = vsel %vm551, 1, 0
      %v624 = vsel %vm552, 1, 0
      %v625 = vsel %vm553, 1, 0
      %626 = vset.pattern.permute.xlu0 0
      %627 = vperm.xlu0 %626, %v590
      %v628 = vpop.permute.xlu0 %627
      %629 = vset.pattern.permute.xlu0 0
      %630 = vperm.xlu0 %629, %v591
      %v631 = vpop.permute.xlu0 %630
      %632 = vset.pattern.permute.xlu0 0
      %633 = vperm.xlu0 %632, %v592
      %v634 = vpop.permute.xlu0 %633
      %635 = vset.pattern.permute.xlu0 0
      %636 = vperm.xlu0 %635, %v593
      %v637 = vpop.permute.xlu0 %636
      %638 = vset.pattern.permute.xlu0 0
      %639 = vperm.xlu0 %638, %v594
      %v640 = vpop.permute.xlu0 %639
      %641 = vset.pattern.permute.xlu0 0
      %642 = vperm.xlu0 %641, %v595
      %v643 = vpop.permute.xlu0 %642
      %644 = vset.pattern.permute.xlu0 0
      %645 = vperm.xlu0 %644, %v596
      %v646 = vpop.permute.xlu0 %645
      %647 = vset.pattern.permute.xlu0 0
      %648 = vperm.xlu0 %647, %v597
      %v649 = vpop.permute.xlu0 %648
      %650 = vset.pattern.permute.xlu0 0
      %651 = vperm.xlu0 %650, %v598
      %v652 = vpop.permute.xlu0 %651
      %653 = vset.pattern.permute.xlu0 0
      %654 = vperm.xlu0 %653, %v599
      %v655 = vpop.permute.xlu0 %654
      %656 = vset.pattern.permute.xlu0 0
      %657 = vperm.xlu0 %656, %v600
      %v658 = vpop.permute.xlu0 %657
      %659 = vset.pattern.permute.xlu0 0
      %660 = vperm.xlu0 %659, %v601
      %v661 = vpop.permute.xlu0 %660
      %662 = vset.pattern.permute.xlu0 0
      %663 = vperm.xlu0 %662, %v602
      %v664 = vpop.permute.xlu0 %663
      %665 = vset.pattern.permute.xlu0 0
      %666 = vperm.xlu0 %665, %v603
      %v667 = vpop.permute.xlu0 %666
      %668 = vset.pattern.permute.xlu0 0
      %669 = vperm.xlu0 %668, %v604
      %v670 = vpop.permute.xlu0 %669
      %671 = vset.pattern.permute.xlu0 0
      %672 = vperm.xlu0 %671, %v605
      %v673 = vpop.permute.xlu0 %672
      %674 = vset.pattern.permute.xlu0 0
      %675 = vperm.xlu0 %674, %v606
      %v676 = vpop.permute.xlu0 %675
      %677 = vset.pattern.permute.xlu0 0
      %678 = vperm.xlu0 %677, %v607
      %v679 = vpop.permute.xlu0 %678
      %680 = vset.pattern.permute.xlu0 0
      %681 = vperm.xlu0 %680, %v608
      %v682 = vpop.permute.xlu0 %681
      %683 = vset.pattern.permute.xlu0 0
      %684 = vperm.xlu0 %683, %v609
      %v685 = vpop.permute.xlu0 %684
      %686 = vset.pattern.permute.xlu0 0
      %687 = vperm.xlu0 %686, %v610
      %v688 = vpop.permute.xlu0 %687
      %689 = vset.pattern.permute.xlu0 0
      %690 = vperm.xlu0 %689, %v611
      %v691 = vpop.permute.xlu0 %690
      %692 = vset.pattern.permute.xlu0 0
      %693 = vperm.xlu0 %692, %v612
      %v694 = vpop.permute.xlu0 %693
      %695 = vset.pattern.permute.xlu0 0
      %696 = vperm.xlu0 %695, %v613
      %v697 = vpop.permute.xlu0 %696
      %698 = vset.pattern.permute.xlu0 0
      %699 = vperm.xlu0 %698, %v614
      %v700 = vpop.permute.xlu0 %699
      %701 = vset.pattern.permute.xlu0 0
      %702 = vperm.xlu0 %701, %v615
      %v703 = vpop.permute.xlu0 %702
      %704 = vset.pattern.permute.xlu0 0
      %705 = vperm.xlu0 %704, %v616
      %v706 = vpop.permute.xlu0 %705
      %707 = vset.pattern.permute.xlu0 0
      %708 = vperm.xlu0 %707, %v617
      %v709 = vpop.permute.xlu0 %708
      %710 = vset.pattern.permute.xlu0 0
      %711 = vperm.xlu0 %710, %v618
      %v712 = vpop.permute.xlu0 %711
      %713 = vset.pattern.permute.xlu0 0
      %714 = vperm.xlu0 %713, %v619
      %v715 = vpop.permute.xlu0 %714
      %716 = vset.pattern.permute.xlu0 0
      %717 = vperm.xlu0 %716, %v620
      %v718 = vpop.permute.xlu0 %717
      %719 = vset.pattern.permute.xlu0 0
      %720 = vperm.xlu0 %719, %v621
      %v721 = vpop.permute.xlu0 %720
      %722 = vset.pattern.permute.xlu0 0
      %723 = vperm.xlu0 %722, %v622
      %v724 = vpop.permute.xlu0 %723
      %725 = vset.pattern.permute.xlu0 0
      %726 = vperm.xlu0 %725, %v623
      %v727 = vpop.permute.xlu0 %726
      %728 = vset.pattern.permute.xlu0 0
      %729 = vperm.xlu0 %728, %v624
      %v730 = vpop.permute.xlu0 %729
      %731 = vset.pattern.permute.xlu0 0
      %732 = vperm.xlu0 %731, %v625
      %v733 = vpop.permute.xlu0 %732
      %vm734 = vcmp.eq.s32.totalorder %v628, 1
      %vm735 = vcmp.eq.s32.totalorder %v631, 1
      %vm736 = vcmp.eq.s32.totalorder %v634, 1
      %vm737 = vcmp.eq.s32.totalorder %v637, 1
      %vm738 = vcmp.eq.s32.totalorder %v640, 1
      %vm739 = vcmp.eq.s32.totalorder %v643, 1
      %vm740 = vcmp.eq.s32.totalorder %v646, 1
      %vm741 = vcmp.eq.s32.totalorder %v649, 1
      %vm742 = vcmp.eq.s32.totalorder %v652, 1
      %vm743 = vcmp.eq.s32.totalorder %v655, 1
      %vm744 = vcmp.eq.s32.totalorder %v658, 1
      %vm745 = vcmp.eq.s32.totalorder %v661, 1
      %vm746 = vcmp.eq.s32.totalorder %v664, 1
      %vm747 = vcmp.eq.s32.totalorder %v667, 1
      %vm748 = vcmp.eq.s32.totalorder %v670, 1
      %vm749 = vcmp.eq.s32.totalorder %v673, 1
      %vm750 = vcmp.eq.s32.totalorder %v676, 1
      %vm751 = vcmp.eq.s32.totalorder %v679, 1
      %vm752 = vcmp.eq.s32.totalorder %v682, 1
      %vm753 = vcmp.eq.s32.totalorder %v685, 1
      %vm754 = vcmp.eq.s32.totalorder %v688, 1
      %vm755 = vcmp.eq.s32.totalorder %v691, 1
      %vm756 = vcmp.eq.s32.totalorder %v694, 1
      %vm757 = vcmp.eq.s32.totalorder %v697, 1
      %vm758 = vcmp.eq.s32.totalorder %v700, 1
      %vm759 = vcmp.eq.s32.totalorder %v703, 1
      %vm760 = vcmp.eq.s32.totalorder %v706, 1
      %vm761 = vcmp.eq.s32.totalorder %v709, 1
      %vm762 = vcmp.eq.s32.totalorder %v712, 1
      %vm763 = vcmp.eq.s32.totalorder %v715, 1
      %vm764 = vcmp.eq.s32.totalorder %v718, 1
      %vm765 = vcmp.eq.s32.totalorder %v721, 1
      %vm766 = vcmp.eq.s32.totalorder %v724, 1
      %vm767 = vcmp.eq.s32.totalorder %v727, 1
      %vm768 = vcmp.eq.s32.totalorder %v730, 1
      %vm769 = vcmp.eq.s32.totalorder %v733, 1
      %vm807 = vcmask 1040384
      %v808 = vrot.slane 0.0, 7
      %v809 = vrot.slane %v442, 7
      %v810 = vsel %vm807, %v808, %v809
      %v811 = vrot.slane %v443, 7
      %v812 = vsel %vm807, %v809, %v811
      %v813 = vrot.slane %v444, 7
      %v814 = vsel %vm807, %v811, %v813
      %v815 = vrot.slane %v445, 7
      %v816 = vsel %vm807, %v813, %v815
      %v817 = vrot.slane %v446, 7
      %v818 = vsel %vm807, %v815, %v817
      %v819 = vrot.slane %v447, 7
      %v820 = vsel %vm807, %v817, %v819
      %v821 = vrot.slane %v448, 7
      %v822 = vsel %vm807, %v819, %v821
      %v823 = vrot.slane %v449, 7
      %v824 = vsel %vm807, %v821, %v823
      %v825 = vrot.slane %v450, 7
      %v826 = vsel %vm807, %v823, %v825
      %v827 = vrot.slane %v451, 7
      %v828 = vsel %vm807, %v825, %v827
      %v829 = vrot.slane %v452, 7
      %v830 = vsel %vm807, %v827, %v829
      %v831 = vrot.slane %v453, 7
      %v832 = vsel %vm807, %v829, %v831
      %v833 = vrot.slane %v454, 7
      %v834 = vsel %vm807, %v831, %v833
      %v835 = vrot.slane %v455, 7
      %v836 = vsel %vm807, %v833, %v835
      %v837 = vrot.slane %v456, 7
      %v838 = vsel %vm807, %v835, %v837
      %v839 = vrot.slane %v457, 7
      %v840 = vsel %vm807, %v837, %v839
      %v841 = vrot.slane %v458, 7
      %v842 = vsel %vm807, %v839, %v841
      %v843 = vrot.slane %v459, 7
      %v844 = vsel %vm807, %v841, %v843
      %v845 = vrot.slane %v460, 7
      %v846 = vsel %vm807, %v843, %v845
      %v847 = vrot.slane %v461, 7
      %v848 = vsel %vm807, %v845, %v847
      %v849 = vrot.slane %v462, 7
      %v850 = vsel %vm807, %v847, %v849
      %v851 = vrot.slane %v463, 7
      %v852 = vsel %vm807, %v849, %v851
      %v853 = vrot.slane %v464, 7
      %v854 = vsel %vm807, %v851, %v853
      %v855 = vrot.slane %v465, 7
      %v856 = vsel %vm807, %v853, %v855
      %v857 = vrot.slane %v466, 7
      %v858 = vsel %vm807, %v855, %v857
      %v859 = vrot.slane %v467, 7
      %v860 = vsel %vm807, %v857, %v859
      %v861 = vrot.slane %v468, 7
      %v862 = vsel %vm807, %v859, %v861
      %v863 = vrot.slane %v469, 7
      %v864 = vsel %vm807, %v861, %v863
      %v865 = vrot.slane %v470, 7
      %v866 = vsel %vm807, %v863, %v865
      %v867 = vrot.slane %v471, 7
      %v868 = vsel %vm807, %v865, %v867
      %v869 = vrot.slane %v472, 7
      %v870 = vsel %vm807, %v867, %v869
      %v871 = vrot.slane %v473, 7
      %v872 = vsel %vm807, %v869, %v871
      %v873 = vrot.slane %v474, 7
      %v874 = vsel %vm807, %v871, %v873
      %v875 = vrot.slane %v475, 7
      %v876 = vsel %vm807, %v873, %v875
      %v877 = vrot.slane %v476, 7
      %v878 = vsel %vm807, %v875, %v877
      %v879 = vrot.slane %v477, 7
      %v880 = vsel %vm807, %v877, %v879
      %v917 = vsel %vm734, %v810, 0.0
      %v918 = vsel %vm735, %v812, 0.0
      %v919 = vsel %vm736, %v814, 0.0
      %v920 = vsel %vm737, %v816, 0.0
      %v921 = vsel %vm738, %v818, 0.0
      %v922 = vsel %vm739, %v820, 0.0
      %v923 = vsel %vm740, %v822, 0.0
      %v924 = vsel %vm741, %v824, 0.0
      %v925 = vsel %vm742, %v826, 0.0
      %v926 = vsel %vm743, %v828, 0.0
      %v927 = vsel %vm744, %v830, 0.0
      %v928 = vsel %vm745, %v832, 0.0
      %v929 = vsel %vm746, %v834, 0.0
      %v930 = vsel %vm747, %v836, 0.0
      %v931 = vsel %vm748, %v838, 0.0
      %v932 = vsel %vm749, %v840, 0.0
      %v933 = vsel %vm750, %v842, 0.0
      %v934 = vsel %vm751, %v844, 0.0
      %v935 = vsel %vm752, %v846, 0.0
      %v936 = vsel %vm753, %v848, 0.0
      %v937 = vsel %vm754, %v850, 0.0
      %v938 = vsel %vm755, %v852, 0.0
      %v939 = vsel %vm756, %v854, 0.0
      %v940 = vsel %vm757, %v856, 0.0
      %v941 = vsel %vm758, %v858, 0.0
      %v942 = vsel %vm759, %v860, 0.0
      %v943 = vsel %vm760, %v862, 0.0
      %v944 = vsel %vm761, %v864, 0.0
      %v945 = vsel %vm762, %v866, 0.0
      %v946 = vsel %vm763, %v868, 0.0
      %v947 = vsel %vm764, %v870, 0.0
      %v948 = vsel %vm765, %v872, 0.0
      %v949 = vsel %vm766, %v874, 0.0
      %v950 = vsel %vm767, %v876, 0.0
      %v951 = vsel %vm768, %v878, 0.0
      %v952 = vsel %vm769, %v880, 0.0
      %v953 = vld [vmem:[%s2] sm:$0xff]
      %v954 = vld [vmem:[%s2 + $0x8] sm:$0xff]
      %s955 = scalar_lea.vmem %s2, 16
      %v956 = vld [vmem:[%s955] sm:$0xff]
      %v957 = vld [vmem:[%s955 + $0x8] sm:$0xff]
      %vm958 = vcmask 130048
      %v959 = vsel %vm958, %v442, 0
      %v961 = vsel %vm958, %v443, 0
      %v963 = vsel %vm958, %v444, 0
      %v965 = vsel %vm958, %v445, 0
      %v967 = vsel %vm958, %v446, 0
      %v969 = vsel %vm958, %v447, 0
      %v971 = vsel %vm958, %v448, 0
      %v973 = vsel %vm958, %v449, 0
      %v975 = vsel %vm958, %v450, 0
      %v977 = vsel %vm958, %v451, 0
      %v979 = vsel %vm958, %v452, 0
      %v981 = vsel %vm958, %v453, 0
      %v983 = vsel %vm958, %v454, 0
      %v985 = vsel %vm958, %v455, 0
      %v987 = vsel %vm958, %v456, 0
      %v989 = vsel %vm958, %v457, 0
      %v991 = vsel %vm958, %v458, 0
      %v993 = vsel %vm958, %v459, 0
      %v995 = vsel %vm958, %v460, 0
      %v997 = vsel %vm958, %v461, 0
      %v999 = vsel %vm958, %v462, 0
      %v1001 = vsel %vm958, %v463, 0
      %v1003 = vsel %vm958, %v464, 0
      %v1005 = vsel %vm958, %v465, 0
      %v1007 = vsel %vm958, %v466, 0
      %v1009 = vsel %vm958, %v467, 0
      %v1011 = vsel %vm958, %v468, 0
      %v1013 = vsel %vm958, %v469, 0
      %v1015 = vsel %vm958, %v470, 0
      %v1017 = vsel %vm958, %v471, 0
      %v1019 = vsel %vm958, %v472, 0
      %v1021 = vsel %vm958, %v473, 0
      %v1023 = vsel %vm958, %v474, 0
      %v1025 = vsel %vm958, %v475, 0
      %v1027 = vsel %vm958, %v476, 0
      %v1029 = vsel %vm958, %v477, 0
      %1031 = vmatpush.msra.mxu0 0.0
      %1032 = vmatpush.msra.mxu0 0.0
      %1033 = vmatpush.msra.mxu0 0.0
      %1034 = vmatpush.msra.mxu0 0.0
      %1035 = vmatpush.msra.mxu0 0.0
      %1036 = vmatpush.msra.mxu0 0.0
      %1037 = vmatpush.msra.mxu0 0.0
      %1038 = vmatpush.msra.mxu0 0.0
      %1039 = vmatpush.msra.mxu0 0.0
      %1040 = vmatpush.msra.mxu0 0.0
      %1041 = vmatpush.msra.mxu0 0.0
      %1042 = vmatpush.msra.mxu0 0.0
      %1043 = vmatpush.msra.mxu0 0.0
      %1044 = vmatpush.msra.mxu0 0.0
      %1045 = vmatpush.msra.mxu0 %v957
      %1046 = vmatpush.msra.mxu0 %v956
      %1047 = vmatmul.f32.gmra.mxu0 %v959
      %v1048 = vpop.f32.mrf.mxu0
      %v1049 = vadd.f32 0.0, %v1048
      %1050 = vmatmul.f32.gmra.mxu0 %v961
      %v1051 = vpop.f32.mrf.mxu0
      %v1052 = vadd.f32 0.0, %v1051
      %1053 = vmatmul.f32.gmra.mxu0 %v963
      %v1054 = vpop.f32.mrf.mxu0
      %v1055 = vadd.f32 0.0, %v1054
      %1056 = vmatmul.f32.gmra.mxu0 %v965
      %v1057 = vpop.f32.mrf.mxu0
      %v1058 = vadd.f32 0.0, %v1057
      %1059 = vmatmul.f32.gmra.mxu0 %v967
      %v1060 = vpop.f32.mrf.mxu0
      %v1061 = vadd.f32 0.0, %v1060
      %1062 = vmatmul.f32.gmra.mxu0 %v969
      %v1063 = vpop.f32.mrf.mxu0
      %v1064 = vadd.f32 0.0, %v1063
      %1065 = vmatmul.f32.gmra.mxu0 %v971
      %v1066 = vpop.f32.mrf.mxu0
      %v1067 = vadd.f32 0.0, %v1066
      %1068 = vmatmul.f32.gmra.mxu0 %v973
      %v1069 = vpop.f32.mrf.mxu0
      %v1070 = vadd.f32 0.0, %v1069
      %1071 = vmatmul.f32.gmra.mxu0 %v975
      %v1072 = vpop.f32.mrf.mxu0
      %v1073 = vadd.f32 0.0, %v1072
      %1074 = vmatmul.f32.gmra.mxu0 %v977
      %v1075 = vpop.f32.mrf.mxu0
      %v1076 = vadd.f32 0.0, %v1075
      %1077 = vmatmul.f32.gmra.mxu0 %v979
      %v1078 = vpop.f32.mrf.mxu0
      %v1079 = vadd.f32 0.0, %v1078
      %1080 = vmatmul.f32.gmra.mxu0 %v981
      %v1081 = vpop.f32.mrf.mxu0
      %v1082 = vadd.f32 0.0, %v1081
      %1083 = vmatmul.f32.gmra.mxu0 %v983
      %v1084 = vpop.f32.mrf.mxu0
      %v1085 = vadd.f32 0.0, %v1084
      %1086 = vmatmul.f32.gmra.mxu0 %v985
      %v1087 = vpop.f32.mrf.mxu0
      %v1088 = vadd.f32 0.0, %v1087
      %1089 = vmatmul.f32.gmra.mxu0 %v987
      %v1090 = vpop.f32.mrf.mxu0
      %v1091 = vadd.f32 0.0, %v1090
      %1092 = vmatmul.f32.gmra.mxu0 %v989
      %v1093 = vpop.f32.mrf.mxu0
      %v1094 = vadd.f32 0.0, %v1093
      %1095 = vmatmul.f32.gmra.mxu0 %v991
      %v1096 = vpop.f32.mrf.mxu0
      %v1097 = vadd.f32 0.0, %v1096
      %1098 = vmatmul.f32.gmra.mxu0 %v993
      %v1099 = vpop.f32.mrf.mxu0
      %v1100 = vadd.f32 0.0, %v1099
      %1101 = vmatmul.f32.gmra.mxu0 %v995
      %v1102 = vpop.f32.mrf.mxu0
      %v1103 = vadd.f32 0.0, %v1102
      %1104 = vmatmul.f32.gmra.mxu0 %v997
      %v1105 = vpop.f32.mrf.mxu0
      %v1106 = vadd.f32 0.0, %v1105
      %1107 = vmatmul.f32.gmra.mxu0 %v999
      %v1108 = vpop.f32.mrf.mxu0
      %v1109 = vadd.f32 0.0, %v1108
      %1110 = vmatmul.f32.gmra.mxu0 %v1001
      %v1111 = vpop.f32.mrf.mxu0
      %v1112 = vadd.f32 0.0, %v1111
      %1113 = vmatmul.f32.gmra.mxu0 %v1003
      %v1114 = vpop.f32.mrf.mxu0
      %v1115 = vadd.f32 0.0, %v1114
      %1116 = vmatmul.f32.gmra.mxu0 %v1005
      %v1117 = vpop.f32.mrf.mxu0
      %v1118 = vadd.f32 0.0, %v1117
      %1119 = vmatmul.f32.gmra.mxu0 %v1007
      %v1120 = vpop.f32.mrf.mxu0
      %v1121 = vadd.f32 0.0, %v1120
      %1122 = vmatmul.f32.gmra.mxu0 %v1009
      %v1123 = vpop.f32.mrf.mxu0
      %v1124 = vadd.f32 0.0, %v1123
      %1125 = vmatmul.f32.gmra.mxu0 %v1011
      %v1126 = vpop.f32.mrf.mxu0
      %v1127 = vadd.f32 0.0, %v1126
      %1128 = vmatmul.f32.gmra.mxu0 %v1013
      %v1129 = vpop.f32.mrf.mxu0
      %v1130 = vadd.f32 0.0, %v1129
      %1131 = vmatmul.f32.gmra.mxu0 %v1015
      %v1132 = vpop.f32.mrf.mxu0
      %v1133 = vadd.f32 0.0, %v1132
      %1134 = vmatmul.f32.gmra.mxu0 %v1017
      %v1135 = vpop.f32.mrf.mxu0
      %v1136 = vadd.f32 0.0, %v1135
      %1137 = vmatmul.f32.gmra.mxu0 %v1019
      %v1138 = vpop.f32.mrf.mxu0
      %v1139 = vadd.f32 0.0, %v1138
      %1140 = vmatmul.f32.gmra.mxu0 %v1021
      %v1141 = vpop.f32.mrf.mxu0
      %v1142 = vadd.f32 0.0, %v1141
      %1143 = vmatmul.f32.gmra.mxu0 %v1023
      %v1144 = vpop.f32.mrf.mxu0
      %v1145 = vadd.f32 0.0, %v1144
      %1146 = vmatmul.f32.gmra.mxu0 %v1025
      %v1147 = vpop.f32.mrf.mxu0
      %v1148 = vadd.f32 0.0, %v1147
      %1149 = vmatmul.f32.gmra.mxu0 %v1027
      %v1150 = vpop.f32.mrf.mxu0
      %v1151 = vadd.f32 0.0, %v1150
      %1152 = vmatmul.f32.gmra.mxu0 %v1029
      %v1153 = vpop.f32.mrf.mxu0
      %v1154 = vadd.f32 0.0, %v1153
      %1155 = vdwg.mxu0
      %v1157 = vsel %vm958, %v917, 0
      %v1160 = vsel %vm958, %v918, 0
      %v1163 = vsel %vm958, %v919, 0
      %v1166 = vsel %vm958, %v920, 0
      %v1169 = vsel %vm958, %v921, 0
      %v1172 = vsel %vm958, %v922, 0
      %v1175 = vsel %vm958, %v923, 0
      %v1178 = vsel %vm958, %v924, 0
      %v1181 = vsel %vm958, %v925, 0
      %v1184 = vsel %vm958, %v926, 0
      %v1187 = vsel %vm958, %v927, 0
      %v1190 = vsel %vm958, %v928, 0
      %v1193 = vsel %vm958, %v929, 0
      %v1196 = vsel %vm958, %v930, 0
      %v1199 = vsel %vm958, %v931, 0
      %v1202 = vsel %vm958, %v932, 0
      %v1205 = vsel %vm958, %v933, 0
      %v1208 = vsel %vm958, %v934, 0
      %v1211 = vsel %vm958, %v935, 0
      %v1214 = vsel %vm958, %v936, 0
      %v1217 = vsel %vm958, %v937, 0
      %v1220 = vsel %vm958, %v938, 0
      %v1223 = vsel %vm958, %v939, 0
      %v1226 = vsel %vm958, %v940, 0
      %v1229 = vsel %vm958, %v941, 0
      %v1232 = vsel %vm958, %v942, 0
      %v1235 = vsel %vm958, %v943, 0
      %v1238 = vsel %vm958, %v944, 0
      %v1241 = vsel %vm958, %v945, 0
      %v1244 = vsel %vm958, %v946, 0
      %v1247 = vsel %vm958, %v947, 0
      %v1250 = vsel %vm958, %v948, 0
      %v1253 = vsel %vm958, %v949, 0
      %v1256 = vsel %vm958, %v950, 0
      %v1259 = vsel %vm958, %v951, 0
      %v1262 = vsel %vm958, %v952, 0
      %1264 = vmatpush.msra.mxu0 0.0
      %1265 = vmatpush.msra.mxu0 0.0
      %1266 = vmatpush.msra.mxu0 0.0
      %1267 = vmatpush.msra.mxu0 0.0
      %1268 = vmatpush.msra.mxu0 0.0
      %1269 = vmatpush.msra.mxu0 0.0
      %1270 = vmatpush.msra.mxu0 0.0
      %1271 = vmatpush.msra.mxu0 0.0
      %1272 = vmatpush.msra.mxu0 0.0
      %1273 = vmatpush.msra.mxu0 0.0
      %1274 = vmatpush.msra.mxu0 0.0
      %1275 = vmatpush.msra.mxu0 0.0
      %1276 = vmatpush.msra.mxu0 0.0
      %1277 = vmatpush.msra.mxu0 0.0
      %1278 = vmatpush.msra.mxu0 %v954
      %1279 = vmatpush.msra.mxu0 %v953
      %1280 = vmatmul.f32.gmra.mxu0 %v1157
      %v1281 = vpop.f32.mrf.mxu0
      %v1282 = vadd.f32 %v1049, %v1281
      %1283 = vmatmul.f32.gmra.mxu0 %v1160
      %v1284 = vpop.f32.mrf.mxu0
      %v1285 = vadd.f32 %v1052, %v1284
      %1286 = vmatmul.f32.gmra.mxu0 %v1163
      %v1287 = vpop.f32.mrf.mxu0
      %v1288 = vadd.f32 %v1055, %v1287
      %1289 = vmatmul.f32.gmra.mxu0 %v1166
      %v1290 = vpop.f32.mrf.mxu0
      %v1291 = vadd.f32 %v1058, %v1290
      %1292 = vmatmul.f32.gmra.mxu0 %v1169
      %v1293 = vpop.f32.mrf.mxu0
      %v1294 = vadd.f32 %v1061, %v1293
      %1295 = vmatmul.f32.gmra.mxu0 %v1172
      %v1296 = vpop.f32.mrf.mxu0
      %v1297 = vadd.f32 %v1064, %v1296
      %1298 = vmatmul.f32.gmra.mxu0 %v1175
      %v1299 = vpop.f32.mrf.mxu0
      %v1300 = vadd.f32 %v1067, %v1299
      %1301 = vmatmul.f32.gmra.mxu0 %v1178
      %v1302 = vpop.f32.mrf.mxu0
      %v1303 = vadd.f32 %v1070, %v1302
      %1304 = vmatmul.f32.gmra.mxu0 %v1181
      %v1305 = vpop.f32.mrf.mxu0
      %v1306 = vadd.f32 %v1073, %v1305
      %1307 = vmatmul.f32.gmra.mxu0 %v1184
      %v1308 = vpop.f32.mrf.mxu0
      %v1309 = vadd.f32 %v1076, %v1308
      %1310 = vmatmul.f32.gmra.mxu0 %v1187
      %v1311 = vpop.f32.mrf.mxu0
      %v1312 = vadd.f32 %v1079, %v1311
      %1313 = vmatmul.f32.gmra.mxu0 %v1190
      %v1314 = vpop.f32.mrf.mxu0
      %v1315 = vadd.f32 %v1082, %v1314
      %1316 = vmatmul.f32.gmra.mxu0 %v1193
      %v1317 = vpop.f32.mrf.mxu0
      %v1318 = vadd.f32 %v1085, %v1317
      %1319 = vmatmul.f32.gmra.mxu0 %v1196
      %v1320 = vpop.f32.mrf.mxu0
      %v1321 = vadd.f32 %v1088, %v1320
      %1322 = vmatmul.f32.gmra.mxu0 %v1199
      %v1323 = vpop.f32.mrf.mxu0
      %v1324 = vadd.f32 %v1091, %v1323
      %1325 = vmatmul.f32.gmra.mxu0 %v1202
      %v1326 = vpop.f32.mrf.mxu0
      %v1327 = vadd.f32 %v1094, %v1326
      %1328 = vmatmul.f32.gmra.mxu0 %v1205
      %v1329 = vpop.f32.mrf.mxu0
      %v1330 = vadd.f32 %v1097, %v1329
      %1331 = vmatmul.f32.gmra.mxu0 %v1208
      %v1332 = vpop.f32.mrf.mxu0
      %v1333 = vadd.f32 %v1100, %v1332
      %1334 = vmatmul.f32.gmra.mxu0 %v1211
      %v1335 = vpop.f32.mrf.mxu0
      %v1336 = vadd.f32 %v1103, %v1335
      %1337 = vmatmul.f32.gmra.mxu0 %v1214
      %v1338 = vpop.f32.mrf.mxu0
      %v1339 = vadd.f32 %v1106, %v1338
      %1340 = vmatmul.f32.gmra.mxu0 %v1217
      %v1341 = vpop.f32.mrf.mxu0
      %v1342 = vadd.f32 %v1109, %v1341
      %1343 = vmatmul.f32.gmra.mxu0 %v1220
      %v1344 = vpop.f32.mrf.mxu0
      %v1345 = vadd.f32 %v1112, %v1344
      %1346 = vmatmul.f32.gmra.mxu0 %v1223
      %v1347 = vpop.f32.mrf.mxu0
      %v1348 = vadd.f32 %v1115, %v1347
      %1349 = vmatmul.f32.gmra.mxu0 %v1226
      %v1350 = vpop.f32.mrf.mxu0
      %v1351 = vadd.f32 %v1118, %v1350
      %1352 = vmatmul.f32.gmra.mxu0 %v1229
      %v1353 = vpop.f32.mrf.mxu0
      %v1354 = vadd.f32 %v1121, %v1353
      %1355 = vmatmul.f32.gmra.mxu0 %v1232
      %v1356 = vpop.f32.mrf.mxu0
      %v1357 = vadd.f32 %v1124, %v1356
      %1358 = vmatmul.f32.gmra.mxu0 %v1235
      %v1359 = vpop.f32.mrf.mxu0
      %v1360 = vadd.f32 %v1127, %v1359
      %1361 = vmatmul.f32.gmra.mxu0 %v1238
      %v1362 = vpop.f32.mrf.mxu0
      %v1363 = vadd.f32 %v1130, %v1362
      %1364 = vmatmul.f32.gmra.mxu0 %v1241
      %v1365 = vpop.f32.mrf.mxu0
      %v1366 = vadd.f32 %v1133, %v1365
      %1367 = vmatmul.f32.gmra.mxu0 %v1244
      %v1368 = vpop.f32.mrf.mxu0
      %v1369 = vadd.f32 %v1136, %v1368
      %1370 = vmatmul.f32.gmra.mxu0 %v1247
      %v1371 = vpop.f32.mrf.mxu0
      %v1372 = vadd.f32 %v1139, %v1371
      %1373 = vmatmul.f32.gmra.mxu0 %v1250
      %v1374 = vpop.f32.mrf.mxu0
      %v1375 = vadd.f32 %v1142, %v1374
      %1376 = vmatmul.f32.gmra.mxu0 %v1253
      %v1377 = vpop.f32.mrf.mxu0
      %v1378 = vadd.f32 %v1145, %v1377
      %1379 = vmatmul.f32.gmra.mxu0 %v1256
      %v1380 = vpop.f32.mrf.mxu0
      %v1381 = vadd.f32 %v1148, %v1380
      %1382 = vmatmul.f32.gmra.mxu0 %v1259
      %v1383 = vpop.f32.mrf.mxu0
      %v1384 = vadd.f32 %v1151, %v1383
      %1385 = vmatmul.f32.gmra.mxu0 %v1262
      %v1386 = vpop.f32.mrf.mxu0
      %v1387 = vadd.f32 %v1154, %v1386
      %1388 = vdwg.mxu0
      %v1389 = vsel %vm554, 1, 0
      %v1390 = vsel %vm555, 1, 0
      %v1391 = vsel %vm556, 1, 0
      %v1392 = vsel %vm557, 1, 0
      %v1393 = vsel %vm558, 1, 0
      %v1394 = vsel %vm559, 1, 0
      %v1395 = vsel %vm560, 1, 0
      %v1396 = vsel %vm561, 1, 0
      %v1397 = vsel %vm562, 1, 0
      %v1398 = vsel %vm563, 1, 0
      %v1399 = vsel %vm564, 1, 0
      %v1400 = vsel %vm565, 1, 0
      %v1401 = vsel %vm566, 1, 0
      %v1402 = vsel %vm567, 1, 0
      %v1403 = vsel %vm568, 1, 0
      %v1404 = vsel %vm569, 1, 0
      %v1405 = vsel %vm570, 1, 0
      %v1406 = vsel %vm571, 1, 0
      %v1407 = vsel %vm572, 1, 0
      %v1408 = vsel %vm573, 1, 0
      %v1409 = vsel %vm574, 1, 0
      %v1410 = vsel %vm575, 1, 0
      %v1411 = vsel %vm576, 1, 0
      %v1412 = vsel %vm577, 1, 0
      %v1413 = vsel %vm578, 1, 0
      %v1414 = vsel %vm579, 1, 0
      %v1415 = vsel %vm580, 1, 0
      %v1416 = vsel %vm581, 1, 0
      %v1417 = vsel %vm582, 1, 0
      %v1418 = vsel %vm583, 1, 0
      %v1419 = vsel %vm584, 1, 0
      %v1420 = vsel %vm585, 1, 0
      %v1421 = vsel %vm586, 1, 0
      %v1422 = vsel %vm587, 1, 0
      %v1423 = vsel %vm588, 1, 0
      %v1424 = vsel %vm589, 1, 0
      %1425 = vset.pattern.permute.xlu0 0
      %1426 = vperm.xlu0 %1425, %v1389
      %v1427 = vpop.permute.xlu0 %1426
      %1428 = vset.pattern.permute.xlu0 0
      %1429 = vperm.xlu0 %1428, %v1390
      %v1430 = vpop.permute.xlu0 %1429
      %1431 = vset.pattern.permute.xlu0 0
      %1432 = vperm.xlu0 %1431, %v1391
      %v1433 = vpop.permute.xlu0 %1432
      %1434 = vset.pattern.permute.xlu0 0
      %1435 = vperm.xlu0 %1434, %v1392
      %v1436 = vpop.permute.xlu0 %1435
      %1437 = vset.pattern.permute.xlu0 0
      %1438 = vperm.xlu0 %1437, %v1393
      %v1439 = vpop.permute.xlu0 %1438
      %1440 = vset.pattern.permute.xlu0 0
      %1441 = vperm.xlu0 %1440, %v1394
      %v1442 = vpop.permute.xlu0 %1441
      %1443 = vset.pattern.permute.xlu0 0
      %1444 = vperm.xlu0 %1443, %v1395
      %v1445 = vpop.permute.xlu0 %1444
      %1446 = vset.pattern.permute.xlu0 0
      %1447 = vperm.xlu0 %1446, %v1396
      %v1448 = vpop.permute.xlu0 %1447
      %1449 = vset.pattern.permute.xlu0 0
      %1450 = vperm.xlu0 %1449, %v1397
      %v1451 = vpop.permute.xlu0 %1450
      %1452 = vset.pattern.permute.xlu0 0
      %1453 = vperm.xlu0 %1452, %v1398
      %v1454 = vpop.permute.xlu0 %1453
      %1455 = vset.pattern.permute.xlu0 0
      %1456 = vperm.xlu0 %1455, %v1399
      %v1457 = vpop.permute.xlu0 %1456
      %1458 = vset.pattern.permute.xlu0 0
      %1459 = vperm.xlu0 %1458, %v1400
      %v1460 = vpop.permute.xlu0 %1459
      %1461 = vset.pattern.permute.xlu0 0
      %1462 = vperm.xlu0 %1461, %v1401
      %v1463 = vpop.permute.xlu0 %1462
      %1464 = vset.pattern.permute.xlu0 0
      %1465 = vperm.xlu0 %1464, %v1402
      %v1466 = vpop.permute.xlu0 %1465
      %1467 = vset.pattern.permute.xlu0 0
      %1468 = vperm.xlu0 %1467, %v1403
      %v1469 = vpop.permute.xlu0 %1468
      %1470 = vset.pattern.permute.xlu0 0
      %1471 = vperm.xlu0 %1470, %v1404
      %v1472 = vpop.permute.xlu0 %1471
      %1473 = vset.pattern.permute.xlu0 0
      %1474 = vperm.xlu0 %1473, %v1405
      %v1475 = vpop.permute.xlu0 %1474
      %1476 = vset.pattern.permute.xlu0 0
      %1477 = vperm.xlu0 %1476, %v1406
      %v1478 = vpop.permute.xlu0 %1477
      %1479 = vset.pattern.permute.xlu0 0
      %1480 = vperm.xlu0 %1479, %v1407
      %v1481 = vpop.permute.xlu0 %1480
      %1482 = vset.pattern.permute.xlu0 0
      %1483 = vperm.xlu0 %1482, %v1408
      %v1484 = vpop.permute.xlu0 %1483
      %1485 = vset.pattern.permute.xlu0 0
      %1486 = vperm.xlu0 %1485, %v1409
      %v1487 = vpop.permute.xlu0 %1486
      %1488 = vset.pattern.permute.xlu0 0
      %1489 = vperm.xlu0 %1488, %v1410
      %v1490 = vpop.permute.xlu0 %1489
      %1491 = vset.pattern.permute.xlu0 0
      %1492 = vperm.xlu0 %1491, %v1411
      %v1493 = vpop.permute.xlu0 %1492
      %1494 = vset.pattern.permute.xlu0 0
      %1495 = vperm.xlu0 %1494, %v1412
      %v1496 = vpop.permute.xlu0 %1495
      %1497 = vset.pattern.permute.xlu0 0
      %1498 = vperm.xlu0 %1497, %v1413
      %v1499 = vpop.permute.xlu0 %1498
      %1500 = vset.pattern.permute.xlu0 0
      %1501 = vperm.xlu0 %1500, %v1414
      %v1502 = vpop.permute.xlu0 %1501
      %1503 = vset.pattern.permute.xlu0 0
      %1504 = vperm.xlu0 %1503, %v1415
      %v1505 = vpop.permute.xlu0 %1504
      %1506 = vset.pattern.permute.xlu0 0
      %1507 = vperm.xlu0 %1506, %v1416
      %v1508 = vpop.permute.xlu0 %1507
      %1509 = vset.pattern.permute.xlu0 0
      %1510 = vperm.xlu0 %1509, %v1417
      %v1511 = vpop.permute.xlu0 %1510
      %1512 = vset.pattern.permute.xlu0 0
      %1513 = vperm.xlu0 %1512, %v1418
      %v1514 = vpop.permute.xlu0 %1513
      %1515 = vset.pattern.permute.xlu0 0
      %1516 = vperm.xlu0 %1515, %v1419
      %v1517 = vpop.permute.xlu0 %1516
      %1518 = vset.pattern.permute.xlu0 0
      %1519 = vperm.xlu0 %1518, %v1420
      %v1520 = vpop.permute.xlu0 %1519
      %1521 = vset.pattern.permute.xlu0 0
      %1522 = vperm.xlu0 %1521, %v1421
      %v1523 = vpop.permute.xlu0 %1522
      %1524 = vset.pattern.permute.xlu0 0
      %1525 = vperm.xlu0 %1524, %v1422
      %v1526 = vpop.permute.xlu0 %1525
      %1527 = vset.pattern.permute.xlu0 0
      %1528 = vperm.xlu0 %1527, %v1423
      %v1529 = vpop.permute.xlu0 %1528
      %1530 = vset.pattern.permute.xlu0 0
      %1531 = vperm.xlu0 %1530, %v1424
      %v1532 = vpop.permute.xlu0 %1531
      %vm1533 = vcmp.eq.s32.totalorder %v1427, 1
      %vm1534 = vcmp.eq.s32.totalorder %v1430, 1
      %vm1535 = vcmp.eq.s32.totalorder %v1433, 1
      %vm1536 = vcmp.eq.s32.totalorder %v1436, 1
      %vm1537 = vcmp.eq.s32.totalorder %v1439, 1
      %vm1538 = vcmp.eq.s32.totalorder %v1442, 1
      %vm1539 = vcmp.eq.s32.totalorder %v1445, 1
      %vm1540 = vcmp.eq.s32.totalorder %v1448, 1
      %vm1541 = vcmp.eq.s32.totalorder %v1451, 1
      %vm1542 = vcmp.eq.s32.totalorder %v1454, 1
      %vm1543 = vcmp.eq.s32.totalorder %v1457, 1
      %vm1544 = vcmp.eq.s32.totalorder %v1460, 1
      %vm1545 = vcmp.eq.s32.totalorder %v1463, 1
      %vm1546 = vcmp.eq.s32.totalorder %v1466, 1
      %vm1547 = vcmp.eq.s32.totalorder %v1469, 1
      %vm1548 = vcmp.eq.s32.totalorder %v1472, 1
      %vm1549 = vcmp.eq.s32.totalorder %v1475, 1
      %vm1550 = vcmp.eq.s32.totalorder %v1478, 1
      %vm1551 = vcmp.eq.s32.totalorder %v1481, 1
      %vm1552 = vcmp.eq.s32.totalorder %v1484, 1
      %vm1553 = vcmp.eq.s32.totalorder %v1487, 1
      %vm1554 = vcmp.eq.s32.totalorder %v1490, 1
      %vm1555 = vcmp.eq.s32.totalorder %v1493, 1
      %vm1556 = vcmp.eq.s32.totalorder %v1496, 1
      %vm1557 = vcmp.eq.s32.totalorder %v1499, 1
      %vm1558 = vcmp.eq.s32.totalorder %v1502, 1
      %vm1559 = vcmp.eq.s32.totalorder %v1505, 1
      %vm1560 = vcmp.eq.s32.totalorder %v1508, 1
      %vm1561 = vcmp.eq.s32.totalorder %v1511, 1
      %vm1562 = vcmp.eq.s32.totalorder %v1514, 1
      %vm1563 = vcmp.eq.s32.totalorder %v1517, 1
      %vm1564 = vcmp.eq.s32.totalorder %v1520, 1
      %vm1565 = vcmp.eq.s32.totalorder %v1523, 1
      %vm1566 = vcmp.eq.s32.totalorder %v1526, 1
      %vm1567 = vcmp.eq.s32.totalorder %v1529, 1
      %vm1568 = vcmp.eq.s32.totalorder %v1532, 1
      %vm1570 = vcmask 1046528
      %v1571 = vrot.slane %v442, 1
      %v1572 = vrot.slane %v443, 1
      %v1573 = vsel %vm1570, %v1571, %v1572
      %v1574 = vrot.slane %v444, 1
      %v1575 = vsel %vm1570, %v1572, %v1574
      %v1576 = vrot.slane %v445, 1
      %v1577 = vsel %vm1570, %v1574, %v1576
      %v1578 = vrot.slane %v446, 1
      %v1579 = vsel %vm1570, %v1576, %v1578
      %v1580 = vrot.slane %v447, 1
      %v1581 = vsel %vm1570, %v1578, %v1580
      %v1582 = vrot.slane %v448, 1
      %v1583 = vsel %vm1570, %v1580, %v1582
      %v1584 = vrot.slane %v449, 1
      %v1585 = vsel %vm1570, %v1582, %v1584
      %v1586 = vrot.slane %v450, 1
      %v1587 = vsel %vm1570, %v1584, %v1586
      %v1588 = vrot.slane %v451, 1
      %v1589 = vsel %vm1570, %v1586, %v1588
      %v1590 = vrot.slane %v452, 1
      %v1591 = vsel %vm1570, %v1588, %v1590
      %v1592 = vrot.slane %v453, 1
      %v1593 = vsel %vm1570, %v1590, %v1592
      %v1594 = vrot.slane %v454, 1
      %v1595 = vsel %vm1570, %v1592, %v1594
      %v1596 = vrot.slane %v455, 1
      %v1597 = vsel %vm1570, %v1594, %v1596
      %v1598 = vrot.slane %v456, 1
      %v1599 = vsel %vm1570, %v1596, %v1598
      %v1600 = vrot.slane %v457, 1
      %v1601 = vsel %vm1570, %v1598, %v1600
      %v1602 = vrot.slane %v458, 1
      %v1603 = vsel %vm1570, %v1600, %v1602
      %v1604 = vrot.slane %v459, 1
      %v1605 = vsel %vm1570, %v1602, %v1604
      %v1606 = vrot.slane %v460, 1
      %v1607 = vsel %vm1570, %v1604, %v1606
      %v1608 = vrot.slane %v461, 1
      %v1609 = vsel %vm1570, %v1606, %v1608
      %v1610 = vrot.slane %v462, 1
      %v1611 = vsel %vm1570, %v1608, %v1610
      %v1612 = vrot.slane %v463, 1
      %v1613 = vsel %vm1570, %v1610, %v1612
      %v1614 = vrot.slane %v464, 1
      %v1615 = vsel %vm1570, %v1612, %v1614
      %v1616 = vrot.slane %v465, 1
      %v1617 = vsel %vm1570, %v1614, %v1616
      %v1618 = vrot.slane %v466, 1
      %v1619 = vsel %vm1570, %v1616, %v1618
      %v1620 = vrot.slane %v467, 1
      %v1621 = vsel %vm1570, %v1618, %v1620
      %v1622 = vrot.slane %v468, 1
      %v1623 = vsel %vm1570, %v1620, %v1622
      %v1624 = vrot.slane %v469, 1
      %v1625 = vsel %vm1570, %v1622, %v1624
      %v1626 = vrot.slane %v470, 1
      %v1627 = vsel %vm1570, %v1624, %v1626
      %v1628 = vrot.slane %v471, 1
      %v1629 = vsel %vm1570, %v1626, %v1628
      %v1630 = vrot.slane %v472, 1
      %v1631 = vsel %vm1570, %v1628, %v1630
      %v1632 = vrot.slane %v473, 1
      %v1633 = vsel %vm1570, %v1630, %v1632
      %v1634 = vrot.slane %v474, 1
      %v1635 = vsel %vm1570, %v1632, %v1634
      %v1636 = vrot.slane %v475, 1
      %v1637 = vsel %vm1570, %v1634, %v1636
      %v1638 = vrot.slane %v476, 1
      %v1639 = vsel %vm1570, %v1636, %v1638
      %v1640 = vrot.slane %v477, 1
      %v1641 = vsel %vm1570, %v1638, %v1640
      %v1642 = vrot.slane %v478, 1
      %v1643 = vsel %vm1570, %v1640, %v1642
      %v1680 = vsel %vm1533, %v1573, 0.0
      %v1681 = vsel %vm1534, %v1575, 0.0
      %v1682 = vsel %vm1535, %v1577, 0.0
      %v1683 = vsel %vm1536, %v1579, 0.0
      %v1684 = vsel %vm1537, %v1581, 0.0
      %v1685 = vsel %vm1538, %v1583, 0.0
      %v1686 = vsel %vm1539, %v1585, 0.0
      %v1687 = vsel %vm1540, %v1587, 0.0
      %v1688 = vsel %vm1541, %v1589, 0.0
      %v1689 = vsel %vm1542, %v1591, 0.0
      %v1690 = vsel %vm1543, %v1593, 0.0
      %v1691 = vsel %vm1544, %v1595, 0.0
      %v1692 = vsel %vm1545, %v1597, 0.0
      %v1693 = vsel %vm1546, %v1599, 0.0
      %v1694 = vsel %vm1547, %v1601, 0.0
      %v1695 = vsel %vm1548, %v1603, 0.0
      %v1696 = vsel %vm1549, %v1605, 0.0
      %v1697 = vsel %vm1550, %v1607, 0.0
      %v1698 = vsel %vm1551, %v1609, 0.0
      %v1699 = vsel %vm1552, %v1611, 0.0
      %v1700 = vsel %vm1553, %v1613, 0.0
      %v1701 = vsel %vm1554, %v1615, 0.0
      %v1702 = vsel %vm1555, %v1617, 0.0
      %v1703 = vsel %vm1556, %v1619, 0.0
      %v1704 = vsel %vm1557, %v1621, 0.0
      %v1705 = vsel %vm1558, %v1623, 0.0
      %v1706 = vsel %vm1559, %v1625, 0.0
      %v1707 = vsel %vm1560, %v1627, 0.0
      %v1708 = vsel %vm1561, %v1629, 0.0
      %v1709 = vsel %vm1562, %v1631, 0.0
      %v1710 = vsel %vm1563, %v1633, 0.0
      %v1711 = vsel %vm1564, %v1635, 0.0
      %v1712 = vsel %vm1565, %v1637, 0.0
      %v1713 = vsel %vm1566, %v1639, 0.0
      %v1714 = vsel %vm1567, %v1641, 0.0
      %v1715 = vsel %vm1568, %v1643, 0.0
      %s1716 = scalar_lea.vmem %s2, 32
      %v1717 = vld [vmem:[%s1716] sm:$0xff]
      %v1718 = vld [vmem:[%s1716 + $0x8] sm:$0xff]
      %v1720 = vsel %vm958, %v1680, 0
      %v1723 = vsel %vm958, %v1681, 0
      %v1726 = vsel %vm958, %v1682, 0
      %v1729 = vsel %vm958, %v1683, 0
      %v1732 = vsel %vm958, %v1684, 0
      %v1735 = vsel %vm958, %v1685, 0
      %v1738 = vsel %vm958, %v1686, 0
      %v1741 = vsel %vm958, %v1687, 0
      %v1744 = vsel %vm958, %v1688, 0
      %v1747 = vsel %vm958, %v1689, 0
      %v1750 = vsel %vm958, %v1690, 0
      %v1753 = vsel %vm958, %v1691, 0
      %v1756 = vsel %vm958, %v1692, 0
      %v1759 = vsel %vm958, %v1693, 0
      %v1762 = vsel %vm958, %v1694, 0
      %v1765 = vsel %vm958, %v1695, 0
      %v1768 = vsel %vm958, %v1696, 0
      %v1771 = vsel %vm958, %v1697, 0
      %v1774 = vsel %vm958, %v1698, 0
      %v1777 = vsel %vm958, %v1699, 0
      %v1780 = vsel %vm958, %v1700, 0
      %v1783 = vsel %vm958, %v1701, 0
      %v1786 = vsel %vm958, %v1702, 0
      %v1789 = vsel %vm958, %v1703, 0
      %v1792 = vsel %vm958, %v1704, 0
      %v1795 = vsel %vm958, %v1705, 0
      %v1798 = vsel %vm958, %v1706, 0
      %v1801 = vsel %vm958, %v1707, 0
      %v1804 = vsel %vm958, %v1708, 0
      %v1807 = vsel %vm958, %v1709, 0
      %v1810 = vsel %vm958, %v1710, 0
      %v1813 = vsel %vm958, %v1711, 0
      %v1816 = vsel %vm958, %v1712, 0
      %v1819 = vsel %vm958, %v1713, 0
      %v1822 = vsel %vm958, %v1714, 0
      %v1825 = vsel %vm958, %v1715, 0
      %1827 = vmatpush.msra.mxu0 0.0
      %1828 = vmatpush.msra.mxu0 0.0
      %1829 = vmatpush.msra.mxu0 0.0
      %1830 = vmatpush.msra.mxu0 0.0
      %1831 = vmatpush.msra.mxu0 0.0
      %1832 = vmatpush.msra.mxu0 0.0
      %1833 = vmatpush.msra.mxu0 0.0
      %1834 = vmatpush.msra.mxu0 0.0
      %1835 = vmatpush.msra.mxu0 0.0
      %1836 = vmatpush.msra.mxu0 0.0
      %1837 = vmatpush.msra.mxu0 0.0
      %1838 = vmatpush.msra.mxu0 0.0
      %1839 = vmatpush.msra.mxu0 0.0
      %1840 = vmatpush.msra.mxu0 0.0
      %1841 = vmatpush.msra.mxu0 %v1718
      %1842 = vmatpush.msra.mxu0 %v1717
      %1843 = vmatmul.f32.gmra.mxu0 %v1720
      %v1844 = vpop.f32.mrf.mxu0
      %v1845 = vadd.f32 0.0, %v1844
      %1846 = vmatmul.f32.gmra.mxu0 %v1723
      %v1847 = vpop.f32.mrf.mxu0
      %v1848 = vadd.f32 0.0, %v1847
      %1849 = vmatmul.f32.gmra.mxu0 %v1726
      %v1850 = vpop.f32.mrf.mxu0
      %v1851 = vadd.f32 0.0, %v1850
      %1852 = vmatmul.f32.gmra.mxu0 %v1729
      %v1853 = vpop.f32.mrf.mxu0
      %v1854 = vadd.f32 0.0, %v1853
      %1855 = vmatmul.f32.gmra.mxu0 %v1732
      %v1856 = vpop.f32.mrf.mxu0
      %v1857 = vadd.f32 0.0, %v1856
      %1858 = vmatmul.f32.gmra.mxu0 %v1735
      %v1859 = vpop.f32.mrf.mxu0
      %v1860 = vadd.f32 0.0, %v1859
      %1861 = vmatmul.f32.gmra.mxu0 %v1738
      %v1862 = vpop.f32.mrf.mxu0
      %v1863 = vadd.f32 0.0, %v1862
      %1864 = vmatmul.f32.gmra.mxu0 %v1741
      %v1865 = vpop.f32.mrf.mxu0
      %v1866 = vadd.f32 0.0, %v1865
      %1867 = vmatmul.f32.gmra.mxu0 %v1744
      %v1868 = vpop.f32.mrf.mxu0
      %v1869 = vadd.f32 0.0, %v1868
      %1870 = vmatmul.f32.gmra.mxu0 %v1747
      %v1871 = vpop.f32.mrf.mxu0
      %v1872 = vadd.f32 0.0, %v1871
      %1873 = vmatmul.f32.gmra.mxu0 %v1750
      %v1874 = vpop.f32.mrf.mxu0
      %v1875 = vadd.f32 0.0, %v1874
      %1876 = vmatmul.f32.gmra.mxu0 %v1753
      %v1877 = vpop.f32.mrf.mxu0
      %v1878 = vadd.f32 0.0, %v1877
      %1879 = vmatmul.f32.gmra.mxu0 %v1756
      %v1880 = vpop.f32.mrf.mxu0
      %v1881 = vadd.f32 0.0, %v1880
      %1882 = vmatmul.f32.gmra.mxu0 %v1759
      %v1883 = vpop.f32.mrf.mxu0
      %v1884 = vadd.f32 0.0, %v1883
      %1885 = vmatmul.f32.gmra.mxu0 %v1762
      %v1886 = vpop.f32.mrf.mxu0
      %v1887 = vadd.f32 0.0, %v1886
      %1888 = vmatmul.f32.gmra.mxu0 %v1765
      %v1889 = vpop.f32.mrf.mxu0
      %v1890 = vadd.f32 0.0, %v1889
      %1891 = vmatmul.f32.gmra.mxu0 %v1768
      %v1892 = vpop.f32.mrf.mxu0
      %v1893 = vadd.f32 0.0, %v1892
      %1894 = vmatmul.f32.gmra.mxu0 %v1771
      %v1895 = vpop.f32.mrf.mxu0
      %v1896 = vadd.f32 0.0, %v1895
      %1897 = vmatmul.f32.gmra.mxu0 %v1774
      %v1898 = vpop.f32.mrf.mxu0
      %v1899 = vadd.f32 0.0, %v1898
      %1900 = vmatmul.f32.gmra.mxu0 %v1777
      %v1901 = vpop.f32.mrf.mxu0
      %v1902 = vadd.f32 0.0, %v1901
      %1903 = vmatmul.f32.gmra.mxu0 %v1780
      %v1904 = vpop.f32.mrf.mxu0
      %v1905 = vadd.f32 0.0, %v1904
      %1906 = vmatmul.f32.gmra.mxu0 %v1783
      %v1907 = vpop.f32.mrf.mxu0
      %v1908 = vadd.f32 0.0, %v1907
      %1909 = vmatmul.f32.gmra.mxu0 %v1786
      %v1910 = vpop.f32.mrf.mxu0
      %v1911 = vadd.f32 0.0, %v1910
      %1912 = vmatmul.f32.gmra.mxu0 %v1789
      %v1913 = vpop.f32.mrf.mxu0
      %v1914 = vadd.f32 0.0, %v1913
      %1915 = vmatmul.f32.gmra.mxu0 %v1792
      %v1916 = vpop.f32.mrf.mxu0
      %v1917 = vadd.f32 0.0, %v1916
      %1918 = vmatmul.f32.gmra.mxu0 %v1795
      %v1919 = vpop.f32.mrf.mxu0
      %v1920 = vadd.f32 0.0, %v1919
      %1921 = vmatmul.f32.gmra.mxu0 %v1798
      %v1922 = vpop.f32.mrf.mxu0
      %v1923 = vadd.f32 0.0, %v1922
      %1924 = vmatmul.f32.gmra.mxu0 %v1801
      %v1925 = vpop.f32.mrf.mxu0
      %v1926 = vadd.f32 0.0, %v1925
      %1927 = vmatmul.f32.gmra.mxu0 %v1804
      %v1928 = vpop.f32.mrf.mxu0
      %v1929 = vadd.f32 0.0, %v1928
      %1930 = vmatmul.f32.gmra.mxu0 %v1807
      %v1931 = vpop.f32.mrf.mxu0
      %v1932 = vadd.f32 0.0, %v1931
      %1933 = vmatmul.f32.gmra.mxu0 %v1810
      %v1934 = vpop.f32.mrf.mxu0
      %v1935 = vadd.f32 0.0, %v1934
      %1936 = vmatmul.f32.gmra.mxu0 %v1813
      %v1937 = vpop.f32.mrf.mxu0
      %v1938 = vadd.f32 0.0, %v1937
      %1939 = vmatmul.f32.gmra.mxu0 %v1816
      %v1940 = vpop.f32.mrf.mxu0
      %v1941 = vadd.f32 0.0, %v1940
      %1942 = vmatmul.f32.gmra.mxu0 %v1819
      %v1943 = vpop.f32.mrf.mxu0
      %v1944 = vadd.f32 0.0, %v1943
      %1945 = vmatmul.f32.gmra.mxu0 %v1822
      %v1946 = vpop.f32.mrf.mxu0
      %v1947 = vadd.f32 0.0, %v1946
      %1948 = vmatmul.f32.gmra.mxu0 %v1825
      %v1949 = vpop.f32.mrf.mxu0
      %v1950 = vadd.f32 0.0, %v1949
      %1951 = vdwg.mxu0
      %v1952 = vadd.f32 %v1282, %v1845
      %v1953 = vadd.f32 %v1285, %v1848
      %v1954 = vadd.f32 %v1288, %v1851
      %v1955 = vadd.f32 %v1291, %v1854
      %v1956 = vadd.f32 %v1294, %v1857
      %v1957 = vadd.f32 %v1297, %v1860
      %v1958 = vadd.f32 %v1300, %v1863
      %v1959 = vadd.f32 %v1303, %v1866
      %v1960 = vadd.f32 %v1306, %v1869
      %v1961 = vadd.f32 %v1309, %v1872
      %v1962 = vadd.f32 %v1312, %v1875
      %v1963 = vadd.f32 %v1315, %v1878
      %v1964 = vadd.f32 %v1318, %v1881
      %v1965 = vadd.f32 %v1321, %v1884
      %v1966 = vadd.f32 %v1324, %v1887
      %v1967 = vadd.f32 %v1327, %v1890
      %v1968 = vadd.f32 %v1330, %v1893
      %v1969 = vadd.f32 %v1333, %v1896
      %v1970 = vadd.f32 %v1336, %v1899
      %v1971 = vadd.f32 %v1339, %v1902
      %v1972 = vadd.f32 %v1342, %v1905
      %v1973 = vadd.f32 %v1345, %v1908
      %v1974 = vadd.f32 %v1348, %v1911
      %v1975 = vadd.f32 %v1351, %v1914
      %v1976 = vadd.f32 %v1354, %v1917
      %v1977 = vadd.f32 %v1357, %v1920
      %v1978 = vadd.f32 %v1360, %v1923
      %v1979 = vadd.f32 %v1363, %v1926
      %v1980 = vadd.f32 %v1366, %v1929
      %v1981 = vadd.f32 %v1369, %v1932
      %v1982 = vadd.f32 %v1372, %v1935
      %v1983 = vadd.f32 %v1375, %v1938
      %v1984 = vadd.f32 %v1378, %v1941
      %v1985 = vadd.f32 %v1381, %v1944
      %v1986 = vadd.f32 %v1384, %v1947
      %v1987 = vadd.f32 %v1387, %v1950
      %v1989 = vrot.slane %v478, 7
      %v1990 = vsel %vm807, %v879, %v1989
      %v1991 = vrot.slane %v479, 7
      %v1992 = vsel %vm807, %v1989, %v1991
      %v1995 = vsel %vm734, %v814, 0.0
      %v1996 = vsel %vm735, %v816, 0.0
      %v1997 = vsel %vm736, %v818, 0.0
      %v1998 = vsel %vm737, %v820, 0.0
      %v1999 = vsel %vm738, %v822, 0.0
      %v2000 = vsel %vm739, %v824, 0.0
      %v2001 = vsel %vm740, %v826, 0.0
      %v2002 = vsel %vm741, %v828, 0.0
      %v2003 = vsel %vm742, %v830, 0.0
      %v2004 = vsel %vm743, %v832, 0.0
      %v2005 = vsel %vm744, %v834, 0.0
      %v2006 = vsel %vm745, %v836, 0.0
      %v2007 = vsel %vm746, %v838, 0.0
      %v2008 = vsel %vm747, %v840, 0.0
      %v2009 = vsel %vm748, %v842, 0.0
      %v2010 = vsel %vm749, %v844, 0.0
      %v2011 = vsel %vm750, %v846, 0.0
      %v2012 = vsel %vm751, %v848, 0.0
      %v2013 = vsel %vm752, %v850, 0.0
      %v2014 = vsel %vm753, %v852, 0.0
      %v2015 = vsel %vm754, %v854, 0.0
      %v2016 = vsel %vm755, %v856, 0.0
      %v2017 = vsel %vm756, %v858, 0.0
      %v2018 = vsel %vm757, %v860, 0.0
      %v2019 = vsel %vm758, %v862, 0.0
      %v2020 = vsel %vm759, %v864, 0.0
      %v2021 = vsel %vm760, %v866, 0.0
      %v2022 = vsel %vm761, %v868, 0.0
      %v2023 = vsel %vm762, %v870, 0.0
      %v2024 = vsel %vm763, %v872, 0.0
      %v2025 = vsel %vm764, %v874, 0.0
      %v2026 = vsel %vm765, %v876, 0.0
      %v2027 = vsel %vm766, %v878, 0.0
      %v2028 = vsel %vm767, %v880, 0.0
      %v2029 = vsel %vm768, %v1990, 0.0
      %v2030 = vsel %vm769, %v1992, 0.0
      %s2031 = scalar_lea.vmem %s2, 48
      %v2032 = vld [vmem:[%s2031] sm:$0xff]
      %v2033 = vld [vmem:[%s2031 + $0x8] sm:$0xff]
      %v2035 = vsel %vm958, %v1995, 0
      %v2038 = vsel %vm958, %v1996, 0
      %v2041 = vsel %vm958, %v1997, 0
      %v2044 = vsel %vm958, %v1998, 0
      %v2047 = vsel %vm958, %v1999, 0
      %v2050 = vsel %vm958, %v2000, 0
      %v2053 = vsel %vm958, %v2001, 0
      %v2056 = vsel %vm958, %v2002, 0
      %v2059 = vsel %vm958, %v2003, 0
      %v2062 = vsel %vm958, %v2004, 0
      %v2065 = vsel %vm958, %v2005, 0
      %v2068 = vsel %vm958, %v2006, 0
      %v2071 = vsel %vm958, %v2007, 0
      %v2074 = vsel %vm958, %v2008, 0
      %v2077 = vsel %vm958, %v2009, 0
      %v2080 = vsel %vm958, %v2010, 0
      %v2083 = vsel %vm958, %v2011, 0
      %v2086 = vsel %vm958, %v2012, 0
      %v2089 = vsel %vm958, %v2013, 0
      %v2092 = vsel %vm958, %v2014, 0
      %v2095 = vsel %vm958, %v2015, 0
      %v2098 = vsel %vm958, %v2016, 0
      %v2101 = vsel %vm958, %v2017, 0
      %v2104 = vsel %vm958, %v2018, 0
      %v2107 = vsel %vm958, %v2019, 0
      %v2110 = vsel %vm958, %v2020, 0
      %v2113 = vsel %vm958, %v2021, 0
      %v2116 = vsel %vm958, %v2022, 0
      %v2119 = vsel %vm958, %v2023, 0
      %v2122 = vsel %vm958, %v2024, 0
      %v2125 = vsel %vm958, %v2025, 0
      %v2128 = vsel %vm958, %v2026, 0
      %v2131 = vsel %vm958, %v2027, 0
      %v2134 = vsel %vm958, %v2028, 0
      %v2137 = vsel %vm958, %v2029, 0
      %v2140 = vsel %vm958, %v2030, 0
      %2142 = vmatpush.msra.mxu0 0.0
      %2143 = vmatpush.msra.mxu0 0.0
      %2144 = vmatpush.msra.mxu0 0.0
      %2145 = vmatpush.msra.mxu0 0.0
      %2146 = vmatpush.msra.mxu0 0.0
      %2147 = vmatpush.msra.mxu0 0.0
      %2148 = vmatpush.msra.mxu0 0.0
      %2149 = vmatpush.msra.mxu0 0.0
      %2150 = vmatpush.msra.mxu0 0.0
      %2151 = vmatpush.msra.mxu0 0.0
      %2152 = vmatpush.msra.mxu0 0.0
      %2153 = vmatpush.msra.mxu0 0.0
      %2154 = vmatpush.msra.mxu0 0.0
      %2155 = vmatpush.msra.mxu0 0.0
      %2156 = vmatpush.msra.mxu0 %v2033
      %2157 = vmatpush.msra.mxu0 %v2032
      %2158 = vmatmul.f32.gmra.mxu0 %v2035
      %v2159 = vpop.f32.mrf.mxu0
      %v2160 = vadd.f32 0.0, %v2159
      %2161 = vmatmul.f32.gmra.mxu0 %v2038
      %v2162 = vpop.f32.mrf.mxu0
      %v2163 = vadd.f32 0.0, %v2162
      %2164 = vmatmul.f32.gmra.mxu0 %v2041
      %v2165 = vpop.f32.mrf.mxu0
      %v2166 = vadd.f32 0.0, %v2165
      %2167 = vmatmul.f32.gmra.mxu0 %v2044
      %v2168 = vpop.f32.mrf.mxu0
      %v2169 = vadd.f32 0.0, %v2168
      %2170 = vmatmul.f32.gmra.mxu0 %v2047
      %v2171 = vpop.f32.mrf.mxu0
      %v2172 = vadd.f32 0.0, %v2171
      %2173 = vmatmul.f32.gmra.mxu0 %v2050
      %v2174 = vpop.f32.mrf.mxu0
      %v2175 = vadd.f32 0.0, %v2174
      %2176 = vmatmul.f32.gmra.mxu0 %v2053
      %v2177 = vpop.f32.mrf.mxu0
      %v2178 = vadd.f32 0.0, %v2177
      %2179 = vmatmul.f32.gmra.mxu0 %v2056
      %v2180 = vpop.f32.mrf.mxu0
      %v2181 = vadd.f32 0.0, %v2180
      %2182 = vmatmul.f32.gmra.mxu0 %v2059
      %v2183 = vpop.f32.mrf.mxu0
      %v2184 = vadd.f32 0.0, %v2183
      %2185 = vmatmul.f32.gmra.mxu0 %v2062
      %v2186 = vpop.f32.mrf.mxu0
      %v2187 = vadd.f32 0.0, %v2186
      %2188 = vmatmul.f32.gmra.mxu0 %v2065
      %v2189 = vpop.f32.mrf.mxu0
      %v2190 = vadd.f32 0.0, %v2189
      %2191 = vmatmul.f32.gmra.mxu0 %v2068
      %v2192 = vpop.f32.mrf.mxu0
      %v2193 = vadd.f32 0.0, %v2192
      %2194 = vmatmul.f32.gmra.mxu0 %v2071
      %v2195 = vpop.f32.mrf.mxu0
      %v2196 = vadd.f32 0.0, %v2195
      %2197 = vmatmul.f32.gmra.mxu0 %v2074
      %v2198 = vpop.f32.mrf.mxu0
      %v2199 = vadd.f32 0.0, %v2198
      %2200 = vmatmul.f32.gmra.mxu0 %v2077
      %v2201 = vpop.f32.mrf.mxu0
      %v2202 = vadd.f32 0.0, %v2201
      %2203 = vmatmul.f32.gmra.mxu0 %v2080
      %v2204 = vpop.f32.mrf.mxu0
      %v2205 = vadd.f32 0.0, %v2204
      %2206 = vmatmul.f32.gmra.mxu0 %v2083
      %v2207 = vpop.f32.mrf.mxu0
      %v2208 = vadd.f32 0.0, %v2207
      %2209 = vmatmul.f32.gmra.mxu0 %v2086
      %v2210 = vpop.f32.mrf.mxu0
      %v2211 = vadd.f32 0.0, %v2210
      %2212 = vmatmul.f32.gmra.mxu0 %v2089
      %v2213 = vpop.f32.mrf.mxu0
      %v2214 = vadd.f32 0.0, %v2213
      %2215 = vmatmul.f32.gmra.mxu0 %v2092
      %v2216 = vpop.f32.mrf.mxu0
      %v2217 = vadd.f32 0.0, %v2216
      %2218 = vmatmul.f32.gmra.mxu0 %v2095
      %v2219 = vpop.f32.mrf.mxu0
      %v2220 = vadd.f32 0.0, %v2219
      %2221 = vmatmul.f32.gmra.mxu0 %v2098
      %v2222 = vpop.f32.mrf.mxu0
      %v2223 = vadd.f32 0.0, %v2222
      %2224 = vmatmul.f32.gmra.mxu0 %v2101
      %v2225 = vpop.f32.mrf.mxu0
      %v2226 = vadd.f32 0.0, %v2225
      %2227 = vmatmul.f32.gmra.mxu0 %v2104
      %v2228 = vpop.f32.mrf.mxu0
      %v2229 = vadd.f32 0.0, %v2228
      %2230 = vmatmul.f32.gmra.mxu0 %v2107
      %v2231 = vpop.f32.mrf.mxu0
      %v2232 = vadd.f32 0.0, %v2231
      %2233 = vmatmul.f32.gmra.mxu0 %v2110
      %v2234 = vpop.f32.mrf.mxu0
      %v2235 = vadd.f32 0.0, %v2234
      %2236 = vmatmul.f32.gmra.mxu0 %v2113
      %v2237 = vpop.f32.mrf.mxu0
      %v2238 = vadd.f32 0.0, %v2237
      %2239 = vmatmul.f32.gmra.mxu0 %v2116
      %v2240 = vpop.f32.mrf.mxu0
      %v2241 = vadd.f32 0.0, %v2240
      %2242 = vmatmul.f32.gmra.mxu0 %v2119
      %v2243 = vpop.f32.mrf.mxu0
      %v2244 = vadd.f32 0.0, %v2243
      %2245 = vmatmul.f32.gmra.mxu0 %v2122
      %v2246 = vpop.f32.mrf.mxu0
      %v2247 = vadd.f32 0.0, %v2246
      %2248 = vmatmul.f32.gmra.mxu0 %v2125
      %v2249 = vpop.f32.mrf.mxu0
      %v2250 = vadd.f32 0.0, %v2249
      %2251 = vmatmul.f32.gmra.mxu0 %v2128
      %v2252 = vpop.f32.mrf.mxu0
      %v2253 = vadd.f32 0.0, %v2252
      %2254 = vmatmul.f32.gmra.mxu0 %v2131
      %v2255 = vpop.f32.mrf.mxu0
      %v2256 = vadd.f32 0.0, %v2255
      %2257 = vmatmul.f32.gmra.mxu0 %v2134
      %v2258 = vpop.f32.mrf.mxu0
      %v2259 = vadd.f32 0.0, %v2258
      %2260 = vmatmul.f32.gmra.mxu0 %v2137
      %v2261 = vpop.f32.mrf.mxu0
      %v2262 = vadd.f32 0.0, %v2261
      %2263 = vmatmul.f32.gmra.mxu0 %v2140
      %v2264 = vpop.f32.mrf.mxu0
      %v2265 = vadd.f32 0.0, %v2264
      %2266 = vdwg.mxu0
      %v2267 = vadd.f32 %v1952, %v2160
      %v2268 = vadd.f32 %v1953, %v2163
      %v2269 = vadd.f32 %v1954, %v2166
      %v2270 = vadd.f32 %v1955, %v2169
      %v2271 = vadd.f32 %v1956, %v2172
      %v2272 = vadd.f32 %v1957, %v2175
      %v2273 = vadd.f32 %v1958, %v2178
      %v2274 = vadd.f32 %v1959, %v2181
      %v2275 = vadd.f32 %v1960, %v2184
      %v2276 = vadd.f32 %v1961, %v2187
      %v2277 = vadd.f32 %v1962, %v2190
      %v2278 = vadd.f32 %v1963, %v2193
      %v2279 = vadd.f32 %v1964, %v2196
      %v2280 = vadd.f32 %v1965, %v2199
      %v2281 = vadd.f32 %v1966, %v2202
      %v2282 = vadd.f32 %v1967, %v2205
      %v2283 = vadd.f32 %v1968, %v2208
      %v2284 = vadd.f32 %v1969, %v2211
      %v2285 = vadd.f32 %v1970, %v2214
      %v2286 = vadd.f32 %v1971, %v2217
      %v2287 = vadd.f32 %v1972, %v2220
      %v2288 = vadd.f32 %v1973, %v2223
      %v2289 = vadd.f32 %v1974, %v2226
      %v2290 = vadd.f32 %v1975, %v2229
      %v2291 = vadd.f32 %v1976, %v2232
      %v2292 = vadd.f32 %v1977, %v2235
      %v2293 = vadd.f32 %v1978, %v2238
      %v2294 = vadd.f32 %v1979, %v2241
      %v2295 = vadd.f32 %v1980, %v2244
      %v2296 = vadd.f32 %v1981, %v2247
      %v2297 = vadd.f32 %v1982, %v2250
      %v2298 = vadd.f32 %v1983, %v2253
      %v2299 = vadd.f32 %v1984, %v2256
      %v2300 = vadd.f32 %v1985, %v2259
      %v2301 = vadd.f32 %v1986, %v2262
      %v2302 = vadd.f32 %v1987, %v2265
      %s2303 = scalar_lea.vmem %s2, 64
      %v2304 = vld [vmem:[%s2303] sm:$0xff]
      %v2305 = vld [vmem:[%s2303 + $0x8] sm:$0xff]
      %v2306 = vsel %vm958, %v478, 0
      %v2308 = vsel %vm958, %v479, 0
      %2310 = vmatpush.msra.mxu0 0.0
      %2311 = vmatpush.msra.mxu0 0.0
      %2312 = vmatpush.msra.mxu0 0.0
      %2313 = vmatpush.msra.mxu0 0.0
      %2314 = vmatpush.msra.mxu0 0.0
      %2315 = vmatpush.msra.mxu0 0.0
      %2316 = vmatpush.msra.mxu0 0.0
      %2317 = vmatpush.msra.mxu0 0.0
      %2318 = vmatpush.msra.mxu0 0.0
      %2319 = vmatpush.msra.mxu0 0.0
      %2320 = vmatpush.msra.mxu0 0.0
      %2321 = vmatpush.msra.mxu0 0.0
      %2322 = vmatpush.msra.mxu0 0.0
      %2323 = vmatpush.msra.mxu0 0.0
      %2324 = vmatpush.msra.mxu0 %v2305
      %2325 = vmatpush.msra.mxu0 %v2304
      %2326 = vmatmul.f32.gmra.mxu0 %v963
      %v2327 = vpop.f32.mrf.mxu0
      %v2328 = vadd.f32 0.0, %v2327
      %2329 = vmatmul.f32.gmra.mxu0 %v965
      %v2330 = vpop.f32.mrf.mxu0
      %v2331 = vadd.f32 0.0, %v2330
      %2332 = vmatmul.f32.gmra.mxu0 %v967
      %v2333 = vpop.f32.mrf.mxu0
      %v2334 = vadd.f32 0.0, %v2333
      %2335 = vmatmul.f32.gmra.mxu0 %v969
      %v2336 = vpop.f32.mrf.mxu0
      %v2337 = vadd.f32 0.0, %v2336
      %2338 = vmatmul.f32.gmra.mxu0 %v971
      %v2339 = vpop.f32.mrf.mxu0
      %v2340 = vadd.f32 0.0, %v2339
      %2341 = vmatmul.f32.gmra.mxu0 %v973
      %v2342 = vpop.f32.mrf.mxu0
      %v2343 = vadd.f32 0.0, %v2342
      %2344 = vmatmul.f32.gmra.mxu0 %v975
      %v2345 = vpop.f32.mrf.mxu0
      %v2346 = vadd.f32 0.0, %v2345
      %2347 = vmatmul.f32.gmra.mxu0 %v977
      %v2348 = vpop.f32.mrf.mxu0
      %v2349 = vadd.f32 0.0, %v2348
      %2350 = vmatmul.f32.gmra.mxu0 %v979
      %v2351 = vpop.f32.mrf.mxu0
      %v2352 = vadd.f32 0.0, %v2351
      %2353 = vmatmul.f32.gmra.mxu0 %v981
      %v2354 = vpop.f32.mrf.mxu0
      %v2355 = vadd.f32 0.0, %v2354
      %2356 = vmatmul.f32.gmra.mxu0 %v983
      %v2357 = vpop.f32.mrf.mxu0
      %v2358 = vadd.f32 0.0, %v2357
      %2359 = vmatmul.f32.gmra.mxu0 %v985
      %v2360 = vpop.f32.mrf.mxu0
      %v2361 = vadd.f32 0.0, %v2360
      %2362 = vmatmul.f32.gmra.mxu0 %v987
      %v2363 = vpop.f32.mrf.mxu0
      %v2364 = vadd.f32 0.0, %v2363
      %2365 = vmatmul.f32.gmra.mxu0 %v989
      %v2366 = vpop.f32.mrf.mxu0
      %v2367 = vadd.f32 0.0, %v2366
      %2368 = vmatmul.f32.gmra.mxu0 %v991
      %v2369 = vpop.f32.mrf.mxu0
      %v2370 = vadd.f32 0.0, %v2369
      %2371 = vmatmul.f32.gmra.mxu0 %v993
      %v2372 = vpop.f32.mrf.mxu0
      %v2373 = vadd.f32 0.0, %v2372
      %2374 = vmatmul.f32.gmra.mxu0 %v995
      %v2375 = vpop.f32.mrf.mxu0
      %v2376 = vadd.f32 0.0, %v2375
      %2377 = vmatmul.f32.gmra.mxu0 %v997
      %v2378 = vpop.f32.mrf.mxu0
      %v2379 = vadd.f32 0.0, %v2378
      %2380 = vmatmul.f32.gmra.mxu0 %v999
      %v2381 = vpop.f32.mrf.mxu0
      %v2382 = vadd.f32 0.0, %v2381
      %2383 = vmatmul.f32.gmra.mxu0 %v1001
      %v2384 = vpop.f32.mrf.mxu0
      %v2385 = vadd.f32 0.0, %v2384
      %2386 = vmatmul.f32.gmra.mxu0 %v1003
      %v2387 = vpop.f32.mrf.mxu0
      %v2388 = vadd.f32 0.0, %v2387
      %2389 = vmatmul.f32.gmra.mxu0 %v1005
      %v2390 = vpop.f32.mrf.mxu0
      %v2391 = vadd.f32 0.0, %v2390
      %2392 = vmatmul.f32.gmra.mxu0 %v1007
      %v2393 = vpop.f32.mrf.mxu0
      %v2394 = vadd.f32 0.0, %v2393
      %2395 = vmatmul.f32.gmra.mxu0 %v1009
      %v2396 = vpop.f32.mrf.mxu0
      %v2397 = vadd.f32 0.0, %v2396
      %2398 = vmatmul.f32.gmra.mxu0 %v1011
      %v2399 = vpop.f32.mrf.mxu0
      %v2400 = vadd.f32 0.0, %v2399
      %2401 = vmatmul.f32.gmra.mxu0 %v1013
      %v2402 = vpop.f32.mrf.mxu0
      %v2403 = vadd.f32 0.0, %v2402
      %2404 = vmatmul.f32.gmra.mxu0 %v1015
      %v2405 = vpop.f32.mrf.mxu0
      %v2406 = vadd.f32 0.0, %v2405
      %2407 = vmatmul.f32.gmra.mxu0 %v1017
      %v2408 = vpop.f32.mrf.mxu0
      %v2409 = vadd.f32 0.0, %v2408
      %2410 = vmatmul.f32.gmra.mxu0 %v1019
      %v2411 = vpop.f32.mrf.mxu0
      %v2412 = vadd.f32 0.0, %v2411
      %2413 = vmatmul.f32.gmra.mxu0 %v1021
      %v2414 = vpop.f32.mrf.mxu0
      %v2415 = vadd.f32 0.0, %v2414
      %2416 = vmatmul.f32.gmra.mxu0 %v1023
      %v2417 = vpop.f32.mrf.mxu0
      %v2418 = vadd.f32 0.0, %v2417
      %2419 = vmatmul.f32.gmra.mxu0 %v1025
      %v2420 = vpop.f32.mrf.mxu0
      %v2421 = vadd.f32 0.0, %v2420
      %2422 = vmatmul.f32.gmra.mxu0 %v1027
      %v2423 = vpop.f32.mrf.mxu0
      %v2424 = vadd.f32 0.0, %v2423
      %2425 = vmatmul.f32.gmra.mxu0 %v1029
      %v2426 = vpop.f32.mrf.mxu0
      %v2427 = vadd.f32 0.0, %v2426
      %2428 = vmatmul.f32.gmra.mxu0 %v2306
      %v2429 = vpop.f32.mrf.mxu0
      %v2430 = vadd.f32 0.0, %v2429
      %2431 = vmatmul.f32.gmra.mxu0 %v2308
      %v2432 = vpop.f32.mrf.mxu0
      %v2433 = vadd.f32 0.0, %v2432
      %2434 = vdwg.mxu0
      %v2435 = vadd.f32 %v2267, %v2328
      %v2436 = vadd.f32 %v2268, %v2331
      %v2437 = vadd.f32 %v2269, %v2334
      %v2438 = vadd.f32 %v2270, %v2337
      %v2439 = vadd.f32 %v2271, %v2340
      %v2440 = vadd.f32 %v2272, %v2343
      %v2441 = vadd.f32 %v2273, %v2346
      %v2442 = vadd.f32 %v2274, %v2349
      %v2443 = vadd.f32 %v2275, %v2352
      %v2444 = vadd.f32 %v2276, %v2355
      %v2445 = vadd.f32 %v2277, %v2358
      %v2446 = vadd.f32 %v2278, %v2361
      %v2447 = vadd.f32 %v2279, %v2364
      %v2448 = vadd.f32 %v2280, %v2367
      %v2449 = vadd.f32 %v2281, %v2370
      %v2450 = vadd.f32 %v2282, %v2373
      %v2451 = vadd.f32 %v2283, %v2376
      %v2452 = vadd.f32 %v2284, %v2379
      %v2453 = vadd.f32 %v2285, %v2382
      %v2454 = vadd.f32 %v2286, %v2385
      %v2455 = vadd.f32 %v2287, %v2388
      %v2456 = vadd.f32 %v2288, %v2391
      %v2457 = vadd.f32 %v2289, %v2394
      %v2458 = vadd.f32 %v2290, %v2397
      %v2459 = vadd.f32 %v2291, %v2400
      %v2460 = vadd.f32 %v2292, %v2403
      %v2461 = vadd.f32 %v2293, %v2406
      %v2462 = vadd.f32 %v2294, %v2409
      %v2463 = vadd.f32 %v2295, %v2412
      %v2464 = vadd.f32 %v2296, %v2415
      %v2465 = vadd.f32 %v2297, %v2418
      %v2466 = vadd.f32 %v2298, %v2421
      %v2467 = vadd.f32 %v2299, %v2424
      %v2468 = vadd.f32 %v2300, %v2427
      %v2469 = vadd.f32 %v2301, %v2430
      %v2470 = vadd.f32 %v2302, %v2433
      %v2472 = vrot.slane %v479, 1
      %v2473 = vsel %vm1570, %v1642, %v2472
      %v2474 = vrot.slane %v480, 1
      %v2475 = vsel %vm1570, %v2472, %v2474
      %v2478 = vsel %vm1533, %v1577, 0.0
      %v2479 = vsel %vm1534, %v1579, 0.0
      %v2480 = vsel %vm1535, %v1581, 0.0
      %v2481 = vsel %vm1536, %v1583, 0.0
      %v2482 = vsel %vm1537, %v1585, 0.0
      %v2483 = vsel %vm1538, %v1587, 0.0
      %v2484 = vsel %vm1539, %v1589, 0.0
      %v2485 = vsel %vm1540, %v1591, 0.0
      %v2486 = vsel %vm1541, %v1593, 0.0
      %v2487 = vsel %vm1542, %v1595, 0.0
      %v2488 = vsel %vm1543, %v1597, 0.0
      %v2489 = vsel %vm1544, %v1599, 0.0
      %v2490 = vsel %vm1545, %v1601, 0.0
      %v2491 = vsel %vm1546, %v1603, 0.0
      %v2492 = vsel %vm1547, %v1605, 0.0
      %v2493 = vsel %vm1548, %v1607, 0.0
      %v2494 = vsel %vm1549, %v1609, 0.0
      %v2495 = vsel %vm1550, %v1611, 0.0
      %v2496 = vsel %vm1551, %v1613, 0.0
      %v2497 = vsel %vm1552, %v1615, 0.0
      %v2498 = vsel %vm1553, %v1617, 0.0
      %v2499 = vsel %vm1554, %v1619, 0.0
      %v2500 = vsel %vm1555, %v1621, 0.0
      %v2501 = vsel %vm1556, %v1623, 0.0
      %v2502 = vsel %vm1557, %v1625, 0.0
      %v2503 = vsel %vm1558, %v1627, 0.0
      %v2504 = vsel %vm1559, %v1629, 0.0
      %v2505 = vsel %vm1560, %v1631, 0.0
      %v2506 = vsel %vm1561, %v1633, 0.0
      %v2507 = vsel %vm1562, %v1635, 0.0
      %v2508 = vsel %vm1563, %v1637, 0.0
      %v2509 = vsel %vm1564, %v1639, 0.0
      %v2510 = vsel %vm1565, %v1641, 0.0
      %v2511 = vsel %vm1566, %v1643, 0.0
      %v2512 = vsel %vm1567, %v2473, 0.0
      %v2513 = vsel %vm1568, %v2475, 0.0
      %s2514 = scalar_lea.vmem %s2, 80
      %v2515 = vld [vmem:[%s2514] sm:$0xff]
      %v2516 = vld [vmem:[%s2514 + $0x8] sm:$0xff]
      %v2518 = vsel %vm958, %v2478, 0
      %v2521 = vsel %vm958, %v2479, 0
      %v2524 = vsel %vm958, %v2480, 0
      %v2527 = vsel %vm958, %v2481, 0
      %v2530 = vsel %vm958, %v2482, 0
      %v2533 = vsel %vm958, %v2483, 0
      %v2536 = vsel %vm958, %v2484, 0
      %v2539 = vsel %vm958, %v2485, 0
      %v2542 = vsel %vm958, %v2486, 0
      %v2545 = vsel %vm958, %v2487, 0
      %v2548 = vsel %vm958, %v2488, 0
      %v2551 = vsel %vm958, %v2489, 0
      %v2554 = vsel %vm958, %v2490, 0
      %v2557 = vsel %vm958, %v2491, 0
      %v2560 = vsel %vm958, %v2492, 0
      %v2563 = vsel %vm958, %v2493, 0
      %v2566 = vsel %vm958, %v2494, 0
      %v2569 = vsel %vm958, %v2495, 0
      %v2572 = vsel %vm958, %v2496, 0
      %v2575 = vsel %vm958, %v2497, 0
      %v2578 = vsel %vm958, %v2498, 0
      %v2581 = vsel %vm958, %v2499, 0
      %v2584 = vsel %vm958, %v2500, 0
      %v2587 = vsel %vm958, %v2501, 0
      %v2590 = vsel %vm958, %v2502, 0
      %v2593 = vsel %vm958, %v2503, 0
      %v2596 = vsel %vm958, %v2504, 0
      %v2599 = vsel %vm958, %v2505, 0
      %v2602 = vsel %vm958, %v2506, 0
      %v2605 = vsel %vm958, %v2507, 0
      %v2608 = vsel %vm958, %v2508, 0
      %v2611 = vsel %vm958, %v2509, 0
      %v2614 = vsel %vm958, %v2510, 0
      %v2617 = vsel %vm958, %v2511, 0
      %v2620 = vsel %vm958, %v2512, 0
      %v2623 = vsel %vm958, %v2513, 0
      %2625 = vmatpush.msra.mxu0 0.0
      %2626 = vmatpush.msra.mxu0 0.0
      %2627 = vmatpush.msra.mxu0 0.0
      %2628 = vmatpush.msra.mxu0 0.0
      %2629 = vmatpush.msra.mxu0 0.0
      %2630 = vmatpush.msra.mxu0 0.0
      %2631 = vmatpush.msra.mxu0 0.0
      %2632 = vmatpush.msra.mxu0 0.0
      %2633 = vmatpush.msra.mxu0 0.0
      %2634 = vmatpush.msra.mxu0 0.0
      %2635 = vmatpush.msra.mxu0 0.0
      %2636 = vmatpush.msra.mxu0 0.0
      %2637 = vmatpush.msra.mxu0 0.0
      %2638 = vmatpush.msra.mxu0 0.0
      %2639 = vmatpush.msra.mxu0 %v2516
      %2640 = vmatpush.msra.mxu0 %v2515
      %2641 = vmatmul.f32.gmra.mxu0 %v2518
      %v2642 = vpop.f32.mrf.mxu0
      %v2643 = vadd.f32 0.0, %v2642
      %2644 = vmatmul.f32.gmra.mxu0 %v2521
      %v2645 = vpop.f32.mrf.mxu0
      %v2646 = vadd.f32 0.0, %v2645
      %2647 = vmatmul.f32.gmra.mxu0 %v2524
      %v2648 = vpop.f32.mrf.mxu0
      %v2649 = vadd.f32 0.0, %v2648
      %2650 = vmatmul.f32.gmra.mxu0 %v2527
      %v2651 = vpop.f32.mrf.mxu0
      %v2652 = vadd.f32 0.0, %v2651
      %2653 = vmatmul.f32.gmra.mxu0 %v2530
      %v2654 = vpop.f32.mrf.mxu0
      %v2655 = vadd.f32 0.0, %v2654
      %2656 = vmatmul.f32.gmra.mxu0 %v2533
      %v2657 = vpop.f32.mrf.mxu0
      %v2658 = vadd.f32 0.0, %v2657
      %2659 = vmatmul.f32.gmra.mxu0 %v2536
      %v2660 = vpop.f32.mrf.mxu0
      %v2661 = vadd.f32 0.0, %v2660
      %2662 = vmatmul.f32.gmra.mxu0 %v2539
      %v2663 = vpop.f32.mrf.mxu0
      %v2664 = vadd.f32 0.0, %v2663
      %2665 = vmatmul.f32.gmra.mxu0 %v2542
      %v2666 = vpop.f32.mrf.mxu0
      %v2667 = vadd.f32 0.0, %v2666
      %2668 = vmatmul.f32.gmra.mxu0 %v2545
      %v2669 = vpop.f32.mrf.mxu0
      %v2670 = vadd.f32 0.0, %v2669
      %2671 = vmatmul.f32.gmra.mxu0 %v2548
      %v2672 = vpop.f32.mrf.mxu0
      %v2673 = vadd.f32 0.0, %v2672
      %2674 = vmatmul.f32.gmra.mxu0 %v2551
      %v2675 = vpop.f32.mrf.mxu0
      %v2676 = vadd.f32 0.0, %v2675
      %2677 = vmatmul.f32.gmra.mxu0 %v2554
      %v2678 = vpop.f32.mrf.mxu0
      %v2679 = vadd.f32 0.0, %v2678
      %2680 = vmatmul.f32.gmra.mxu0 %v2557
      %v2681 = vpop.f32.mrf.mxu0
      %v2682 = vadd.f32 0.0, %v2681
      %2683 = vmatmul.f32.gmra.mxu0 %v2560
      %v2684 = vpop.f32.mrf.mxu0
      %v2685 = vadd.f32 0.0, %v2684
      %2686 = vmatmul.f32.gmra.mxu0 %v2563
      %v2687 = vpop.f32.mrf.mxu0
      %v2688 = vadd.f32 0.0, %v2687
      %2689 = vmatmul.f32.gmra.mxu0 %v2566
      %v2690 = vpop.f32.mrf.mxu0
      %v2691 = vadd.f32 0.0, %v2690
      %2692 = vmatmul.f32.gmra.mxu0 %v2569
      %v2693 = vpop.f32.mrf.mxu0
      %v2694 = vadd.f32 0.0, %v2693
      %2695 = vmatmul.f32.gmra.mxu0 %v2572
      %v2696 = vpop.f32.mrf.mxu0
      %v2697 = vadd.f32 0.0, %v2696
      %2698 = vmatmul.f32.gmra.mxu0 %v2575
      %v2699 = vpop.f32.mrf.mxu0
      %v2700 = vadd.f32 0.0, %v2699
      %2701 = vmatmul.f32.gmra.mxu0 %v2578
      %v2702 = vpop.f32.mrf.mxu0
      %v2703 = vadd.f32 0.0, %v2702
      %2704 = vmatmul.f32.gmra.mxu0 %v2581
      %v2705 = vpop.f32.mrf.mxu0
      %v2706 = vadd.f32 0.0, %v2705
      %2707 = vmatmul.f32.gmra.mxu0 %v2584
      %v2708 = vpop.f32.mrf.mxu0
      %v2709 = vadd.f32 0.0, %v2708
      %2710 = vmatmul.f32.gmra.mxu0 %v2587
      %v2711 = vpop.f32.mrf.mxu0
      %v2712 = vadd.f32 0.0, %v2711
      %2713 = vmatmul.f32.gmra.mxu0 %v2590
      %v2714 = vpop.f32.mrf.mxu0
      %v2715 = vadd.f32 0.0, %v2714
      %2716 = vmatmul.f32.gmra.mxu0 %v2593
      %v2717 = vpop.f32.mrf.mxu0
      %v2718 = vadd.f32 0.0, %v2717
      %2719 = vmatmul.f32.gmra.mxu0 %v2596
      %v2720 = vpop.f32.mrf.mxu0
      %v2721 = vadd.f32 0.0, %v2720
      %2722 = vmatmul.f32.gmra.mxu0 %v2599
      %v2723 = vpop.f32.mrf.mxu0
      %v2724 = vadd.f32 0.0, %v2723
      %2725 = vmatmul.f32.gmra.mxu0 %v2602
      %v2726 = vpop.f32.mrf.mxu0
      %v2727 = vadd.f32 0.0, %v2726
      %2728 = vmatmul.f32.gmra.mxu0 %v2605
      %v2729 = vpop.f32.mrf.mxu0
      %v2730 = vadd.f32 0.0, %v2729
      %2731 = vmatmul.f32.gmra.mxu0 %v2608
      %v2732 = vpop.f32.mrf.mxu0
      %v2733 = vadd.f32 0.0, %v2732
      %2734 = vmatmul.f32.gmra.mxu0 %v2611
      %v2735 = vpop.f32.mrf.mxu0
      %v2736 = vadd.f32 0.0, %v2735
      %2737 = vmatmul.f32.gmra.mxu0 %v2614
      %v2738 = vpop.f32.mrf.mxu0
      %v2739 = vadd.f32 0.0, %v2738
      %2740 = vmatmul.f32.gmra.mxu0 %v2617
      %v2741 = vpop.f32.mrf.mxu0
      %v2742 = vadd.f32 0.0, %v2741
      %2743 = vmatmul.f32.gmra.mxu0 %v2620
      %v2744 = vpop.f32.mrf.mxu0
      %v2745 = vadd.f32 0.0, %v2744
      %2746 = vmatmul.f32.gmra.mxu0 %v2623
      %v2747 = vpop.f32.mrf.mxu0
      %v2748 = vadd.f32 0.0, %v2747
      %2749 = vdwg.mxu0
      %v2750 = vadd.f32 %v2435, %v2643
      %v2751 = vadd.f32 %v2436, %v2646
      %v2752 = vadd.f32 %v2437, %v2649
      %v2753 = vadd.f32 %v2438, %v2652
      %v2754 = vadd.f32 %v2439, %v2655
      %v2755 = vadd.f32 %v2440, %v2658
      %v2756 = vadd.f32 %v2441, %v2661
      %v2757 = vadd.f32 %v2442, %v2664
      %v2758 = vadd.f32 %v2443, %v2667
      %v2759 = vadd.f32 %v2444, %v2670
      %v2760 = vadd.f32 %v2445, %v2673
      %v2761 = vadd.f32 %v2446, %v2676
      %v2762 = vadd.f32 %v2447, %v2679
      %v2763 = vadd.f32 %v2448, %v2682
      %v2764 = vadd.f32 %v2449, %v2685
      %v2765 = vadd.f32 %v2450, %v2688
      %v2766 = vadd.f32 %v2451, %v2691
      %v2767 = vadd.f32 %v2452, %v2694
      %v2768 = vadd.f32 %v2453, %v2697
      %v2769 = vadd.f32 %v2454, %v2700
      %v2770 = vadd.f32 %v2455, %v2703
      %v2771 = vadd.f32 %v2456, %v2706
      %v2772 = vadd.f32 %v2457, %v2709
      %v2773 = vadd.f32 %v2458, %v2712
      %v2774 = vadd.f32 %v2459, %v2715
      %v2775 = vadd.f32 %v2460, %v2718
      %v2776 = vadd.f32 %v2461, %v2721
      %v2777 = vadd.f32 %v2462, %v2724
      %v2778 = vadd.f32 %v2463, %v2727
      %v2779 = vadd.f32 %v2464, %v2730
      %v2780 = vadd.f32 %v2465, %v2733
      %v2781 = vadd.f32 %v2466, %v2736
      %v2782 = vadd.f32 %v2467, %v2739
      %v2783 = vadd.f32 %v2468, %v2742
      %v2784 = vadd.f32 %v2469, %v2745
      %v2785 = vadd.f32 %v2470, %v2748
      %v2787 = vrot.slane %v480, 7
      %v2788 = vsel %vm807, %v1991, %v2787
      %v2789 = vrot.slane %v481, 7
      %v2790 = vsel %vm807, %v2787, %v2789
      %v2793 = vsel %vm734, %v818, 0.0
      %v2794 = vsel %vm735, %v820, 0.0
      %v2795 = vsel %vm736, %v822, 0.0
      %v2796 = vsel %vm737, %v824, 0.0
      %v2797 = vsel %vm738, %v826, 0.0
      %v2798 = vsel %vm739, %v828, 0.0
      %v2799 = vsel %vm740, %v830, 0.0
      %v2800 = vsel %vm741, %v832, 0.0
      %v2801 = vsel %vm742, %v834, 0.0
      %v2802 = vsel %vm743, %v836, 0.0
      %v2803 = vsel %vm744, %v838, 0.0
      %v2804 = vsel %vm745, %v840, 0.0
      %v2805 = vsel %vm746, %v842, 0.0
      %v2806 = vsel %vm747, %v844, 0.0
      %v2807 = vsel %vm748, %v846, 0.0
      %v2808 = vsel %vm749, %v848, 0.0
      %v2809 = vsel %vm750, %v850, 0.0
      %v2810 = vsel %vm751, %v852, 0.0
      %v2811 = vsel %vm752, %v854, 0.0
      %v2812 = vsel %vm753, %v856, 0.0
      %v2813 = vsel %vm754, %v858, 0.0
      %v2814 = vsel %vm755, %v860, 0.0
      %v2815 = vsel %vm756, %v862, 0.0
      %v2816 = vsel %vm757, %v864, 0.0
      %v2817 = vsel %vm758, %v866, 0.0
      %v2818 = vsel %vm759, %v868, 0.0
      %v2819 = vsel %vm760, %v870, 0.0
      %v2820 = vsel %vm761, %v872, 0.0
      %v2821 = vsel %vm762, %v874, 0.0
      %v2822 = vsel %vm763, %v876, 0.0
      %v2823 = vsel %vm764, %v878, 0.0
      %v2824 = vsel %vm765, %v880, 0.0
      %v2825 = vsel %vm766, %v1990, 0.0
      %v2826 = vsel %vm767, %v1992, 0.0
      %v2827 = vsel %vm768, %v2788, 0.0
      %v2828 = vsel %vm769, %v2790, 0.0
      %s2829 = scalar_lea.vmem %s2, 96
      %v2830 = vld [vmem:[%s2829] sm:$0xff]
      %v2831 = vld [vmem:[%s2829 + $0x8] sm:$0xff]
      %v2833 = vsel %vm958, %v2793, 0
      %v2836 = vsel %vm958, %v2794, 0
      %v2839 = vsel %vm958, %v2795, 0
      %v2842 = vsel %vm958, %v2796, 0
      %v2845 = vsel %vm958, %v2797, 0
      %v2848 = vsel %vm958, %v2798, 0
      %v2851 = vsel %vm958, %v2799, 0
      %v2854 = vsel %vm958, %v2800, 0
      %v2857 = vsel %vm958, %v2801, 0
      %v2860 = vsel %vm958, %v2802, 0
      %v2863 = vsel %vm958, %v2803, 0
      %v2866 = vsel %vm958, %v2804, 0
      %v2869 = vsel %vm958, %v2805, 0
      %v2872 = vsel %vm958, %v2806, 0
      %v2875 = vsel %vm958, %v2807, 0
      %v2878 = vsel %vm958, %v2808, 0
      %v2881 = vsel %vm958, %v2809, 0
      %v2884 = vsel %vm958, %v2810, 0
      %v2887 = vsel %vm958, %v2811, 0
      %v2890 = vsel %vm958, %v2812, 0
      %v2893 = vsel %vm958, %v2813, 0
      %v2896 = vsel %vm958, %v2814, 0
      %v2899 = vsel %vm958, %v2815, 0
      %v2902 = vsel %vm958, %v2816, 0
      %v2905 = vsel %vm958, %v2817, 0
      %v2908 = vsel %vm958, %v2818, 0
      %v2911 = vsel %vm958, %v2819, 0
      %v2914 = vsel %vm958, %v2820, 0
      %v2917 = vsel %vm958, %v2821, 0
      %v2920 = vsel %vm958, %v2822, 0
      %v2923 = vsel %vm958, %v2823, 0
      %v2926 = vsel %vm958, %v2824, 0
      %v2929 = vsel %vm958, %v2825, 0
      %v2932 = vsel %vm958, %v2826, 0
      %v2935 = vsel %vm958, %v2827, 0
      %v2938 = vsel %vm958, %v2828, 0
      %2940 = vmatpush.msra.mxu0 0.0
      %2941 = vmatpush.msra.mxu0 0.0
      %2942 = vmatpush.msra.mxu0 0.0
      %2943 = vmatpush.msra.mxu0 0.0
      %2944 = vmatpush.msra.mxu0 0.0
      %2945 = vmatpush.msra.mxu0 0.0
      %2946 = vmatpush.msra.mxu0 0.0
      %2947 = vmatpush.msra.mxu0 0.0
      %2948 = vmatpush.msra.mxu0 0.0
      %2949 = vmatpush.msra.mxu0 0.0
      %2950 = vmatpush.msra.mxu0 0.0
      %2951 = vmatpush.msra.mxu0 0.0
      %2952 = vmatpush.msra.mxu0 0.0
      %2953 = vmatpush.msra.mxu0 0.0
      %2954 = vmatpush.msra.mxu0 %v2831
      %2955 = vmatpush.msra.mxu0 %v2830
      %2956 = vmatmul.f32.gmra.mxu0 %v2833
      %v2957 = vpop.f32.mrf.mxu0
      %v2958 = vadd.f32 0.0, %v2957
      %2959 = vmatmul.f32.gmra.mxu0 %v2836
      %v2960 = vpop.f32.mrf.mxu0
      %v2961 = vadd.f32 0.0, %v2960
      %2962 = vmatmul.f32.gmra.mxu0 %v2839
      %v2963 = vpop.f32.mrf.mxu0
      %v2964 = vadd.f32 0.0, %v2963
      %2965 = vmatmul.f32.gmra.mxu0 %v2842
      %v2966 = vpop.f32.mrf.mxu0
      %v2967 = vadd.f32 0.0, %v2966
      %2968 = vmatmul.f32.gmra.mxu0 %v2845
      %v2969 = vpop.f32.mrf.mxu0
      %v2970 = vadd.f32 0.0, %v2969
      %2971 = vmatmul.f32.gmra.mxu0 %v2848
      %v2972 = vpop.f32.mrf.mxu0
      %v2973 = vadd.f32 0.0, %v2972
      %2974 = vmatmul.f32.gmra.mxu0 %v2851
      %v2975 = vpop.f32.mrf.mxu0
      %v2976 = vadd.f32 0.0, %v2975
      %2977 = vmatmul.f32.gmra.mxu0 %v2854
      %v2978 = vpop.f32.mrf.mxu0
      %v2979 = vadd.f32 0.0, %v2978
      %2980 = vmatmul.f32.gmra.mxu0 %v2857
      %v2981 = vpop.f32.mrf.mxu0
      %v2982 = vadd.f32 0.0, %v2981
      %2983 = vmatmul.f32.gmra.mxu0 %v2860
      %v2984 = vpop.f32.mrf.mxu0
      %v2985 = vadd.f32 0.0, %v2984
      %2986 = vmatmul.f32.gmra.mxu0 %v2863
      %v2987 = vpop.f32.mrf.mxu0
      %v2988 = vadd.f32 0.0, %v2987
      %2989 = vmatmul.f32.gmra.mxu0 %v2866
      %v2990 = vpop.f32.mrf.mxu0
      %v2991 = vadd.f32 0.0, %v2990
      %2992 = vmatmul.f32.gmra.mxu0 %v2869
      %v2993 = vpop.f32.mrf.mxu0
      %v2994 = vadd.f32 0.0, %v2993
      %2995 = vmatmul.f32.gmra.mxu0 %v2872
      %v2996 = vpop.f32.mrf.mxu0
      %v2997 = vadd.f32 0.0, %v2996
      %2998 = vmatmul.f32.gmra.mxu0 %v2875
      %v2999 = vpop.f32.mrf.mxu0
      %v3000 = vadd.f32 0.0, %v2999
      %3001 = vmatmul.f32.gmra.mxu0 %v2878
      %v3002 = vpop.f32.mrf.mxu0
      %v3003 = vadd.f32 0.0, %v3002
      %3004 = vmatmul.f32.gmra.mxu0 %v2881
      %v3005 = vpop.f32.mrf.mxu0
      %v3006 = vadd.f32 0.0, %v3005
      %3007 = vmatmul.f32.gmra.mxu0 %v2884
      %v3008 = vpop.f32.mrf.mxu0
      %v3009 = vadd.f32 0.0, %v3008
      %3010 = vmatmul.f32.gmra.mxu0 %v2887
      %v3011 = vpop.f32.mrf.mxu0
      %v3012 = vadd.f32 0.0, %v3011
      %3013 = vmatmul.f32.gmra.mxu0 %v2890
      %v3014 = vpop.f32.mrf.mxu0
      %v3015 = vadd.f32 0.0, %v3014
      %3016 = vmatmul.f32.gmra.mxu0 %v2893
      %v3017 = vpop.f32.mrf.mxu0
      %v3018 = vadd.f32 0.0, %v3017
      %3019 = vmatmul.f32.gmra.mxu0 %v2896
      %v3020 = vpop.f32.mrf.mxu0
      %v3021 = vadd.f32 0.0, %v3020
      %3022 = vmatmul.f32.gmra.mxu0 %v2899
      %v3023 = vpop.f32.mrf.mxu0
      %v3024 = vadd.f32 0.0, %v3023
      %3025 = vmatmul.f32.gmra.mxu0 %v2902
      %v3026 = vpop.f32.mrf.mxu0
      %v3027 = vadd.f32 0.0, %v3026
      %3028 = vmatmul.f32.gmra.mxu0 %v2905
      %v3029 = vpop.f32.mrf.mxu0
      %v3030 = vadd.f32 0.0, %v3029
      %3031 = vmatmul.f32.gmra.mxu0 %v2908
      %v3032 = vpop.f32.mrf.mxu0
      %v3033 = vadd.f32 0.0, %v3032
      %3034 = vmatmul.f32.gmra.mxu0 %v2911
      %v3035 = vpop.f32.mrf.mxu0
      %v3036 = vadd.f32 0.0, %v3035
      %3037 = vmatmul.f32.gmra.mxu0 %v2914
      %v3038 = vpop.f32.mrf.mxu0
      %v3039 = vadd.f32 0.0, %v3038
      %3040 = vmatmul.f32.gmra.mxu0 %v2917
      %v3041 = vpop.f32.mrf.mxu0
      %v3042 = vadd.f32 0.0, %v3041
      %3043 = vmatmul.f32.gmra.mxu0 %v2920
      %v3044 = vpop.f32.mrf.mxu0
      %v3045 = vadd.f32 0.0, %v3044
      %3046 = vmatmul.f32.gmra.mxu0 %v2923
      %v3047 = vpop.f32.mrf.mxu0
      %v3048 = vadd.f32 0.0, %v3047
      %3049 = vmatmul.f32.gmra.mxu0 %v2926
      %v3050 = vpop.f32.mrf.mxu0
      %v3051 = vadd.f32 0.0, %v3050
      %3052 = vmatmul.f32.gmra.mxu0 %v2929
      %v3053 = vpop.f32.mrf.mxu0
      %v3054 = vadd.f32 0.0, %v3053
      %3055 = vmatmul.f32.gmra.mxu0 %v2932
      %v3056 = vpop.f32.mrf.mxu0
      %v3057 = vadd.f32 0.0, %v3056
      %3058 = vmatmul.f32.gmra.mxu0 %v2935
      %v3059 = vpop.f32.mrf.mxu0
      %v3060 = vadd.f32 0.0, %v3059
      %3061 = vmatmul.f32.gmra.mxu0 %v2938
      %v3062 = vpop.f32.mrf.mxu0
      %v3063 = vadd.f32 0.0, %v3062
      %3064 = vdwg.mxu0
      %v3065 = vadd.f32 %v2750, %v2958
      %v3066 = vadd.f32 %v2751, %v2961
      %v3067 = vadd.f32 %v2752, %v2964
      %v3068 = vadd.f32 %v2753, %v2967
      %v3069 = vadd.f32 %v2754, %v2970
      %v3070 = vadd.f32 %v2755, %v2973
      %v3071 = vadd.f32 %v2756, %v2976
      %v3072 = vadd.f32 %v2757, %v2979
      %v3073 = vadd.f32 %v2758, %v2982
      %v3074 = vadd.f32 %v2759, %v2985
      %v3075 = vadd.f32 %v2760, %v2988
      %v3076 = vadd.f32 %v2761, %v2991
      %v3077 = vadd.f32 %v2762, %v2994
      %v3078 = vadd.f32 %v2763, %v2997
      %v3079 = vadd.f32 %v2764, %v3000
      %v3080 = vadd.f32 %v2765, %v3003
      %v3081 = vadd.f32 %v2766, %v3006
      %v3082 = vadd.f32 %v2767, %v3009
      %v3083 = vadd.f32 %v2768, %v3012
      %v3084 = vadd.f32 %v2769, %v3015
      %v3085 = vadd.f32 %v2770, %v3018
      %v3086 = vadd.f32 %v2771, %v3021
      %v3087 = vadd.f32 %v2772, %v3024
      %v3088 = vadd.f32 %v2773, %v3027
      %v3089 = vadd.f32 %v2774, %v3030
      %v3090 = vadd.f32 %v2775, %v3033
      %v3091 = vadd.f32 %v2776, %v3036
      %v3092 = vadd.f32 %v2777, %v3039
      %v3093 = vadd.f32 %v2778, %v3042
      %v3094 = vadd.f32 %v2779, %v3045
      %v3095 = vadd.f32 %v2780, %v3048
      %v3096 = vadd.f32 %v2781, %v3051
      %v3097 = vadd.f32 %v2782, %v3054
      %v3098 = vadd.f32 %v2783, %v3057
      %v3099 = vadd.f32 %v2784, %v3060
      %v3100 = vadd.f32 %v2785, %v3063
      %s3101 = scalar_lea.vmem %s2, 112
      %v3102 = vld [vmem:[%s3101] sm:$0xff]
      %v3103 = vld [vmem:[%s3101 + $0x8] sm:$0xff]
      %v3104 = vsel %vm958, %v480, 0
      %v3106 = vsel %vm958, %v481, 0
      %3108 = vmatpush.msra.mxu0 0.0
      %3109 = vmatpush.msra.mxu0 0.0
      %3110 = vmatpush.msra.mxu0 0.0
      %3111 = vmatpush.msra.mxu0 0.0
      %3112 = vmatpush.msra.mxu0 0.0
      %3113 = vmatpush.msra.mxu0 0.0
      %3114 = vmatpush.msra.mxu0 0.0
      %3115 = vmatpush.msra.mxu0 0.0
      %3116 = vmatpush.msra.mxu0 0.0
      %3117 = vmatpush.msra.mxu0 0.0
      %3118 = vmatpush.msra.mxu0 0.0
      %3119 = vmatpush.msra.mxu0 0.0
      %3120 = vmatpush.msra.mxu0 0.0
      %3121 = vmatpush.msra.mxu0 0.0
      %3122 = vmatpush.msra.mxu0 %v3103
      %3123 = vmatpush.msra.mxu0 %v3102
      %3124 = vmatmul.f32.gmra.mxu0 %v967
      %v3125 = vpop.f32.mrf.mxu0
      %v3126 = vadd.f32 0.0, %v3125
      %3127 = vmatmul.f32.gmra.mxu0 %v969
      %v3128 = vpop.f32.mrf.mxu0
      %v3129 = vadd.f32 0.0, %v3128
      %3130 = vmatmul.f32.gmra.mxu0 %v971
      %v3131 = vpop.f32.mrf.mxu0
      %v3132 = vadd.f32 0.0, %v3131
      %3133 = vmatmul.f32.gmra.mxu0 %v973
      %v3134 = vpop.f32.mrf.mxu0
      %v3135 = vadd.f32 0.0, %v3134
      %3136 = vmatmul.f32.gmra.mxu0 %v975
      %v3137 = vpop.f32.mrf.mxu0
      %v3138 = vadd.f32 0.0, %v3137
      %3139 = vmatmul.f32.gmra.mxu0 %v977
      %v3140 = vpop.f32.mrf.mxu0
      %v3141 = vadd.f32 0.0, %v3140
      %3142 = vmatmul.f32.gmra.mxu0 %v979
      %v3143 = vpop.f32.mrf.mxu0
      %v3144 = vadd.f32 0.0, %v3143
      %3145 = vmatmul.f32.gmra.mxu0 %v981
      %v3146 = vpop.f32.mrf.mxu0
      %v3147 = vadd.f32 0.0, %v3146
      %3148 = vmatmul.f32.gmra.mxu0 %v983
      %v3149 = vpop.f32.mrf.mxu0
      %v3150 = vadd.f32 0.0, %v3149
      %3151 = vmatmul.f32.gmra.mxu0 %v985
      %v3152 = vpop.f32.mrf.mxu0
      %v3153 = vadd.f32 0.0, %v3152
      %3154 = vmatmul.f32.gmra.mxu0 %v987
      %v3155 = vpop.f32.mrf.mxu0
      %v3156 = vadd.f32 0.0, %v3155
      %3157 = vmatmul.f32.gmra.mxu0 %v989
      %v3158 = vpop.f32.mrf.mxu0
      %v3159 = vadd.f32 0.0, %v3158
      %3160 = vmatmul.f32.gmra.mxu0 %v991
      %v3161 = vpop.f32.mrf.mxu0
      %v3162 = vadd.f32 0.0, %v3161
      %3163 = vmatmul.f32.gmra.mxu0 %v993
      %v3164 = vpop.f32.mrf.mxu0
      %v3165 = vadd.f32 0.0, %v3164
      %3166 = vmatmul.f32.gmra.mxu0 %v995
      %v3167 = vpop.f32.mrf.mxu0
      %v3168 = vadd.f32 0.0, %v3167
      %3169 = vmatmul.f32.gmra.mxu0 %v997
      %v3170 = vpop.f32.mrf.mxu0
      %v3171 = vadd.f32 0.0, %v3170
      %3172 = vmatmul.f32.gmra.mxu0 %v999
      %v3173 = vpop.f32.mrf.mxu0
      %v3174 = vadd.f32 0.0, %v3173
      %3175 = vmatmul.f32.gmra.mxu0 %v1001
      %v3176 = vpop.f32.mrf.mxu0
      %v3177 = vadd.f32 0.0, %v3176
      %3178 = vmatmul.f32.gmra.mxu0 %v1003
      %v3179 = vpop.f32.mrf.mxu0
      %v3180 = vadd.f32 0.0, %v3179
      %3181 = vmatmul.f32.gmra.mxu0 %v1005
      %v3182 = vpop.f32.mrf.mxu0
      %v3183 = vadd.f32 0.0, %v3182
      %3184 = vmatmul.f32.gmra.mxu0 %v1007
      %v3185 = vpop.f32.mrf.mxu0
      %v3186 = vadd.f32 0.0, %v3185
      %3187 = vmatmul.f32.gmra.mxu0 %v1009
      %v3188 = vpop.f32.mrf.mxu0
      %v3189 = vadd.f32 0.0, %v3188
      %3190 = vmatmul.f32.gmra.mxu0 %v1011
      %v3191 = vpop.f32.mrf.mxu0
      %v3192 = vadd.f32 0.0, %v3191
      %3193 = vmatmul.f32.gmra.mxu0 %v1013
      %v3194 = vpop.f32.mrf.mxu0
      %v3195 = vadd.f32 0.0, %v3194
      %3196 = vmatmul.f32.gmra.mxu0 %v1015
      %v3197 = vpop.f32.mrf.mxu0
      %v3198 = vadd.f32 0.0, %v3197
      %3199 = vmatmul.f32.gmra.mxu0 %v1017
      %v3200 = vpop.f32.mrf.mxu0
      %v3201 = vadd.f32 0.0, %v3200
      %3202 = vmatmul.f32.gmra.mxu0 %v1019
      %v3203 = vpop.f32.mrf.mxu0
      %v3204 = vadd.f32 0.0, %v3203
      %3205 = vmatmul.f32.gmra.mxu0 %v1021
      %v3206 = vpop.f32.mrf.mxu0
      %v3207 = vadd.f32 0.0, %v3206
      %3208 = vmatmul.f32.gmra.mxu0 %v1023
      %v3209 = vpop.f32.mrf.mxu0
      %v3210 = vadd.f32 0.0, %v3209
      %3211 = vmatmul.f32.gmra.mxu0 %v1025
      %v3212 = vpop.f32.mrf.mxu0
      %v3213 = vadd.f32 0.0, %v3212
      %3214 = vmatmul.f32.gmra.mxu0 %v1027
      %v3215 = vpop.f32.mrf.mxu0
      %v3216 = vadd.f32 0.0, %v3215
      %3217 = vmatmul.f32.gmra.mxu0 %v1029
      %v3218 = vpop.f32.mrf.mxu0
      %v3219 = vadd.f32 0.0, %v3218
      %3220 = vmatmul.f32.gmra.mxu0 %v2306
      %v3221 = vpop.f32.mrf.mxu0
      %v3222 = vadd.f32 0.0, %v3221
      %3223 = vmatmul.f32.gmra.mxu0 %v2308
      %v3224 = vpop.f32.mrf.mxu0
      %v3225 = vadd.f32 0.0, %v3224
      %3226 = vmatmul.f32.gmra.mxu0 %v3104
      %v3227 = vpop.f32.mrf.mxu0
      %v3228 = vadd.f32 0.0, %v3227
      %3229 = vmatmul.f32.gmra.mxu0 %v3106
      %v3230 = vpop.f32.mrf.mxu0
      %v3231 = vadd.f32 0.0, %v3230
      %3232 = vdwg.mxu0
      %v3233 = vadd.f32 %v3065, %v3126
      %v3234 = vadd.f32 %v3066, %v3129
      %v3235 = vadd.f32 %v3067, %v3132
      %v3236 = vadd.f32 %v3068, %v3135
      %v3237 = vadd.f32 %v3069, %v3138
      %v3238 = vadd.f32 %v3070, %v3141
      %v3239 = vadd.f32 %v3071, %v3144
      %v3240 = vadd.f32 %v3072, %v3147
      %v3241 = vadd.f32 %v3073, %v3150
      %v3242 = vadd.f32 %v3074, %v3153
      %v3243 = vadd.f32 %v3075, %v3156
      %v3244 = vadd.f32 %v3076, %v3159
      %v3245 = vadd.f32 %v3077, %v3162
      %v3246 = vadd.f32 %v3078, %v3165
      %v3247 = vadd.f32 %v3079, %v3168
      %v3248 = vadd.f32 %v3080, %v3171
      %v3249 = vadd.f32 %v3081, %v3174
      %v3250 = vadd.f32 %v3082, %v3177
      %v3251 = vadd.f32 %v3083, %v3180
      %v3252 = vadd.f32 %v3084, %v3183
      %v3253 = vadd.f32 %v3085, %v3186
      %v3254 = vadd.f32 %v3086, %v3189
      %v3255 = vadd.f32 %v3087, %v3192
      %v3256 = vadd.f32 %v3088, %v3195
      %v3257 = vadd.f32 %v3089, %v3198
      %v3258 = vadd.f32 %v3090, %v3201
      %v3259 = vadd.f32 %v3091, %v3204
      %v3260 = vadd.f32 %v3092, %v3207
      %v3261 = vadd.f32 %v3093, %v3210
      %v3262 = vadd.f32 %v3094, %v3213
      %v3263 = vadd.f32 %v3095, %v3216
      %v3264 = vadd.f32 %v3096, %v3219
      %v3265 = vadd.f32 %v3097, %v3222
      %v3266 = vadd.f32 %v3098, %v3225
      %v3267 = vadd.f32 %v3099, %v3228
      %v3268 = vadd.f32 %v3100, %v3231
      %v3269 = vrot.slane %v481, 1
      %v3270 = vsel %vm1570, %v2474, %v3269
      %v3271 = vrot.slane 0.0, 1
      %v3272 = vsel %vm1570, %v3269, %v3271
      %v3275 = vsel %vm1533, %v1581, 0.0
      %v3276 = vsel %vm1534, %v1583, 0.0
      %v3277 = vsel %vm1535, %v1585, 0.0
      %v3278 = vsel %vm1536, %v1587, 0.0
      %v3279 = vsel %vm1537, %v1589, 0.0
      %v3280 = vsel %vm1538, %v1591, 0.0
      %v3281 = vsel %vm1539, %v1593, 0.0
      %v3282 = vsel %vm1540, %v1595, 0.0
      %v3283 = vsel %vm1541, %v1597, 0.0
      %v3284 = vsel %vm1542, %v1599, 0.0
      %v3285 = vsel %vm1543, %v1601, 0.0
      %v3286 = vsel %vm1544, %v1603, 0.0
      %v3287 = vsel %vm1545, %v1605, 0.0
      %v3288 = vsel %vm1546, %v1607, 0.0
      %v3289 = vsel %vm1547, %v1609, 0.0
      %v3290 = vsel %vm1548, %v1611, 0.0
      %v3291 = vsel %vm1549, %v1613, 0.0
      %v3292 = vsel %vm1550, %v1615, 0.0
      %v3293 = vsel %vm1551, %v1617, 0.0
      %v3294 = vsel %vm1552, %v1619, 0.0
      %v3295 = vsel %vm1553, %v1621, 0.0
      %v3296 = vsel %vm1554, %v1623, 0.0
      %v3297 = vsel %vm1555, %v1625, 0.0
      %v3298 = vsel %vm1556, %v1627, 0.0
      %v3299 = vsel %vm1557, %v1629, 0.0
      %v3300 = vsel %vm1558, %v1631, 0.0
      %v3301 = vsel %vm1559, %v1633, 0.0
      %v3302 = vsel %vm1560, %v1635, 0.0
      %v3303 = vsel %vm1561, %v1637, 0.0
      %v3304 = vsel %vm1562, %v1639, 0.0
      %v3305 = vsel %vm1563, %v1641, 0.0
      %v3306 = vsel %vm1564, %v1643, 0.0
      %v3307 = vsel %vm1565, %v2473, 0.0
      %v3308 = vsel %vm1566, %v2475, 0.0
      %v3309 = vsel %vm1567, %v3270, 0.0
      %v3310 = vsel %vm1568, %v3272, 0.0
      %s3311 = scalar_lea.vmem %s2, 128
      %v3312 = vld [vmem:[%s3311] sm:$0xff]
      %v3313 = vld [vmem:[%s3311 + $0x8] sm:$0xff]
      %v3315 = vsel %vm958, %v3275, 0
      %v3318 = vsel %vm958, %v3276, 0
      %v3321 = vsel %vm958, %v3277, 0
      %v3324 = vsel %vm958, %v3278, 0
      %v3327 = vsel %vm958, %v3279, 0
      %v3330 = vsel %vm958, %v3280, 0
      %v3333 = vsel %vm958, %v3281, 0
      %v3336 = vsel %vm958, %v3282, 0
      %v3339 = vsel %vm958, %v3283, 0
      %v3342 = vsel %vm958, %v3284, 0
      %v3345 = vsel %vm958, %v3285, 0
      %v3348 = vsel %vm958, %v3286, 0
      %v3351 = vsel %vm958, %v3287, 0
      %v3354 = vsel %vm958, %v3288, 0
      %v3357 = vsel %vm958, %v3289, 0
      %v3360 = vsel %vm958, %v3290, 0
      %v3363 = vsel %vm958, %v3291, 0
      %v3366 = vsel %vm958, %v3292, 0
      %v3369 = vsel %vm958, %v3293, 0
      %v3372 = vsel %vm958, %v3294, 0
      %v3375 = vsel %vm958, %v3295, 0
      %v3378 = vsel %vm958, %v3296, 0
      %v3381 = vsel %vm958, %v3297, 0
      %v3384 = vsel %vm958, %v3298, 0
      %v3387 = vsel %vm958, %v3299, 0
      %v3390 = vsel %vm958, %v3300, 0
      %v3393 = vsel %vm958, %v3301, 0
      %v3396 = vsel %vm958, %v3302, 0
      %v3399 = vsel %vm958, %v3303, 0
      %v3402 = vsel %vm958, %v3304, 0
      %v3405 = vsel %vm958, %v3305, 0
      %v3408 = vsel %vm958, %v3306, 0
      %v3411 = vsel %vm958, %v3307, 0
      %v3414 = vsel %vm958, %v3308, 0
      %v3417 = vsel %vm958, %v3309, 0
      %v3420 = vsel %vm958, %v3310, 0
      %3422 = vmatpush.msra.mxu0 0.0
      %3423 = vmatpush.msra.mxu0 0.0
      %3424 = vmatpush.msra.mxu0 0.0
      %3425 = vmatpush.msra.mxu0 0.0
      %3426 = vmatpush.msra.mxu0 0.0
      %3427 = vmatpush.msra.mxu0 0.0
      %3428 = vmatpush.msra.mxu0 0.0
      %3429 = vmatpush.msra.mxu0 0.0
      %3430 = vmatpush.msra.mxu0 0.0
      %3431 = vmatpush.msra.mxu0 0.0
      %3432 = vmatpush.msra.mxu0 0.0
      %3433 = vmatpush.msra.mxu0 0.0
      %3434 = vmatpush.msra.mxu0 0.0
      %3435 = vmatpush.msra.mxu0 0.0
      %3436 = vmatpush.msra.mxu0 %v3313
      %3437 = vmatpush.msra.mxu0 %v3312
      %3438 = vmatmul.f32.gmra.mxu0 %v3315
      %v3439 = vpop.f32.mrf.mxu0
      %v3440 = vadd.f32 0.0, %v3439
      %3441 = vmatmul.f32.gmra.mxu0 %v3318
      %v3442 = vpop.f32.mrf.mxu0
      %v3443 = vadd.f32 0.0, %v3442
      %3444 = vmatmul.f32.gmra.mxu0 %v3321
      %v3445 = vpop.f32.mrf.mxu0
      %v3446 = vadd.f32 0.0, %v3445
      %3447 = vmatmul.f32.gmra.mxu0 %v3324
      %v3448 = vpop.f32.mrf.mxu0
      %v3449 = vadd.f32 0.0, %v3448
      %3450 = vmatmul.f32.gmra.mxu0 %v3327
      %v3451 = vpop.f32.mrf.mxu0
      %v3452 = vadd.f32 0.0, %v3451
      %3453 = vmatmul.f32.gmra.mxu0 %v3330
      %v3454 = vpop.f32.mrf.mxu0
      %v3455 = vadd.f32 0.0, %v3454
      %3456 = vmatmul.f32.gmra.mxu0 %v3333
      %v3457 = vpop.f32.mrf.mxu0
      %v3458 = vadd.f32 0.0, %v3457
      %3459 = vmatmul.f32.gmra.mxu0 %v3336
      %v3460 = vpop.f32.mrf.mxu0
      %v3461 = vadd.f32 0.0, %v3460
      %3462 = vmatmul.f32.gmra.mxu0 %v3339
      %v3463 = vpop.f32.mrf.mxu0
      %v3464 = vadd.f32 0.0, %v3463
      %3465 = vmatmul.f32.gmra.mxu0 %v3342
      %v3466 = vpop.f32.mrf.mxu0
      %v3467 = vadd.f32 0.0, %v3466
      %3468 = vmatmul.f32.gmra.mxu0 %v3345
      %v3469 = vpop.f32.mrf.mxu0
      %v3470 = vadd.f32 0.0, %v3469
      %3471 = vmatmul.f32.gmra.mxu0 %v3348
      %v3472 = vpop.f32.mrf.mxu0
      %v3473 = vadd.f32 0.0, %v3472
      %3474 = vmatmul.f32.gmra.mxu0 %v3351
      %v3475 = vpop.f32.mrf.mxu0
      %v3476 = vadd.f32 0.0, %v3475
      %3477 = vmatmul.f32.gmra.mxu0 %v3354
      %v3478 = vpop.f32.mrf.mxu0
      %v3479 = vadd.f32 0.0, %v3478
      %3480 = vmatmul.f32.gmra.mxu0 %v3357
      %v3481 = vpop.f32.mrf.mxu0
      %v3482 = vadd.f32 0.0, %v3481
      %3483 = vmatmul.f32.gmra.mxu0 %v3360
      %v3484 = vpop.f32.mrf.mxu0
      %v3485 = vadd.f32 0.0, %v3484
      %3486 = vmatmul.f32.gmra.mxu0 %v3363
      %v3487 = vpop.f32.mrf.mxu0
      %v3488 = vadd.f32 0.0, %v3487
      %3489 = vmatmul.f32.gmra.mxu0 %v3366
      %v3490 = vpop.f32.mrf.mxu0
      %v3491 = vadd.f32 0.0, %v3490
      %3492 = vmatmul.f32.gmra.mxu0 %v3369
      %v3493 = vpop.f32.mrf.mxu0
      %v3494 = vadd.f32 0.0, %v3493
      %3495 = vmatmul.f32.gmra.mxu0 %v3372
      %v3496 = vpop.f32.mrf.mxu0
      %v3497 = vadd.f32 0.0, %v3496
      %3498 = vmatmul.f32.gmra.mxu0 %v3375
      %v3499 = vpop.f32.mrf.mxu0
      %v3500 = vadd.f32 0.0, %v3499
      %3501 = vmatmul.f32.gmra.mxu0 %v3378
      %v3502 = vpop.f32.mrf.mxu0
      %v3503 = vadd.f32 0.0, %v3502
      %3504 = vmatmul.f32.gmra.mxu0 %v3381
      %v3505 = vpop.f32.mrf.mxu0
      %v3506 = vadd.f32 0.0, %v3505
      %3507 = vmatmul.f32.gmra.mxu0 %v3384
      %v3508 = vpop.f32.mrf.mxu0
      %v3509 = vadd.f32 0.0, %v3508
      %3510 = vmatmul.f32.gmra.mxu0 %v3387
      %v3511 = vpop.f32.mrf.mxu0
      %v3512 = vadd.f32 0.0, %v3511
      %3513 = vmatmul.f32.gmra.mxu0 %v3390
      %v3514 = vpop.f32.mrf.mxu0
      %v3515 = vadd.f32 0.0, %v3514
      %3516 = vmatmul.f32.gmra.mxu0 %v3393
      %v3517 = vpop.f32.mrf.mxu0
      %v3518 = vadd.f32 0.0, %v3517
      %3519 = vmatmul.f32.gmra.mxu0 %v3396
      %v3520 = vpop.f32.mrf.mxu0
      %v3521 = vadd.f32 0.0, %v3520
      %3522 = vmatmul.f32.gmra.mxu0 %v3399
      %v3523 = vpop.f32.mrf.mxu0
      %v3524 = vadd.f32 0.0, %v3523
      %3525 = vmatmul.f32.gmra.mxu0 %v3402
      %v3526 = vpop.f32.mrf.mxu0
      %v3527 = vadd.f32 0.0, %v3526
      %3528 = vmatmul.f32.gmra.mxu0 %v3405
      %v3529 = vpop.f32.mrf.mxu0
      %v3530 = vadd.f32 0.0, %v3529
      %3531 = vmatmul.f32.gmra.mxu0 %v3408
      %v3532 = vpop.f32.mrf.mxu0
      %v3533 = vadd.f32 0.0, %v3532
      %3534 = vmatmul.f32.gmra.mxu0 %v3411
      %v3535 = vpop.f32.mrf.mxu0
      %v3536 = vadd.f32 0.0, %v3535
      %3537 = vmatmul.f32.gmra.mxu0 %v3414
      %v3538 = vpop.f32.mrf.mxu0
      %v3539 = vadd.f32 0.0, %v3538
      %3540 = vmatmul.f32.gmra.mxu0 %v3417
      %v3541 = vpop.f32.mrf.mxu0
      %v3542 = vadd.f32 0.0, %v3541
      %3543 = vmatmul.f32.gmra.mxu0 %v3420
      %v3544 = vpop.f32.mrf.mxu0
      %v3545 = vadd.f32 0.0, %v3544
      %3546 = vdwg.mxu0
      %v3547 = vadd.f32 %v3233, %v3440
      %v3548 = vadd.f32 %v3234, %v3443
      %v3549 = vadd.f32 %v3235, %v3446
      %v3550 = vadd.f32 %v3236, %v3449
      %v3551 = vadd.f32 %v3237, %v3452
      %v3552 = vadd.f32 %v3238, %v3455
      %v3553 = vadd.f32 %v3239, %v3458
      %v3554 = vadd.f32 %v3240, %v3461
      %v3555 = vadd.f32 %v3241, %v3464
      %v3556 = vadd.f32 %v3242, %v3467
      %v3557 = vadd.f32 %v3243, %v3470
      %v3558 = vadd.f32 %v3244, %v3473
      %v3559 = vadd.f32 %v3245, %v3476
      %v3560 = vadd.f32 %v3246, %v3479
      %v3561 = vadd.f32 %v3247, %v3482
      %v3562 = vadd.f32 %v3248, %v3485
      %v3563 = vadd.f32 %v3249, %v3488
      %v3564 = vadd.f32 %v3250, %v3491
      %v3565 = vadd.f32 %v3251, %v3494
      %v3566 = vadd.f32 %v3252, %v3497
      %v3567 = vadd.f32 %v3253, %v3500
      %v3568 = vadd.f32 %v3254, %v3503
      %v3569 = vadd.f32 %v3255, %v3506
      %v3570 = vadd.f32 %v3256, %v3509
      %v3571 = vadd.f32 %v3257, %v3512
      %v3572 = vadd.f32 %v3258, %v3515
      %v3573 = vadd.f32 %v3259, %v3518
      %v3574 = vadd.f32 %v3260, %v3521
      %v3575 = vadd.f32 %v3261, %v3524
      %v3576 = vadd.f32 %v3262, %v3527
      %v3577 = vadd.f32 %v3263, %v3530
      %v3578 = vadd.f32 %v3264, %v3533
      %v3579 = vadd.f32 %v3265, %v3536
      %v3580 = vadd.f32 %v3266, %v3539
      %v3581 = vadd.f32 %v3267, %v3542
      %v3582 = vadd.f32 %v3268, %v3545
      %v3583 = vld [vmem:[%s3] sm:$0x1]
      %v3585 = vperm.slane %v3583, 0
      %v3587 = vadd.f32 %v3547, %v3585
      %v3588 = vadd.f32 %v3548, %v3585
      %v3589 = vadd.f32 %v3549, %v3585
      %v3590 = vadd.f32 %v3550, %v3585
      %v3591 = vadd.f32 %v3551, %v3585
      %v3592 = vadd.f32 %v3552, %v3585
      %v3593 = vadd.f32 %v3553, %v3585
      %v3594 = vadd.f32 %v3554, %v3585
      %v3595 = vadd.f32 %v3555, %v3585
      %v3596 = vadd.f32 %v3556, %v3585
      %v3597 = vadd.f32 %v3557, %v3585
      %v3598 = vadd.f32 %v3558, %v3585
      %v3599 = vadd.f32 %v3559, %v3585
      %v3600 = vadd.f32 %v3560, %v3585
      %v3601 = vadd.f32 %v3561, %v3585
      %v3602 = vadd.f32 %v3562, %v3585
      %v3603 = vadd.f32 %v3563, %v3585
      %v3604 = vadd.f32 %v3564, %v3585
      %v3605 = vadd.f32 %v3565, %v3585
      %v3606 = vadd.f32 %v3566, %v3585
      %v3607 = vadd.f32 %v3567, %v3585
      %v3608 = vadd.f32 %v3568, %v3585
      %v3609 = vadd.f32 %v3569, %v3585
      %v3610 = vadd.f32 %v3570, %v3585
      %v3611 = vadd.f32 %v3571, %v3585
      %v3612 = vadd.f32 %v3572, %v3585
      %v3613 = vadd.f32 %v3573, %v3585
      %v3614 = vadd.f32 %v3574, %v3585
      %v3615 = vadd.f32 %v3575, %v3585
      %v3616 = vadd.f32 %v3576, %v3585
      %v3617 = vadd.f32 %v3577, %v3585
      %v3618 = vadd.f32 %v3578, %v3585
      %v3619 = vadd.f32 %v3579, %v3585
      %v3620 = vadd.f32 %v3580, %v3585
      %v3621 = vadd.f32 %v3581, %v3585
      %v3622 = vadd.f32 %v3582, %v3585
      %v3623 = vmax.f32 %v3587, 0.0
      %v3624 = vmax.f32 %v3588, 0.0
      %v3625 = vmax.f32 %v3589, 0.0
      %v3626 = vmax.f32 %v3590, 0.0
      %v3627 = vmax.f32 %v3591, 0.0
      %v3628 = vmax.f32 %v3592, 0.0
      %v3629 = vmax.f32 %v3593, 0.0
      %v3630 = vmax.f32 %v3594, 0.0
      %v3631 = vmax.f32 %v3595, 0.0
      %v3632 = vmax.f32 %v3596, 0.0
      %v3633 = vmax.f32 %v3597, 0.0
      %v3634 = vmax.f32 %v3598, 0.0
      %v3635 = vmax.f32 %v3599, 0.0
      %v3636 = vmax.f32 %v3600, 0.0
      %v3637 = vmax.f32 %v3601, 0.0
      %v3638 = vmax.f32 %v3602, 0.0
      %v3639 = vmax.f32 %v3603, 0.0
      %v3640 = vmax.f32 %v3604, 0.0
      %v3641 = vmax.f32 %v3605, 0.0
      %v3642 = vmax.f32 %v3606, 0.0
      %v3643 = vmax.f32 %v3607, 0.0
      %v3644 = vmax.f32 %v3608, 0.0
      %v3645 = vmax.f32 %v3609, 0.0
      %v3646 = vmax.f32 %v3610, 0.0
      %v3647 = vmax.f32 %v3611, 0.0
      %v3648 = vmax.f32 %v3612, 0.0
      %v3649 = vmax.f32 %v3613, 0.0
      %v3650 = vmax.f32 %v3614, 0.0
      %v3651 = vmax.f32 %v3615, 0.0
      %v3652 = vmax.f32 %v3616, 0.0
      %v3653 = vmax.f32 %v3617, 0.0
      %v3654 = vmax.f32 %v3618, 0.0
      %v3655 = vmax.f32 %v3619, 0.0
      %v3656 = vmax.f32 %v3620, 0.0
      %v3657 = vmax.f32 %v3621, 0.0
      %v3658 = vmax.f32 %v3622, 0.0
      %v3659 = vld [vmem:[%s8] sm:$0xff]
      %v3660 = vld [vmem:[%s8 + $0x8] sm:$0xff]
      %v3661 = vld [vmem:[%s8 + $0x10] sm:$0xff]
      %v3662 = vld [vmem:[%s8 + $0x18] sm:$0xff]
      %v3663 = vld [vmem:[%s8 + $0x20] sm:$0xff]
      %v3664 = vld [vmem:[%s8 + $0x28] sm:$0xff]
      %v3665 = vld [vmem:[%s8 + $0x30] sm:$0xff]
      %v3666 = vld [vmem:[%s8 + $0x38] sm:$0xff]
      %v3667 = vld [vmem:[%s8 + $0x40] sm:$0xff]
      %v3668 = vld [vmem:[%s8 + $0x48] sm:$0xff]
      %v3669 = vld [vmem:[%s8 + $0x50] sm:$0xff]
      %v3670 = vld [vmem:[%s8 + $0x58] sm:$0xff]
      %v3671 = vld [vmem:[%s8 + $0x60] sm:$0xff]
      %v3672 = vld [vmem:[%s8 + $0x68] sm:$0xff]
      %v3673 = vld [vmem:[%s8 + $0x70] sm:$0xff]
      %v3674 = vld [vmem:[%s8 + $0x78] sm:$0xff]
      %v3675 = vld [vmem:[%s8 + $0x80] sm:$0xff]
      %v3676 = vld [vmem:[%s8 + $0x88] sm:$0xff]
      %v3677 = vld [vmem:[%s8 + $0x90] sm:$0xff]
      %v3678 = vld [vmem:[%s8 + $0x98] sm:$0xff]
      %v3679 = vld [vmem:[%s8 + $0xa0] sm:$0xff]
      %v3680 = vld [vmem:[%s8 + $0xa8] sm:$0xff]
      %v3681 = vld [vmem:[%s8 + $0xb0] sm:$0xff]
      %v3682 = vld [vmem:[%s8 + $0xb8] sm:$0xff]
      %v3683 = vld [vmem:[%s8 + $0xc0] sm:$0xff]
      %v3684 = vld [vmem:[%s8 + $0xc8] sm:$0xff]
      %v3685 = vld [vmem:[%s8 + $0xd0] sm:$0xff]
      %v3686 = vld [vmem:[%s8 + $0xd8] sm:$0xff]
      %v3687 = vld [vmem:[%s8 + $0xe0] sm:$0xff]
      %v3688 = vld [vmem:[%s8 + $0xe8] sm:$0xff]
      %v3689 = vld [vmem:[%s8 + $0xf0] sm:$0xff]
      %v3690 = vld [vmem:[%s8 + $0xf8] sm:$0xff]
      %v3691 = vld [vmem:[%s8 + $0x100] sm:$0xff]
      %v3692 = vld [vmem:[%s8 + $0x108] sm:$0xff]
      %v3693 = vld [vmem:[%s8 + $0x110] sm:$0xff]
      %v3694 = vld [vmem:[%s8 + $0x118] sm:$0xff]
      %s3695 = smul.u32 %s25, 16
      %s3696 = ssub.s32 %s3695, 1
      %v3697 = vstv %s3696
      %v3698 = vadd.s32 %v3659, %v3697
      %v3699 = vadd.s32 %v3660, %v3697
      %v3700 = vadd.s32 %v3661, %v3697
      %v3701 = vadd.s32 %v3662, %v3697
      %v3702 = vadd.s32 %v3663, %v3697
      %v3703 = vadd.s32 %v3664, %v3697
      %v3704 = vadd.s32 %v3665, %v3697
      %v3705 = vadd.s32 %v3666, %v3697
      %v3706 = vadd.s32 %v3667, %v3697
      %v3707 = vadd.s32 %v3668, %v3697
      %v3708 = vadd.s32 %v3669, %v3697
      %v3709 = vadd.s32 %v3670, %v3697
      %v3710 = vadd.s32 %v3671, %v3697
      %v3711 = vadd.s32 %v3672, %v3697
      %v3712 = vadd.s32 %v3673, %v3697
      %v3713 = vadd.s32 %v3674, %v3697
      %v3714 = vadd.s32 %v3675, %v3697
      %v3715 = vadd.s32 %v3676, %v3697
      %v3716 = vadd.s32 %v3677, %v3697
      %v3717 = vadd.s32 %v3678, %v3697
      %v3718 = vadd.s32 %v3679, %v3697
      %v3719 = vadd.s32 %v3680, %v3697
      %v3720 = vadd.s32 %v3681, %v3697
      %v3721 = vadd.s32 %v3682, %v3697
      %v3722 = vadd.s32 %v3683, %v3697
      %v3723 = vadd.s32 %v3684, %v3697
      %v3724 = vadd.s32 %v3685, %v3697
      %v3725 = vadd.s32 %v3686, %v3697
      %v3726 = vadd.s32 %v3687, %v3697
      %v3727 = vadd.s32 %v3688, %v3697
      %v3728 = vadd.s32 %v3689, %v3697
      %v3729 = vadd.s32 %v3690, %v3697
      %v3730 = vadd.s32 %v3691, %v3697
      %v3731 = vadd.s32 %v3692, %v3697
      %v3732 = vadd.s32 %v3693, %v3697
      %v3733 = vadd.s32 %v3694, %v3697
      %vm3734 = vcmp.ge.s32.totalorder %v3698, 0
      %vm3735 = vcmp.ge.s32.totalorder %v3699, 0
      %vm3736 = vcmp.ge.s32.totalorder %v3700, 0
      %vm3737 = vcmp.ge.s32.totalorder %v3701, 0
      %vm3738 = vcmp.ge.s32.totalorder %v3702, 0
      %vm3739 = vcmp.ge.s32.totalorder %v3703, 0
      %vm3740 = vcmp.ge.s32.totalorder %v3704, 0
      %vm3741 = vcmp.ge.s32.totalorder %v3705, 0
      %vm3742 = vcmp.ge.s32.totalorder %v3706, 0
      %vm3743 = vcmp.ge.s32.totalorder %v3707, 0
      %vm3744 = vcmp.ge.s32.totalorder %v3708, 0
      %vm3745 = vcmp.ge.s32.totalorder %v3709, 0
      %vm3746 = vcmp.ge.s32.totalorder %v3710, 0
      %vm3747 = vcmp.ge.s32.totalorder %v3711, 0
      %vm3748 = vcmp.ge.s32.totalorder %v3712, 0
      %vm3749 = vcmp.ge.s32.totalorder %v3713, 0
      %vm3750 = vcmp.ge.s32.totalorder %v3714, 0
      %vm3751 = vcmp.ge.s32.totalorder %v3715, 0
      %vm3752 = vcmp.ge.s32.totalorder %v3716, 0
      %vm3753 = vcmp.ge.s32.totalorder %v3717, 0
      %vm3754 = vcmp.ge.s32.totalorder %v3718, 0
      %vm3755 = vcmp.ge.s32.totalorder %v3719, 0
      %vm3756 = vcmp.ge.s32.totalorder %v3720, 0
      %vm3757 = vcmp.ge.s32.totalorder %v3721, 0
      %vm3758 = vcmp.ge.s32.totalorder %v3722, 0
      %vm3759 = vcmp.ge.s32.totalorder %v3723, 0
      %vm3760 = vcmp.ge.s32.totalorder %v3724, 0
      %vm3761 = vcmp.ge.s32.totalorder %v3725, 0
      %vm3762 = vcmp.ge.s32.totalorder %v3726, 0
      %vm3763 = vcmp.ge.s32.totalorder %v3727, 0
      %vm3764 = vcmp.ge.s32.totalorder %v3728, 0
      %vm3765 = vcmp.ge.s32.totalorder %v3729, 0
      %vm3766 = vcmp.ge.s32.totalorder %v3730, 0
      %vm3767 = vcmp.ge.s32.totalorder %v3731, 0
      %vm3768 = vcmp.ge.s32.totalorder %v3732, 0
      %vm3769 = vcmp.ge.s32.totalorder %v3733, 0
      %vm3770 = vcmp.lt.s32.totalorder %v3698, 16
      %vm3771 = vcmp.lt.s32.totalorder %v3699, 16
      %vm3772 = vcmp.lt.s32.totalorder %v3700, 16
      %vm3773 = vcmp.lt.s32.totalorder %v3701, 16
      %vm3774 = vcmp.lt.s32.totalorder %v3702, 16
      %vm3775 = vcmp.lt.s32.totalorder %v3703, 16
      %vm3776 = vcmp.lt.s32.totalorder %v3704, 16
      %vm3777 = vcmp.lt.s32.totalorder %v3705, 16
      %vm3778 = vcmp.lt.s32.totalorder %v3706, 16
      %vm3779 = vcmp.lt.s32.totalorder %v3707, 16
      %vm3780 = vcmp.lt.s32.totalorder %v3708, 16
      %vm3781 = vcmp.lt.s32.totalorder %v3709, 16
      %vm3782 = vcmp.lt.s32.totalorder %v3710, 16
      %vm3783 = vcmp.lt.s32.totalorder %v3711, 16
      %vm3784 = vcmp.lt.s32.totalorder %v3712, 16
      %vm3785 = vcmp.lt.s32.totalorder %v3713, 16
      %vm3786 = vcmp.lt.s32.totalorder %v3714, 16
      %vm3787 = vcmp.lt.s32.totalorder %v3715, 16
      %vm3788 = vcmp.lt.s32.totalorder %v3716, 16
      %vm3789 = vcmp.lt.s32.totalorder %v3717, 16
      %vm3790 = vcmp.lt.s32.totalorder %v3718, 16
      %vm3791 = vcmp.lt.s32.totalorder %v3719, 16
      %vm3792 = vcmp.lt.s32.totalorder %v3720, 16
      %vm3793 = vcmp.lt.s32.totalorder %v3721, 16
      %vm3794 = vcmp.lt.s32.totalorder %v3722, 16
      %vm3795 = vcmp.lt.s32.totalorder %v3723, 16
      %vm3796 = vcmp.lt.s32.totalorder %v3724, 16
      %vm3797 = vcmp.lt.s32.totalorder %v3725, 16
      %vm3798 = vcmp.lt.s32.totalorder %v3726, 16
      %vm3799 = vcmp.lt.s32.totalorder %v3727, 16
      %vm3800 = vcmp.lt.s32.totalorder %v3728, 16
      %vm3801 = vcmp.lt.s32.totalorder %v3729, 16
      %vm3802 = vcmp.lt.s32.totalorder %v3730, 16
      %vm3803 = vcmp.lt.s32.totalorder %v3731, 16
      %vm3804 = vcmp.lt.s32.totalorder %v3732, 16
      %vm3805 = vcmp.lt.s32.totalorder %v3733, 16
      %vm3806 = vmand %vm3734, %vm3770
      %vm3807 = vmand %vm3735, %vm3771
      %vm3808 = vmand %vm3736, %vm3772
      %vm3809 = vmand %vm3737, %vm3773
      %vm3810 = vmand %vm3738, %vm3774
      %vm3811 = vmand %vm3739, %vm3775
      %vm3812 = vmand %vm3740, %vm3776
      %vm3813 = vmand %vm3741, %vm3777
      %vm3814 = vmand %vm3742, %vm3778
      %vm3815 = vmand %vm3743, %vm3779
      %vm3816 = vmand %vm3744, %vm3780
      %vm3817 = vmand %vm3745, %vm3781
      %vm3818 = vmand %vm3746, %vm3782
      %vm3819 = vmand %vm3747, %vm3783
      %vm3820 = vmand %vm3748, %vm3784
      %vm3821 = vmand %vm3749, %vm3785
      %vm3822 = vmand %vm3750, %vm3786
      %vm3823 = vmand %vm3751, %vm3787
      %vm3824 = vmand %vm3752, %vm3788
      %vm3825 = vmand %vm3753, %vm3789
      %vm3826 = vmand %vm3754, %vm3790
      %vm3827 = vmand %vm3755, %vm3791
      %vm3828 = vmand %vm3756, %vm3792
      %vm3829 = vmand %vm3757, %vm3793
      %vm3830 = vmand %vm3758, %vm3794
      %vm3831 = vmand %vm3759, %vm3795
      %vm3832 = vmand %vm3760, %vm3796
      %vm3833 = vmand %vm3761, %vm3797
      %vm3834 = vmand %vm3762, %vm3798
      %vm3835 = vmand %vm3763, %vm3799
      %vm3836 = vmand %vm3764, %vm3800
      %vm3837 = vmand %vm3765, %vm3801
      %vm3838 = vmand %vm3766, %vm3802
      %vm3839 = vmand %vm3767, %vm3803
      %vm3840 = vmand %vm3768, %vm3804
      %vm3841 = vmand %vm3769, %vm3805
      %v3842 = vsel %vm3806, 1, 0
      %v3843 = vsel %vm3807, 1, 0
      %v3844 = vsel %vm3808, 1, 0
      %v3845 = vsel %vm3809, 1, 0
      %v3846 = vsel %vm3810, 1, 0
      %v3847 = vsel %vm3811, 1, 0
      %v3848 = vsel %vm3812, 1, 0
      %v3849 = vsel %vm3813, 1, 0
      %v3850 = vsel %vm3814, 1, 0
      %v3851 = vsel %vm3815, 1, 0
      %v3852 = vsel %vm3816, 1, 0
      %v3853 = vsel %vm3817, 1, 0
      %v3854 = vsel %vm3818, 1, 0
      %v3855 = vsel %vm3819, 1, 0
      %v3856 = vsel %vm3820, 1, 0
      %v3857 = vsel %vm3821, 1, 0
      %v3858 = vsel %vm3822, 1, 0
      %v3859 = vsel %vm3823, 1, 0
      %v3860 = vsel %vm3824, 1, 0
      %v3861 = vsel %vm3825, 1, 0
      %v3862 = vsel %vm3826, 1, 0
      %v3863 = vsel %vm3827, 1, 0
      %v3864 = vsel %vm3828, 1, 0
      %v3865 = vsel %vm3829, 1, 0
      %v3866 = vsel %vm3830, 1, 0
      %v3867 = vsel %vm3831, 1, 0
      %v3868 = vsel %vm3832, 1, 0
      %v3869 = vsel %vm3833, 1, 0
      %v3870 = vsel %vm3834, 1, 0
      %v3871 = vsel %vm3835, 1, 0
      %v3872 = vsel %vm3836, 1, 0
      %v3873 = vsel %vm3837, 1, 0
      %v3874 = vsel %vm3838, 1, 0
      %v3875 = vsel %vm3839, 1, 0
      %v3876 = vsel %vm3840, 1, 0
      %v3877 = vsel %vm3841, 1, 0
      %3878 = vset.pattern.permute.xlu0 0
      %3879 = vperm.xlu0 %3878, %v3842
      %v3880 = vpop.permute.xlu0 %3879
      %3881 = vset.pattern.permute.xlu0 0
      %3882 = vperm.xlu0 %3881, %v3843
      %v3883 = vpop.permute.xlu0 %3882
      %3884 = vset.pattern.permute.xlu0 0
      %3885 = vperm.xlu0 %3884, %v3844
      %v3886 = vpop.permute.xlu0 %3885
      %3887 = vset.pattern.permute.xlu0 0
      %3888 = vperm.xlu0 %3887, %v3845
      %v3889 = vpop.permute.xlu0 %3888
      %3890 = vset.pattern.permute.xlu0 0
      %3891 = vperm.xlu0 %3890, %v3846
      %v3892 = vpop.permute.xlu0 %3891
      %3893 = vset.pattern.permute.xlu0 0
      %3894 = vperm.xlu0 %3893, %v3847
      %v3895 = vpop.permute.xlu0 %3894
      %3896 = vset.pattern.permute.xlu0 0
      %3897 = vperm.xlu0 %3896, %v3848
      %v3898 = vpop.permute.xlu0 %3897
      %3899 = vset.pattern.permute.xlu0 0
      %3900 = vperm.xlu0 %3899, %v3849
      %v3901 = vpop.permute.xlu0 %3900
      %3902 = vset.pattern.permute.xlu0 0
      %3903 = vperm.xlu0 %3902, %v3850
      %v3904 = vpop.permute.xlu0 %3903
      %3905 = vset.pattern.permute.xlu0 0
      %3906 = vperm.xlu0 %3905, %v3851
      %v3907 = vpop.permute.xlu0 %3906
      %3908 = vset.pattern.permute.xlu0 0
      %3909 = vperm.xlu0 %3908, %v3852
      %v3910 = vpop.permute.xlu0 %3909
      %3911 = vset.pattern.permute.xlu0 0
      %3912 = vperm.xlu0 %3911, %v3853
      %v3913 = vpop.permute.xlu0 %3912
      %3914 = vset.pattern.permute.xlu0 0
      %3915 = vperm.xlu0 %3914, %v3854
      %v3916 = vpop.permute.xlu0 %3915
      %3917 = vset.pattern.permute.xlu0 0
      %3918 = vperm.xlu0 %3917, %v3855
      %v3919 = vpop.permute.xlu0 %3918
      %3920 = vset.pattern.permute.xlu0 0
      %3921 = vperm.xlu0 %3920, %v3856
      %v3922 = vpop.permute.xlu0 %3921
      %3923 = vset.pattern.permute.xlu0 0
      %3924 = vperm.xlu0 %3923, %v3857
      %v3925 = vpop.permute.xlu0 %3924
      %3926 = vset.pattern.permute.xlu0 0
      %3927 = vperm.xlu0 %3926, %v3858
      %v3928 = vpop.permute.xlu0 %3927
      %3929 = vset.pattern.permute.xlu0 0
      %3930 = vperm.xlu0 %3929, %v3859
      %v3931 = vpop.permute.xlu0 %3930
      %3932 = vset.pattern.permute.xlu0 0
      %3933 = vperm.xlu0 %3932, %v3860
      %v3934 = vpop.permute.xlu0 %3933
      %3935 = vset.pattern.permute.xlu0 0
      %3936 = vperm.xlu0 %3935, %v3861
      %v3937 = vpop.permute.xlu0 %3936
      %3938 = vset.pattern.permute.xlu0 0
      %3939 = vperm.xlu0 %3938, %v3862
      %v3940 = vpop.permute.xlu0 %3939
      %3941 = vset.pattern.permute.xlu0 0
      %3942 = vperm.xlu0 %3941, %v3863
      %v3943 = vpop.permute.xlu0 %3942
      %3944 = vset.pattern.permute.xlu0 0
      %3945 = vperm.xlu0 %3944, %v3864
      %v3946 = vpop.permute.xlu0 %3945
      %3947 = vset.pattern.permute.xlu0 0
      %3948 = vperm.xlu0 %3947, %v3865
      %v3949 = vpop.permute.xlu0 %3948
      %3950 = vset.pattern.permute.xlu0 0
      %3951 = vperm.xlu0 %3950, %v3866
      %v3952 = vpop.permute.xlu0 %3951
      %3953 = vset.pattern.permute.xlu0 0
      %3954 = vperm.xlu0 %3953, %v3867
      %v3955 = vpop.permute.xlu0 %3954
      %3956 = vset.pattern.permute.xlu0 0
      %3957 = vperm.xlu0 %3956, %v3868
      %v3958 = vpop.permute.xlu0 %3957
      %3959 = vset.pattern.permute.xlu0 0
      %3960 = vperm.xlu0 %3959, %v3869
      %v3961 = vpop.permute.xlu0 %3960
      %3962 = vset.pattern.permute.xlu0 0
      %3963 = vperm.xlu0 %3962, %v3870
      %v3964 = vpop.permute.xlu0 %3963
      %3965 = vset.pattern.permute.xlu0 0
      %3966 = vperm.xlu0 %3965, %v3871
      %v3967 = vpop.permute.xlu0 %3966
      %3968 = vset.pattern.permute.xlu0 0
      %3969 = vperm.xlu0 %3968, %v3872
      %v3970 = vpop.permute.xlu0 %3969
      %3971 = vset.pattern.permute.xlu0 0
      %3972 = vperm.xlu0 %3971, %v3873
      %v3973 = vpop.permute.xlu0 %3972
      %3974 = vset.pattern.permute.xlu0 0
      %3975 = vperm.xlu0 %3974, %v3874
      %v3976 = vpop.permute.xlu0 %3975
      %3977 = vset.pattern.permute.xlu0 0
      %3978 = vperm.xlu0 %3977, %v3875
      %v3979 = vpop.permute.xlu0 %3978
      %3980 = vset.pattern.permute.xlu0 0
      %3981 = vperm.xlu0 %3980, %v3876
      %v3982 = vpop.permute.xlu0 %3981
      %3983 = vset.pattern.permute.xlu0 0
      %3984 = vperm.xlu0 %3983, %v3877
      %v3985 = vpop.permute.xlu0 %3984
      %vm3986 = vcmp.eq.s32.totalorder %v3880, 1
      %vm3987 = vcmp.eq.s32.totalorder %v3883, 1
      %vm3988 = vcmp.eq.s32.totalorder %v3886, 1
      %vm3989 = vcmp.eq.s32.totalorder %v3889, 1
      %vm3990 = vcmp.eq.s32.totalorder %v3892, 1
      %vm3991 = vcmp.eq.s32.totalorder %v3895, 1
      %vm3992 = vcmp.eq.s32.totalorder %v3898, 1
      %vm3993 = vcmp.eq.s32.totalorder %v3901, 1
      %vm3994 = vcmp.eq.s32.totalorder %v3904, 1
      %vm3995 = vcmp.eq.s32.totalorder %v3907, 1
      %vm3996 = vcmp.eq.s32.totalorder %v3910, 1
      %vm3997 = vcmp.eq.s32.totalorder %v3913, 1
      %vm3998 = vcmp.eq.s32.totalorder %v3916, 1
      %vm3999 = vcmp.eq.s32.totalorder %v3919, 1
      %vm4000 = vcmp.eq.s32.totalorder %v3922, 1
      %vm4001 = vcmp.eq.s32.totalorder %v3925, 1
      %vm4002 = vcmp.eq.s32.totalorder %v3928, 1
      %vm4003 = vcmp.eq.s32.totalorder %v3931, 1
      %vm4004 = vcmp.eq.s32.totalorder %v3934, 1
      %vm4005 = vcmp.eq.s32.totalorder %v3937, 1
      %vm4006 = vcmp.eq.s32.totalorder %v3940, 1
      %vm4007 = vcmp.eq.s32.totalorder %v3943, 1
      %vm4008 = vcmp.eq.s32.totalorder %v3946, 1
      %vm4009 = vcmp.eq.s32.totalorder %v3949, 1
      %vm4010 = vcmp.eq.s32.totalorder %v3952, 1
      %vm4011 = vcmp.eq.s32.totalorder %v3955, 1
      %vm4012 = vcmp.eq.s32.totalorder %v3958, 1
      %vm4013 = vcmp.eq.s32.totalorder %v3961, 1
      %vm4014 = vcmp.eq.s32.totalorder %v3964, 1
      %vm4015 = vcmp.eq.s32.totalorder %v3967, 1
      %vm4016 = vcmp.eq.s32.totalorder %v3970, 1
      %vm4017 = vcmp.eq.s32.totalorder %v3973, 1
      %vm4018 = vcmp.eq.s32.totalorder %v3976, 1
      %vm4019 = vcmp.eq.s32.totalorder %v3979, 1
      %vm4020 = vcmp.eq.s32.totalorder %v3982, 1
      %vm4021 = vcmp.eq.s32.totalorder %v3985, 1
      %v4022 = vsel %vm3986, %v3623, 0.0
      %v4023 = vsel %vm3987, %v3624, 0.0
      %v4024 = vsel %vm3988, %v3625, 0.0
      %v4025 = vsel %vm3989, %v3626, 0.0
      %v4026 = vsel %vm3990, %v3627, 0.0
      %v4027 = vsel %vm3991, %v3628, 0.0
      %v4028 = vsel %vm3992, %v3629, 0.0
      %v4029 = vsel %vm3993, %v3630, 0.0
      %v4030 = vsel %vm3994, %v3631, 0.0
      %v4031 = vsel %vm3995, %v3632, 0.0
      %v4032 = vsel %vm3996, %v3633, 0.0
      %v4033 = vsel %vm3997, %v3634, 0.0
      %v4034 = vsel %vm3998, %v3635, 0.0
      %v4035 = vsel %vm3999, %v3636, 0.0
      %v4036 = vsel %vm4000, %v3637, 0.0
      %v4037 = vsel %vm4001, %v3638, 0.0
      %v4038 = vsel %vm4002, %v3639, 0.0
      %v4039 = vsel %vm4003, %v3640, 0.0
      %v4040 = vsel %vm4004, %v3641, 0.0
      %v4041 = vsel %vm4005, %v3642, 0.0
      %v4042 = vsel %vm4006, %v3643, 0.0
      %v4043 = vsel %vm4007, %v3644, 0.0
      %v4044 = vsel %vm4008, %v3645, 0.0
      %v4045 = vsel %vm4009, %v3646, 0.0
      %v4046 = vsel %vm4010, %v3647, 0.0
      %v4047 = vsel %vm4011, %v3648, 0.0
      %v4048 = vsel %vm4012, %v3649, 0.0
      %v4049 = vsel %vm4013, %v3650, 0.0
      %v4050 = vsel %vm4014, %v3651, 0.0
      %v4051 = vsel %vm4015, %v3652, 0.0
      %v4052 = vsel %vm4016, %v3653, 0.0
      %v4053 = vsel %vm4017, %v3654, 0.0
      %v4054 = vsel %vm4018, %v3655, 0.0
      %v4055 = vsel %vm4019, %v3656, 0.0
      %v4056 = vsel %vm4020, %v3657, 0.0
      %v4057 = vsel %vm4021, %v3658, 0.0
      %v4090 = vrot.slane %v4022, 7
      %v4091 = vsel %vm807, %v808, %v4090
      %v4092 = vrot.slane %v4023, 7
      %v4093 = vsel %vm807, %v4090, %v4092
      %v4094 = vrot.slane %v4024, 7
      %v4095 = vsel %vm807, %v4092, %v4094
      %v4096 = vrot.slane %v4025, 7
      %v4097 = vsel %vm807, %v4094, %v4096
      %v4098 = vrot.slane %v4026, 7
      %v4099 = vsel %vm807, %v4096, %v4098
      %v4100 = vrot.slane %v4027, 7
      %v4101 = vsel %vm807, %v4098, %v4100
      %v4102 = vrot.slane %v4028, 7
      %v4103 = vsel %vm807, %v4100, %v4102
      %v4104 = vrot.slane %v4029, 7
      %v4105 = vsel %vm807, %v4102, %v4104
      %v4106 = vrot.slane %v4030, 7
      %v4107 = vsel %vm807, %v4104, %v4106
      %v4108 = vrot.slane %v4031, 7
      %v4109 = vsel %vm807, %v4106, %v4108
      %v4110 = vrot.slane %v4032, 7
      %v4111 = vsel %vm807, %v4108, %v4110
      %v4112 = vrot.slane %v4033, 7
      %v4113 = vsel %vm807, %v4110, %v4112
      %v4114 = vrot.slane %v4034, 7
      %v4115 = vsel %vm807, %v4112, %v4114
      %v4116 = vrot.slane %v4035, 7
      %v4117 = vsel %vm807, %v4114, %v4116
      %v4118 = vrot.slane %v4036, 7
      %v4119 = vsel %vm807, %v4116, %v4118
      %v4120 = vrot.slane %v4037, 7
      %v4121 = vsel %vm807, %v4118, %v4120
      %v4122 = vrot.slane %v4038, 7
      %v4123 = vsel %vm807, %v4120, %v4122
      %v4124 = vrot.slane %v4039, 7
      %v4125 = vsel %vm807, %v4122, %v4124
      %v4126 = vrot.slane %v4040, 7
      %v4127 = vsel %vm807, %v4124, %v4126
      %v4128 = vrot.slane %v4041, 7
      %v4129 = vsel %vm807, %v4126, %v4128
      %v4130 = vrot.slane %v4042, 7
      %v4131 = vsel %vm807, %v4128, %v4130
      %v4132 = vrot.slane %v4043, 7
      %v4133 = vsel %vm807, %v4130, %v4132
      %v4134 = vrot.slane %v4044, 7
      %v4135 = vsel %vm807, %v4132, %v4134
      %v4136 = vrot.slane %v4045, 7
      %v4137 = vsel %vm807, %v4134, %v4136
      %v4138 = vrot.slane %v4046, 7
      %v4139 = vsel %vm807, %v4136, %v4138
      %v4140 = vrot.slane %v4047, 7
      %v4141 = vsel %vm807, %v4138, %v4140
      %v4142 = vrot.slane %v4048, 7
      %v4143 = vsel %vm807, %v4140, %v4142
      %v4144 = vrot.slane %v4049, 7
      %v4145 = vsel %vm807, %v4142, %v4144
      %v4146 = vrot.slane %v4050, 7
      %v4147 = vsel %vm807, %v4144, %v4146
      %v4148 = vrot.slane %v4051, 7
      %v4149 = vsel %vm807, %v4146, %v4148
      %v4150 = vrot.slane %v4052, 7
      %v4151 = vsel %vm807, %v4148, %v4150
      %v4152 = vrot.slane %v4053, 7
      %v4153 = vsel %vm807, %v4150, %v4152
      %v4186 = vsel %vm734, %v4091, 0.0
      %v4187 = vsel %vm735, %v4093, 0.0
      %v4188 = vsel %vm736, %v4095, 0.0
      %v4189 = vsel %vm737, %v4097, 0.0
      %v4190 = vsel %vm738, %v4099, 0.0
      %v4191 = vsel %vm739, %v4101, 0.0
      %v4192 = vsel %vm740, %v4103, 0.0
      %v4193 = vsel %vm741, %v4105, 0.0
      %v4194 = vsel %vm742, %v4107, 0.0
      %v4195 = vsel %vm743, %v4109, 0.0
      %v4196 = vsel %vm744, %v4111, 0.0
      %v4197 = vsel %vm745, %v4113, 0.0
      %v4198 = vsel %vm746, %v4115, 0.0
      %v4199 = vsel %vm747, %v4117, 0.0
      %v4200 = vsel %vm748, %v4119, 0.0
      %v4201 = vsel %vm749, %v4121, 0.0
      %v4202 = vsel %vm750, %v4123, 0.0
      %v4203 = vsel %vm751, %v4125, 0.0
      %v4204 = vsel %vm752, %v4127, 0.0
      %v4205 = vsel %vm753, %v4129, 0.0
      %v4206 = vsel %vm754, %v4131, 0.0
      %v4207 = vsel %vm755, %v4133, 0.0
      %v4208 = vsel %vm756, %v4135, 0.0
      %v4209 = vsel %vm757, %v4137, 0.0
      %v4210 = vsel %vm758, %v4139, 0.0
      %v4211 = vsel %vm759, %v4141, 0.0
      %v4212 = vsel %vm760, %v4143, 0.0
      %v4213 = vsel %vm761, %v4145, 0.0
      %v4214 = vsel %vm762, %v4147, 0.0
      %v4215 = vsel %vm763, %v4149, 0.0
      %v4216 = vsel %vm764, %v4151, 0.0
      %v4217 = vsel %vm765, %v4153, 0.0
      %v4218 = vld [vmem:[%s4] sm:$0xff]
      %s4219 = scalar_lea.vmem %s4, 8
      %v4220 = vld [vmem:[%s4219] sm:$0xff]
      %vm4221 = vcmask 64512
      %v4222 = vsel %vm4221, %v4022, 0
      %v4224 = vsel %vm4221, %v4023, 0
      %v4226 = vsel %vm4221, %v4024, 0
      %v4228 = vsel %vm4221, %v4025, 0
      %v4230 = vsel %vm4221, %v4026, 0
      %v4232 = vsel %vm4221, %v4027, 0
      %v4234 = vsel %vm4221, %v4028, 0
      %v4236 = vsel %vm4221, %v4029, 0
      %v4238 = vsel %vm4221, %v4030, 0
      %v4240 = vsel %vm4221, %v4031, 0
      %v4242 = vsel %vm4221, %v4032, 0
      %v4244 = vsel %vm4221, %v4033, 0
      %v4246 = vsel %vm4221, %v4034, 0
      %v4248 = vsel %vm4221, %v4035, 0
      %v4250 = vsel %vm4221, %v4036, 0
      %v4252 = vsel %vm4221, %v4037, 0
      %v4254 = vsel %vm4221, %v4038, 0
      %v4256 = vsel %vm4221, %v4039, 0
      %v4258 = vsel %vm4221, %v4040, 0
      %v4260 = vsel %vm4221, %v4041, 0
      %v4262 = vsel %vm4221, %v4042, 0
      %v4264 = vsel %vm4221, %v4043, 0
      %v4266 = vsel %vm4221, %v4044, 0
      %v4268 = vsel %vm4221, %v4045, 0
      %v4270 = vsel %vm4221, %v4046, 0
      %v4272 = vsel %vm4221, %v4047, 0
      %v4274 = vsel %vm4221, %v4048, 0
      %v4276 = vsel %vm4221, %v4049, 0
      %v4278 = vsel %vm4221, %v4050, 0
      %v4280 = vsel %vm4221, %v4051, 0
      %v4282 = vsel %vm4221, %v4052, 0
      %v4284 = vsel %vm4221, %v4053, 0
      %4286 = vmatpush.msra.mxu0 0.0
      %4287 = vmatpush.msra.mxu0 0.0
      %4288 = vmatpush.msra.mxu0 0.0
      %4289 = vmatpush.msra.mxu0 0.0
      %4290 = vmatpush.msra.mxu0 0.0
      %4291 = vmatpush.msra.mxu0 0.0
      %4292 = vmatpush.msra.mxu0 0.0
      %4293 = vmatpush.msra.mxu0 0.0
      %4294 = vmatpush.msra.mxu0 0.0
      %4295 = vmatpush.msra.mxu0 0.0
      %4296 = vmatpush.msra.mxu0 0.0
      %4297 = vmatpush.msra.mxu0 0.0
      %4298 = vmatpush.msra.mxu0 0.0
      %4299 = vmatpush.msra.mxu0 0.0
      %4300 = vmatpush.msra.mxu0 0.0
      %4301 = vmatpush.msra.mxu0 %v4220
      %4302 = vmatmul.f32.gmra.mxu0 %v4222
      %v4303 = vpop.f32.mrf.mxu0
      %v4304 = vadd.f32 0.0, %v4303
      %4305 = vmatmul.f32.gmra.mxu0 %v4224
      %v4306 = vpop.f32.mrf.mxu0
      %v4307 = vadd.f32 0.0, %v4306
      %4308 = vmatmul.f32.gmra.mxu0 %v4226
      %v4309 = vpop.f32.mrf.mxu0
      %v4310 = vadd.f32 0.0, %v4309
      %4311 = vmatmul.f32.gmra.mxu0 %v4228
      %v4312 = vpop.f32.mrf.mxu0
      %v4313 = vadd.f32 0.0, %v4312
      %4314 = vmatmul.f32.gmra.mxu0 %v4230
      %v4315 = vpop.f32.mrf.mxu0
      %v4316 = vadd.f32 0.0, %v4315
      %4317 = vmatmul.f32.gmra.mxu0 %v4232
      %v4318 = vpop.f32.mrf.mxu0
      %v4319 = vadd.f32 0.0, %v4318
      %4320 = vmatmul.f32.gmra.mxu0 %v4234
      %v4321 = vpop.f32.mrf.mxu0
      %v4322 = vadd.f32 0.0, %v4321
      %4323 = vmatmul.f32.gmra.mxu0 %v4236
      %v4324 = vpop.f32.mrf.mxu0
      %v4325 = vadd.f32 0.0, %v4324
      %4326 = vmatmul.f32.gmra.mxu0 %v4238
      %v4327 = vpop.f32.mrf.mxu0
      %v4328 = vadd.f32 0.0, %v4327
      %4329 = vmatmul.f32.gmra.mxu0 %v4240
      %v4330 = vpop.f32.mrf.mxu0
      %v4331 = vadd.f32 0.0, %v4330
      %4332 = vmatmul.f32.gmra.mxu0 %v4242
      %v4333 = vpop.f32.mrf.mxu0
      %v4334 = vadd.f32 0.0, %v4333
      %4335 = vmatmul.f32.gmra.mxu0 %v4244
      %v4336 = vpop.f32.mrf.mxu0
      %v4337 = vadd.f32 0.0, %v4336
      %4338 = vmatmul.f32.gmra.mxu0 %v4246
      %v4339 = vpop.f32.mrf.mxu0
      %v4340 = vadd.f32 0.0, %v4339
      %4341 = vmatmul.f32.gmra.mxu0 %v4248
      %v4342 = vpop.f32.mrf.mxu0
      %v4343 = vadd.f32 0.0, %v4342
      %4344 = vmatmul.f32.gmra.mxu0 %v4250
      %v4345 = vpop.f32.mrf.mxu0
      %v4346 = vadd.f32 0.0, %v4345
      %4347 = vmatmul.f32.gmra.mxu0 %v4252
      %v4348 = vpop.f32.mrf.mxu0
      %v4349 = vadd.f32 0.0, %v4348
      %4350 = vmatmul.f32.gmra.mxu0 %v4254
      %v4351 = vpop.f32.mrf.mxu0
      %v4352 = vadd.f32 0.0, %v4351
      %4353 = vmatmul.f32.gmra.mxu0 %v4256
      %v4354 = vpop.f32.mrf.mxu0
      %v4355 = vadd.f32 0.0, %v4354
      %4356 = vmatmul.f32.gmra.mxu0 %v4258
      %v4357 = vpop.f32.mrf.mxu0
      %v4358 = vadd.f32 0.0, %v4357
      %4359 = vmatmul.f32.gmra.mxu0 %v4260
      %v4360 = vpop.f32.mrf.mxu0
      %v4361 = vadd.f32 0.0, %v4360
      %4362 = vmatmul.f32.gmra.mxu0 %v4262
      %v4363 = vpop.f32.mrf.mxu0
      %v4364 = vadd.f32 0.0, %v4363
      %4365 = vmatmul.f32.gmra.mxu0 %v4264
      %v4366 = vpop.f32.mrf.mxu0
      %v4367 = vadd.f32 0.0, %v4366
      %4368 = vmatmul.f32.gmra.mxu0 %v4266
      %v4369 = vpop.f32.mrf.mxu0
      %v4370 = vadd.f32 0.0, %v4369
      %4371 = vmatmul.f32.gmra.mxu0 %v4268
      %v4372 = vpop.f32.mrf.mxu0
      %v4373 = vadd.f32 0.0, %v4372
      %4374 = vmatmul.f32.gmra.mxu0 %v4270
      %v4375 = vpop.f32.mrf.mxu0
      %v4376 = vadd.f32 0.0, %v4375
      %4377 = vmatmul.f32.gmra.mxu0 %v4272
      %v4378 = vpop.f32.mrf.mxu0
      %v4379 = vadd.f32 0.0, %v4378
      %4380 = vmatmul.f32.gmra.mxu0 %v4274
      %v4381 = vpop.f32.mrf.mxu0
      %v4382 = vadd.f32 0.0, %v4381
      %4383 = vmatmul.f32.gmra.mxu0 %v4276
      %v4384 = vpop.f32.mrf.mxu0
      %v4385 = vadd.f32 0.0, %v4384
      %4386 = vmatmul.f32.gmra.mxu0 %v4278
      %v4387 = vpop.f32.mrf.mxu0
      %v4388 = vadd.f32 0.0, %v4387
      %4389 = vmatmul.f32.gmra.mxu0 %v4280
      %v4390 = vpop.f32.mrf.mxu0
      %v4391 = vadd.f32 0.0, %v4390
      %4392 = vmatmul.f32.gmra.mxu0 %v4282
      %v4393 = vpop.f32.mrf.mxu0
      %v4394 = vadd.f32 0.0, %v4393
      %4395 = vmatmul.f32.gmra.mxu0 %v4284
      %v4396 = vpop.f32.mrf.mxu0
      %v4397 = vadd.f32 0.0, %v4396
      %4398 = vdwg.mxu0
      %v4400 = vsel %vm4221, %v4186, 0
      %v4403 = vsel %vm4221, %v4187, 0
      %v4406 = vsel %vm4221, %v4188, 0
      %v4409 = vsel %vm4221, %v4189, 0
      %v4412 = vsel %vm4221, %v4190, 0
      %v4415 = vsel %vm4221, %v4191, 0
      %v4418 = vsel %vm4221, %v4192, 0
      %v4421 = vsel %vm4221, %v4193, 0
      %v4424 = vsel %vm4221, %v4194, 0
      %v4427 = vsel %vm4221, %v4195, 0
      %v4430 = vsel %vm4221, %v4196, 0
      %v4433 = vsel %vm4221, %v4197, 0
      %v4436 = vsel %vm4221, %v4198, 0
      %v4439 = vsel %vm4221, %v4199, 0
      %v4442 = vsel %vm4221, %v4200, 0
      %v4445 = vsel %vm4221, %v4201, 0
      %v4448 = vsel %vm4221, %v4202, 0
      %v4451 = vsel %vm4221, %v4203, 0
      %v4454 = vsel %vm4221, %v4204, 0
      %v4457 = vsel %vm4221, %v4205, 0
      %v4460 = vsel %vm4221, %v4206, 0
      %v4463 = vsel %vm4221, %v4207, 0
      %v4466 = vsel %vm4221, %v4208, 0
      %v4469 = vsel %vm4221, %v4209, 0
      %v4472 = vsel %vm4221, %v4210, 0
      %v4475 = vsel %vm4221, %v4211, 0
      %v4478 = vsel %vm4221, %v4212, 0
      %v4481 = vsel %vm4221, %v4213, 0
      %v4484 = vsel %vm4221, %v4214, 0
      %v4487 = vsel %vm4221, %v4215, 0
      %v4490 = vsel %vm4221, %v4216, 0
      %v4493 = vsel %vm4221, %v4217, 0
      %4495 = vmatpush.msra.mxu0 0.0
      %4496 = vmatpush.msra.mxu0 0.0
      %4497 = vmatpush.msra.mxu0 0.0
      %4498 = vmatpush.msra.mxu0 0.0
      %4499 = vmatpush.msra.mxu0 0.0
      %4500 = vmatpush.msra.mxu0 0.0
      %4501 = vmatpush.msra.mxu0 0.0
      %4502 = vmatpush.msra.mxu0 0.0
      %4503 = vmatpush.msra.mxu0 0.0
      %4504 = vmatpush.msra.mxu0 0.0
      %4505 = vmatpush.msra.mxu0 0.0
      %4506 = vmatpush.msra.mxu0 0.0
      %4507 = vmatpush.msra.mxu0 0.0
      %4508 = vmatpush.msra.mxu0 0.0
      %4509 = vmatpush.msra.mxu0 0.0
      %4510 = vmatpush.msra.mxu0 %v4218
      %4511 = vmatmul.f32.gmra.mxu0 %v4400
      %v4512 = vpop.f32.mrf.mxu0
      %v4513 = vadd.f32 %v4304, %v4512
      %4514 = vmatmul.f32.gmra.mxu0 %v4403
      %v4515 = vpop.f32.mrf.mxu0
      %v4516 = vadd.f32 %v4307, %v4515
      %4517 = vmatmul.f32.gmra.mxu0 %v4406
      %v4518 = vpop.f32.mrf.mxu0
      %v4519 = vadd.f32 %v4310, %v4518
      %4520 = vmatmul.f32.gmra.mxu0 %v4409
      %v4521 = vpop.f32.mrf.mxu0
      %v4522 = vadd.f32 %v4313, %v4521
      %4523 = vmatmul.f32.gmra.mxu0 %v4412
      %v4524 = vpop.f32.mrf.mxu0
      %v4525 = vadd.f32 %v4316, %v4524
      %4526 = vmatmul.f32.gmra.mxu0 %v4415
      %v4527 = vpop.f32.mrf.mxu0
      %v4528 = vadd.f32 %v4319, %v4527
      %4529 = vmatmul.f32.gmra.mxu0 %v4418
      %v4530 = vpop.f32.mrf.mxu0
      %v4531 = vadd.f32 %v4322, %v4530
      %4532 = vmatmul.f32.gmra.mxu0 %v4421
      %v4533 = vpop.f32.mrf.mxu0
      %v4534 = vadd.f32 %v4325, %v4533
      %4535 = vmatmul.f32.gmra.mxu0 %v4424
      %v4536 = vpop.f32.mrf.mxu0
      %v4537 = vadd.f32 %v4328, %v4536
      %4538 = vmatmul.f32.gmra.mxu0 %v4427
      %v4539 = vpop.f32.mrf.mxu0
      %v4540 = vadd.f32 %v4331, %v4539
      %4541 = vmatmul.f32.gmra.mxu0 %v4430
      %v4542 = vpop.f32.mrf.mxu0
      %v4543 = vadd.f32 %v4334, %v4542
      %4544 = vmatmul.f32.gmra.mxu0 %v4433
      %v4545 = vpop.f32.mrf.mxu0
      %v4546 = vadd.f32 %v4337, %v4545
      %4547 = vmatmul.f32.gmra.mxu0 %v4436
      %v4548 = vpop.f32.mrf.mxu0
      %v4549 = vadd.f32 %v4340, %v4548
      %4550 = vmatmul.f32.gmra.mxu0 %v4439
      %v4551 = vpop.f32.mrf.mxu0
      %v4552 = vadd.f32 %v4343, %v4551
      %4553 = vmatmul.f32.gmra.mxu0 %v4442
      %v4554 = vpop.f32.mrf.mxu0
      %v4555 = vadd.f32 %v4346, %v4554
      %4556 = vmatmul.f32.gmra.mxu0 %v4445
      %v4557 = vpop.f32.mrf.mxu0
      %v4558 = vadd.f32 %v4349, %v4557
      %4559 = vmatmul.f32.gmra.mxu0 %v4448
      %v4560 = vpop.f32.mrf.mxu0
      %v4561 = vadd.f32 %v4352, %v4560
      %4562 = vmatmul.f32.gmra.mxu0 %v4451
      %v4563 = vpop.f32.mrf.mxu0
      %v4564 = vadd.f32 %v4355, %v4563
      %4565 = vmatmul.f32.gmra.mxu0 %v4454
      %v4566 = vpop.f32.mrf.mxu0
      %v4567 = vadd.f32 %v4358, %v4566
      %4568 = vmatmul.f32.gmra.mxu0 %v4457
      %v4569 = vpop.f32.mrf.mxu0
      %v4570 = vadd.f32 %v4361, %v4569
      %4571 = vmatmul.f32.gmra.mxu0 %v4460
      %v4572 = vpop.f32.mrf.mxu0
      %v4573 = vadd.f32 %v4364, %v4572
      %4574 = vmatmul.f32.gmra.mxu0 %v4463
      %v4575 = vpop.f32.mrf.mxu0
      %v4576 = vadd.f32 %v4367, %v4575
      %4577 = vmatmul.f32.gmra.mxu0 %v4466
      %v4578 = vpop.f32.mrf.mxu0
      %v4579 = vadd.f32 %v4370, %v4578
      %4580 = vmatmul.f32.gmra.mxu0 %v4469
      %v4581 = vpop.f32.mrf.mxu0
      %v4582 = vadd.f32 %v4373, %v4581
      %4583 = vmatmul.f32.gmra.mxu0 %v4472
      %v4584 = vpop.f32.mrf.mxu0
      %v4585 = vadd.f32 %v4376, %v4584
      %4586 = vmatmul.f32.gmra.mxu0 %v4475
      %v4587 = vpop.f32.mrf.mxu0
      %v4588 = vadd.f32 %v4379, %v4587
      %4589 = vmatmul.f32.gmra.mxu0 %v4478
      %v4590 = vpop.f32.mrf.mxu0
      %v4591 = vadd.f32 %v4382, %v4590
      %4592 = vmatmul.f32.gmra.mxu0 %v4481
      %v4593 = vpop.f32.mrf.mxu0
      %v4594 = vadd.f32 %v4385, %v4593
      %4595 = vmatmul.f32.gmra.mxu0 %v4484
      %v4596 = vpop.f32.mrf.mxu0
      %v4597 = vadd.f32 %v4388, %v4596
      %4598 = vmatmul.f32.gmra.mxu0 %v4487
      %v4599 = vpop.f32.mrf.mxu0
      %v4600 = vadd.f32 %v4391, %v4599
      %4601 = vmatmul.f32.gmra.mxu0 %v4490
      %v4602 = vpop.f32.mrf.mxu0
      %v4603 = vadd.f32 %v4394, %v4602
      %4604 = vmatmul.f32.gmra.mxu0 %v4493
      %v4605 = vpop.f32.mrf.mxu0
      %v4606 = vadd.f32 %v4397, %v4605
      %4607 = vdwg.mxu0
      %v4609 = vrot.slane %v4022, 1
      %v4610 = vrot.slane %v4023, 1
      %v4611 = vsel %vm1570, %v4609, %v4610
      %v4612 = vrot.slane %v4024, 1
      %v4613 = vsel %vm1570, %v4610, %v4612
      %v4614 = vrot.slane %v4025, 1
      %v4615 = vsel %vm1570, %v4612, %v4614
      %v4616 = vrot.slane %v4026, 1
      %v4617 = vsel %vm1570, %v4614, %v4616
      %v4618 = vrot.slane %v4027, 1
      %v4619 = vsel %vm1570, %v4616, %v4618
      %v4620 = vrot.slane %v4028, 1
      %v4621 = vsel %vm1570, %v4618, %v4620
      %v4622 = vrot.slane %v4029, 1
      %v4623 = vsel %vm1570, %v4620, %v4622
      %v4624 = vrot.slane %v4030, 1
      %v4625 = vsel %vm1570, %v4622, %v4624
      %v4626 = vrot.slane %v4031, 1
      %v4627 = vsel %vm1570, %v4624, %v4626
      %v4628 = vrot.slane %v4032, 1
      %v4629 = vsel %vm1570, %v4626, %v4628
      %v4630 = vrot.slane %v4033, 1
      %v4631 = vsel %vm1570, %v4628, %v4630
      %v4632 = vrot.slane %v4034, 1
      %v4633 = vsel %vm1570, %v4630, %v4632
      %v4634 = vrot.slane %v4035, 1
      %v4635 = vsel %vm1570, %v4632, %v4634
      %v4636 = vrot.slane %v4036, 1
      %v4637 = vsel %vm1570, %v4634, %v4636
      %v4638 = vrot.slane %v4037, 1
      %v4639 = vsel %vm1570, %v4636, %v4638
      %v4640 = vrot.slane %v4038, 1
      %v4641 = vsel %vm1570, %v4638, %v4640
      %v4642 = vrot.slane %v4039, 1
      %v4643 = vsel %vm1570, %v4640, %v4642
      %v4644 = vrot.slane %v4040, 1
      %v4645 = vsel %vm1570, %v4642, %v4644
      %v4646 = vrot.slane %v4041, 1
      %v4647 = vsel %vm1570, %v4644, %v4646
      %v4648 = vrot.slane %v4042, 1
      %v4649 = vsel %vm1570, %v4646, %v4648
      %v4650 = vrot.slane %v4043, 1
      %v4651 = vsel %vm1570, %v4648, %v4650
      %v4652 = vrot.slane %v4044, 1
      %v4653 = vsel %vm1570, %v4650, %v4652
      %v4654 = vrot.slane %v4045, 1
      %v4655 = vsel %vm1570, %v4652, %v4654
      %v4656 = vrot.slane %v4046, 1
      %v4657 = vsel %vm1570, %v4654, %v4656
      %v4658 = vrot.slane %v4047, 1
      %v4659 = vsel %vm1570, %v4656, %v4658
      %v4660 = vrot.slane %v4048, 1
      %v4661 = vsel %vm1570, %v4658, %v4660
      %v4662 = vrot.slane %v4049, 1
      %v4663 = vsel %vm1570, %v4660, %v4662
      %v4664 = vrot.slane %v4050, 1
      %v4665 = vsel %vm1570, %v4662, %v4664
      %v4666 = vrot.slane %v4051, 1
      %v4667 = vsel %vm1570, %v4664, %v4666
      %v4668 = vrot.slane %v4052, 1
      %v4669 = vsel %vm1570, %v4666, %v4668
      %v4670 = vrot.slane %v4053, 1
      %v4671 = vsel %vm1570, %v4668, %v4670
      %v4672 = vrot.slane %v4054, 1
      %v4673 = vsel %vm1570, %v4670, %v4672
      %v4706 = vsel %vm1533, %v4611, 0.0
      %v4707 = vsel %vm1534, %v4613, 0.0
      %v4708 = vsel %vm1535, %v4615, 0.0
      %v4709 = vsel %vm1536, %v4617, 0.0
      %v4710 = vsel %vm1537, %v4619, 0.0
      %v4711 = vsel %vm1538, %v4621, 0.0
      %v4712 = vsel %vm1539, %v4623, 0.0
      %v4713 = vsel %vm1540, %v4625, 0.0
      %v4714 = vsel %vm1541, %v4627, 0.0
      %v4715 = vsel %vm1542, %v4629, 0.0
      %v4716 = vsel %vm1543, %v4631, 0.0
      %v4717 = vsel %vm1544, %v4633, 0.0
      %v4718 = vsel %vm1545, %v4635, 0.0
      %v4719 = vsel %vm1546, %v4637, 0.0
      %v4720 = vsel %vm1547, %v4639, 0.0
      %v4721 = vsel %vm1548, %v4641, 0.0
      %v4722 = vsel %vm1549, %v4643, 0.0
      %v4723 = vsel %vm1550, %v4645, 0.0
      %v4724 = vsel %vm1551, %v4647, 0.0
      %v4725 = vsel %vm1552, %v4649, 0.0
      %v4726 = vsel %vm1553, %v4651, 0.0
      %v4727 = vsel %vm1554, %v4653, 0.0
      %v4728 = vsel %vm1555, %v4655, 0.0
      %v4729 = vsel %vm1556, %v4657, 0.0
      %v4730 = vsel %vm1557, %v4659, 0.0
      %v4731 = vsel %vm1558, %v4661, 0.0
      %v4732 = vsel %vm1559, %v4663, 0.0
      %v4733 = vsel %vm1560, %v4665, 0.0
      %v4734 = vsel %vm1561, %v4667, 0.0
      %v4735 = vsel %vm1562, %v4669, 0.0
      %v4736 = vsel %vm1563, %v4671, 0.0
      %v4737 = vsel %vm1564, %v4673, 0.0
      %s4738 = scalar_lea.vmem %s4, 16
      %v4739 = vld [vmem:[%s4738] sm:$0xff]
      %v4741 = vsel %vm4221, %v4706, 0
      %v4744 = vsel %vm4221, %v4707, 0
      %v4747 = vsel %vm4221, %v4708, 0
      %v4750 = vsel %vm4221, %v4709, 0
      %v4753 = vsel %vm4221, %v4710, 0
      %v4756 = vsel %vm4221, %v4711, 0
      %v4759 = vsel %vm4221, %v4712, 0
      %v4762 = vsel %vm4221, %v4713, 0
      %v4765 = vsel %vm4221, %v4714, 0
      %v4768 = vsel %vm4221, %v4715, 0
      %v4771 = vsel %vm4221, %v4716, 0
      %v4774 = vsel %vm4221, %v4717, 0
      %v4777 = vsel %vm4221, %v4718, 0
      %v4780 = vsel %vm4221, %v4719, 0
      %v4783 = vsel %vm4221, %v4720, 0
      %v4786 = vsel %vm4221, %v4721, 0
      %v4789 = vsel %vm4221, %v4722, 0
      %v4792 = vsel %vm4221, %v4723, 0
      %v4795 = vsel %vm4221, %v4724, 0
      %v4798 = vsel %vm4221, %v4725, 0
      %v4801 = vsel %vm4221, %v4726, 0
      %v4804 = vsel %vm4221, %v4727, 0
      %v4807 = vsel %vm4221, %v4728, 0
      %v4810 = vsel %vm4221, %v4729, 0
      %v4813 = vsel %vm4221, %v4730, 0
      %v4816 = vsel %vm4221, %v4731, 0
      %v4819 = vsel %vm4221, %v4732, 0
      %v4822 = vsel %vm4221, %v4733, 0
      %v4825 = vsel %vm4221, %v4734, 0
      %v4828 = vsel %vm4221, %v4735, 0
      %v4831 = vsel %vm4221, %v4736, 0
      %v4834 = vsel %vm4221, %v4737, 0
      %4836 = vmatpush.msra.mxu0 0.0
      %4837 = vmatpush.msra.mxu0 0.0
      %4838 = vmatpush.msra.mxu0 0.0
      %4839 = vmatpush.msra.mxu0 0.0
      %4840 = vmatpush.msra.mxu0 0.0
      %4841 = vmatpush.msra.mxu0 0.0
      %4842 = vmatpush.msra.mxu0 0.0
      %4843 = vmatpush.msra.mxu0 0.0
      %4844 = vmatpush.msra.mxu0 0.0
      %4845 = vmatpush.msra.mxu0 0.0
      %4846 = vmatpush.msra.mxu0 0.0
      %4847 = vmatpush.msra.mxu0 0.0
      %4848 = vmatpush.msra.mxu0 0.0
      %4849 = vmatpush.msra.mxu0 0.0
      %4850 = vmatpush.msra.mxu0 0.0
      %4851 = vmatpush.msra.mxu0 %v4739
      %4852 = vmatmul.f32.gmra.mxu0 %v4741
      %v4853 = vpop.f32.mrf.mxu0
      %v4854 = vadd.f32 0.0, %v4853
      %4855 = vmatmul.f32.gmra.mxu0 %v4744
      %v4856 = vpop.f32.mrf.mxu0
      %v4857 = vadd.f32 0.0, %v4856
      %4858 = vmatmul.f32.gmra.mxu0 %v4747
      %v4859 = vpop.f32.mrf.mxu0
      %v4860 = vadd.f32 0.0, %v4859
      %4861 = vmatmul.f32.gmra.mxu0 %v4750
      %v4862 = vpop.f32.mrf.mxu0
      %v4863 = vadd.f32 0.0, %v4862
      %4864 = vmatmul.f32.gmra.mxu0 %v4753
      %v4865 = vpop.f32.mrf.mxu0
      %v4866 = vadd.f32 0.0, %v4865
      %4867 = vmatmul.f32.gmra.mxu0 %v4756
      %v4868 = vpop.f32.mrf.mxu0
      %v4869 = vadd.f32 0.0, %v4868
      %4870 = vmatmul.f32.gmra.mxu0 %v4759
      %v4871 = vpop.f32.mrf.mxu0
      %v4872 = vadd.f32 0.0, %v4871
      %4873 = vmatmul.f32.gmra.mxu0 %v4762
      %v4874 = vpop.f32.mrf.mxu0
      %v4875 = vadd.f32 0.0, %v4874
      %4876 = vmatmul.f32.gmra.mxu0 %v4765
      %v4877 = vpop.f32.mrf.mxu0
      %v4878 = vadd.f32 0.0, %v4877
      %4879 = vmatmul.f32.gmra.mxu0 %v4768
      %v4880 = vpop.f32.mrf.mxu0
      %v4881 = vadd.f32 0.0, %v4880
      %4882 = vmatmul.f32.gmra.mxu0 %v4771
      %v4883 = vpop.f32.mrf.mxu0
      %v4884 = vadd.f32 0.0, %v4883
      %4885 = vmatmul.f32.gmra.mxu0 %v4774
      %v4886 = vpop.f32.mrf.mxu0
      %v4887 = vadd.f32 0.0, %v4886
      %4888 = vmatmul.f32.gmra.mxu0 %v4777
      %v4889 = vpop.f32.mrf.mxu0
      %v4890 = vadd.f32 0.0, %v4889
      %4891 = vmatmul.f32.gmra.mxu0 %v4780
      %v4892 = vpop.f32.mrf.mxu0
      %v4893 = vadd.f32 0.0, %v4892
      %4894 = vmatmul.f32.gmra.mxu0 %v4783
      %v4895 = vpop.f32.mrf.mxu0
      %v4896 = vadd.f32 0.0, %v4895
      %4897 = vmatmul.f32.gmra.mxu0 %v4786
      %v4898 = vpop.f32.mrf.mxu0
      %v4899 = vadd.f32 0.0, %v4898
      %4900 = vmatmul.f32.gmra.mxu0 %v4789
      %v4901 = vpop.f32.mrf.mxu0
      %v4902 = vadd.f32 0.0, %v4901
      %4903 = vmatmul.f32.gmra.mxu0 %v4792
      %v4904 = vpop.f32.mrf.mxu0
      %v4905 = vadd.f32 0.0, %v4904
      %4906 = vmatmul.f32.gmra.mxu0 %v4795
      %v4907 = vpop.f32.mrf.mxu0
      %v4908 = vadd.f32 0.0, %v4907
      %4909 = vmatmul.f32.gmra.mxu0 %v4798
      %v4910 = vpop.f32.mrf.mxu0
      %v4911 = vadd.f32 0.0, %v4910
      %4912 = vmatmul.f32.gmra.mxu0 %v4801
      %v4913 = vpop.f32.mrf.mxu0
      %v4914 = vadd.f32 0.0, %v4913
      %4915 = vmatmul.f32.gmra.mxu0 %v4804
      %v4916 = vpop.f32.mrf.mxu0
      %v4917 = vadd.f32 0.0, %v4916
      %4918 = vmatmul.f32.gmra.mxu0 %v4807
      %v4919 = vpop.f32.mrf.mxu0
      %v4920 = vadd.f32 0.0, %v4919
      %4921 = vmatmul.f32.gmra.mxu0 %v4810
      %v4922 = vpop.f32.mrf.mxu0
      %v4923 = vadd.f32 0.0, %v4922
      %4924 = vmatmul.f32.gmra.mxu0 %v4813
      %v4925 = vpop.f32.mrf.mxu0
      %v4926 = vadd.f32 0.0, %v4925
      %4927 = vmatmul.f32.gmra.mxu0 %v4816
      %v4928 = vpop.f32.mrf.mxu0
      %v4929 = vadd.f32 0.0, %v4928
      %4930 = vmatmul.f32.gmra.mxu0 %v4819
      %v4931 = vpop.f32.mrf.mxu0
      %v4932 = vadd.f32 0.0, %v4931
      %4933 = vmatmul.f32.gmra.mxu0 %v4822
      %v4934 = vpop.f32.mrf.mxu0
      %v4935 = vadd.f32 0.0, %v4934
      %4936 = vmatmul.f32.gmra.mxu0 %v4825
      %v4937 = vpop.f32.mrf.mxu0
      %v4938 = vadd.f32 0.0, %v4937
      %4939 = vmatmul.f32.gmra.mxu0 %v4828
      %v4940 = vpop.f32.mrf.mxu0
      %v4941 = vadd.f32 0.0, %v4940
      %4942 = vmatmul.f32.gmra.mxu0 %v4831
      %v4943 = vpop.f32.mrf.mxu0
      %v4944 = vadd.f32 0.0, %v4943
      %4945 = vmatmul.f32.gmra.mxu0 %v4834
      %v4946 = vpop.f32.mrf.mxu0
      %v4947 = vadd.f32 0.0, %v4946
      %4948 = vdwg.mxu0
      %v4949 = vadd.f32 %v4513, %v4854
      %v4950 = vadd.f32 %v4516, %v4857
      %v4951 = vadd.f32 %v4519, %v4860
      %v4952 = vadd.f32 %v4522, %v4863
      %v4953 = vadd.f32 %v4525, %v4866
      %v4954 = vadd.f32 %v4528, %v4869
      %v4955 = vadd.f32 %v4531, %v4872
      %v4956 = vadd.f32 %v4534, %v4875
      %v4957 = vadd.f32 %v4537, %v4878
      %v4958 = vadd.f32 %v4540, %v4881
      %v4959 = vadd.f32 %v4543, %v4884
      %v4960 = vadd.f32 %v4546, %v4887
      %v4961 = vadd.f32 %v4549, %v4890
      %v4962 = vadd.f32 %v4552, %v4893
      %v4963 = vadd.f32 %v4555, %v4896
      %v4964 = vadd.f32 %v4558, %v4899
      %v4965 = vadd.f32 %v4561, %v4902
      %v4966 = vadd.f32 %v4564, %v4905
      %v4967 = vadd.f32 %v4567, %v4908
      %v4968 = vadd.f32 %v4570, %v4911
      %v4969 = vadd.f32 %v4573, %v4914
      %v4970 = vadd.f32 %v4576, %v4917
      %v4971 = vadd.f32 %v4579, %v4920
      %v4972 = vadd.f32 %v4582, %v4923
      %v4973 = vadd.f32 %v4585, %v4926
      %v4974 = vadd.f32 %v4588, %v4929
      %v4975 = vadd.f32 %v4591, %v4932
      %v4976 = vadd.f32 %v4594, %v4935
      %v4977 = vadd.f32 %v4597, %v4938
      %v4978 = vadd.f32 %v4600, %v4941
      %v4979 = vadd.f32 %v4603, %v4944
      %v4980 = vadd.f32 %v4606, %v4947
      %v4982 = vrot.slane %v4054, 7
      %v4983 = vsel %vm807, %v4152, %v4982
      %v4984 = vrot.slane %v4055, 7
      %v4985 = vsel %vm807, %v4982, %v4984
      %v4988 = vsel %vm734, %v4095, 0.0
      %v4989 = vsel %vm735, %v4097, 0.0
      %v4990 = vsel %vm736, %v4099, 0.0
      %v4991 = vsel %vm737, %v4101, 0.0
      %v4992 = vsel %vm738, %v4103, 0.0
      %v4993 = vsel %vm739, %v4105, 0.0
      %v4994 = vsel %vm740, %v4107, 0.0
      %v4995 = vsel %vm741, %v4109, 0.0
      %v4996 = vsel %vm742, %v4111, 0.0
      %v4997 = vsel %vm743, %v4113, 0.0
      %v4998 = vsel %vm744, %v4115, 0.0
      %v4999 = vsel %vm745, %v4117, 0.0
      %v5000 = vsel %vm746, %v4119, 0.0
      %v5001 = vsel %vm747, %v4121, 0.0
      %v5002 = vsel %vm748, %v4123, 0.0
      %v5003 = vsel %vm749, %v4125, 0.0
      %v5004 = vsel %vm750, %v4127, 0.0
      %v5005 = vsel %vm751, %v4129, 0.0
      %v5006 = vsel %vm752, %v4131, 0.0
      %v5007 = vsel %vm753, %v4133, 0.0
      %v5008 = vsel %vm754, %v4135, 0.0
      %v5009 = vsel %vm755, %v4137, 0.0
      %v5010 = vsel %vm756, %v4139, 0.0
      %v5011 = vsel %vm757, %v4141, 0.0
      %v5012 = vsel %vm758, %v4143, 0.0
      %v5013 = vsel %vm759, %v4145, 0.0
      %v5014 = vsel %vm760, %v4147, 0.0
      %v5015 = vsel %vm761, %v4149, 0.0
      %v5016 = vsel %vm762, %v4151, 0.0
      %v5017 = vsel %vm763, %v4153, 0.0
      %v5018 = vsel %vm764, %v4983, 0.0
      %v5019 = vsel %vm765, %v4985, 0.0
      %s5020 = scalar_lea.vmem %s4, 24
      %v5021 = vld [vmem:[%s5020] sm:$0xff]
      %v5023 = vsel %vm4221, %v4988, 0
      %v5026 = vsel %vm4221, %v4989, 0
      %v5029 = vsel %vm4221, %v4990, 0
      %v5032 = vsel %vm4221, %v4991, 0
      %v5035 = vsel %vm4221, %v4992, 0
      %v5038 = vsel %vm4221, %v4993, 0
      %v5041 = vsel %vm4221, %v4994, 0
      %v5044 = vsel %vm4221, %v4995, 0
      %v5047 = vsel %vm4221, %v4996, 0
      %v5050 = vsel %vm4221, %v4997, 0
      %v5053 = vsel %vm4221, %v4998, 0
      %v5056 = vsel %vm4221, %v4999, 0
      %v5059 = vsel %vm4221, %v5000, 0
      %v5062 = vsel %vm4221, %v5001, 0
      %v5065 = vsel %vm4221, %v5002, 0
      %v5068 = vsel %vm4221, %v5003, 0
      %v5071 = vsel %vm4221, %v5004, 0
      %v5074 = vsel %vm4221, %v5005, 0
      %v5077 = vsel %vm4221, %v5006, 0
      %v5080 = vsel %vm4221, %v5007, 0
      %v5083 = vsel %vm4221, %v5008, 0
      %v5086 = vsel %vm4221, %v5009, 0
      %v5089 = vsel %vm4221, %v5010, 0
      %v5092 = vsel %vm4221, %v5011, 0
      %v5095 = vsel %vm4221, %v5012, 0
      %v5098 = vsel %vm4221, %v5013, 0
      %v5101 = vsel %vm4221, %v5014, 0
      %v5104 = vsel %vm4221, %v5015, 0
      %v5107 = vsel %vm4221, %v5016, 0
      %v5110 = vsel %vm4221, %v5017, 0
      %v5113 = vsel %vm4221, %v5018, 0
      %v5116 = vsel %vm4221, %v5019, 0
      %5118 = vmatpush.msra.mxu0 0.0
      %5119 = vmatpush.msra.mxu0 0.0
      %5120 = vmatpush.msra.mxu0 0.0
      %5121 = vmatpush.msra.mxu0 0.0
      %5122 = vmatpush.msra.mxu0 0.0
      %5123 = vmatpush.msra.mxu0 0.0
      %5124 = vmatpush.msra.mxu0 0.0
      %5125 = vmatpush.msra.mxu0 0.0
      %5126 = vmatpush.msra.mxu0 0.0
      %5127 = vmatpush.msra.mxu0 0.0
      %5128 = vmatpush.msra.mxu0 0.0
      %5129 = vmatpush.msra.mxu0 0.0
      %5130 = vmatpush.msra.mxu0 0.0
      %5131 = vmatpush.msra.mxu0 0.0
      %5132 = vmatpush.msra.mxu0 0.0
      %5133 = vmatpush.msra.mxu0 %v5021
      %5134 = vmatmul.f32.gmra.mxu0 %v5023
      %v5135 = vpop.f32.mrf.mxu0
      %v5136 = vadd.f32 0.0, %v5135
      %5137 = vmatmul.f32.gmra.mxu0 %v5026
      %v5138 = vpop.f32.mrf.mxu0
      %v5139 = vadd.f32 0.0, %v5138
      %5140 = vmatmul.f32.gmra.mxu0 %v5029
      %v5141 = vpop.f32.mrf.mxu0
      %v5142 = vadd.f32 0.0, %v5141
      %5143 = vmatmul.f32.gmra.mxu0 %v5032
      %v5144 = vpop.f32.mrf.mxu0
      %v5145 = vadd.f32 0.0, %v5144
      %5146 = vmatmul.f32.gmra.mxu0 %v5035
      %v5147 = vpop.f32.mrf.mxu0
      %v5148 = vadd.f32 0.0, %v5147
      %5149 = vmatmul.f32.gmra.mxu0 %v5038
      %v5150 = vpop.f32.mrf.mxu0
      %v5151 = vadd.f32 0.0, %v5150
      %5152 = vmatmul.f32.gmra.mxu0 %v5041
      %v5153 = vpop.f32.mrf.mxu0
      %v5154 = vadd.f32 0.0, %v5153
      %5155 = vmatmul.f32.gmra.mxu0 %v5044
      %v5156 = vpop.f32.mrf.mxu0
      %v5157 = vadd.f32 0.0, %v5156
      %5158 = vmatmul.f32.gmra.mxu0 %v5047
      %v5159 = vpop.f32.mrf.mxu0
      %v5160 = vadd.f32 0.0, %v5159
      %5161 = vmatmul.f32.gmra.mxu0 %v5050
      %v5162 = vpop.f32.mrf.mxu0
      %v5163 = vadd.f32 0.0, %v5162
      %5164 = vmatmul.f32.gmra.mxu0 %v5053
      %v5165 = vpop.f32.mrf.mxu0
      %v5166 = vadd.f32 0.0, %v5165
      %5167 = vmatmul.f32.gmra.mxu0 %v5056
      %v5168 = vpop.f32.mrf.mxu0
      %v5169 = vadd.f32 0.0, %v5168
      %5170 = vmatmul.f32.gmra.mxu0 %v5059
      %v5171 = vpop.f32.mrf.mxu0
      %v5172 = vadd.f32 0.0, %v5171
      %5173 = vmatmul.f32.gmra.mxu0 %v5062
      %v5174 = vpop.f32.mrf.mxu0
      %v5175 = vadd.f32 0.0, %v5174
      %5176 = vmatmul.f32.gmra.mxu0 %v5065
      %v5177 = vpop.f32.mrf.mxu0
      %v5178 = vadd.f32 0.0, %v5177
      %5179 = vmatmul.f32.gmra.mxu0 %v5068
      %v5180 = vpop.f32.mrf.mxu0
      %v5181 = vadd.f32 0.0, %v5180
      %5182 = vmatmul.f32.gmra.mxu0 %v5071
      %v5183 = vpop.f32.mrf.mxu0
      %v5184 = vadd.f32 0.0, %v5183
      %5185 = vmatmul.f32.gmra.mxu0 %v5074
      %v5186 = vpop.f32.mrf.mxu0
      %v5187 = vadd.f32 0.0, %v5186
      %5188 = vmatmul.f32.gmra.mxu0 %v5077
      %v5189 = vpop.f32.mrf.mxu0
      %v5190 = vadd.f32 0.0, %v5189
      %5191 = vmatmul.f32.gmra.mxu0 %v5080
      %v5192 = vpop.f32.mrf.mxu0
      %v5193 = vadd.f32 0.0, %v5192
      %5194 = vmatmul.f32.gmra.mxu0 %v5083
      %v5195 = vpop.f32.mrf.mxu0
      %v5196 = vadd.f32 0.0, %v5195
      %5197 = vmatmul.f32.gmra.mxu0 %v5086
      %v5198 = vpop.f32.mrf.mxu0
      %v5199 = vadd.f32 0.0, %v5198
      %5200 = vmatmul.f32.gmra.mxu0 %v5089
      %v5201 = vpop.f32.mrf.mxu0
      %v5202 = vadd.f32 0.0, %v5201
      %5203 = vmatmul.f32.gmra.mxu0 %v5092
      %v5204 = vpop.f32.mrf.mxu0
      %v5205 = vadd.f32 0.0, %v5204
      %5206 = vmatmul.f32.gmra.mxu0 %v5095
      %v5207 = vpop.f32.mrf.mxu0
      %v5208 = vadd.f32 0.0, %v5207
      %5209 = vmatmul.f32.gmra.mxu0 %v5098
      %v5210 = vpop.f32.mrf.mxu0
      %v5211 = vadd.f32 0.0, %v5210
      %5212 = vmatmul.f32.gmra.mxu0 %v5101
      %v5213 = vpop.f32.mrf.mxu0
      %v5214 = vadd.f32 0.0, %v5213
      %5215 = vmatmul.f32.gmra.mxu0 %v5104
      %v5216 = vpop.f32.mrf.mxu0
      %v5217 = vadd.f32 0.0, %v5216
      %5218 = vmatmul.f32.gmra.mxu0 %v5107
      %v5219 = vpop.f32.mrf.mxu0
      %v5220 = vadd.f32 0.0, %v5219
      %5221 = vmatmul.f32.gmra.mxu0 %v5110
      %v5222 = vpop.f32.mrf.mxu0
      %v5223 = vadd.f32 0.0, %v5222
      %5224 = vmatmul.f32.gmra.mxu0 %v5113
      %v5225 = vpop.f32.mrf.mxu0
      %v5226 = vadd.f32 0.0, %v5225
      %5227 = vmatmul.f32.gmra.mxu0 %v5116
      %v5228 = vpop.f32.mrf.mxu0
      %v5229 = vadd.f32 0.0, %v5228
      %5230 = vdwg.mxu0
      %v5231 = vadd.f32 %v4949, %v5136
      %v5232 = vadd.f32 %v4950, %v5139
      %v5233 = vadd.f32 %v4951, %v5142
      %v5234 = vadd.f32 %v4952, %v5145
      %v5235 = vadd.f32 %v4953, %v5148
      %v5236 = vadd.f32 %v4954, %v5151
      %v5237 = vadd.f32 %v4955, %v5154
      %v5238 = vadd.f32 %v4956, %v5157
      %v5239 = vadd.f32 %v4957, %v5160
      %v5240 = vadd.f32 %v4958, %v5163
      %v5241 = vadd.f32 %v4959, %v5166
      %v5242 = vadd.f32 %v4960, %v5169
      %v5243 = vadd.f32 %v4961, %v5172
      %v5244 = vadd.f32 %v4962, %v5175
      %v5245 = vadd.f32 %v4963, %v5178
      %v5246 = vadd.f32 %v4964, %v5181
      %v5247 = vadd.f32 %v4965, %v5184
      %v5248 = vadd.f32 %v4966, %v5187
      %v5249 = vadd.f32 %v4967, %v5190
      %v5250 = vadd.f32 %v4968, %v5193
      %v5251 = vadd.f32 %v4969, %v5196
      %v5252 = vadd.f32 %v4970, %v5199
      %v5253 = vadd.f32 %v4971, %v5202
      %v5254 = vadd.f32 %v4972, %v5205
      %v5255 = vadd.f32 %v4973, %v5208
      %v5256 = vadd.f32 %v4974, %v5211
      %v5257 = vadd.f32 %v4975, %v5214
      %v5258 = vadd.f32 %v4976, %v5217
      %v5259 = vadd.f32 %v4977, %v5220
      %v5260 = vadd.f32 %v4978, %v5223
      %v5261 = vadd.f32 %v4979, %v5226
      %v5262 = vadd.f32 %v4980, %v5229
      %s5263 = scalar_lea.vmem %s4, 32
      %v5264 = vld [vmem:[%s5263] sm:$0xff]
      %v5265 = vsel %vm4221, %v4054, 0
      %v5267 = vsel %vm4221, %v4055, 0
      %5269 = vmatpush.msra.mxu0 0.0
      %5270 = vmatpush.msra.mxu0 0.0
      %5271 = vmatpush.msra.mxu0 0.0
      %5272 = vmatpush.msra.mxu0 0.0
      %5273 = vmatpush.msra.mxu0 0.0
      %5274 = vmatpush.msra.mxu0 0.0
      %5275 = vmatpush.msra.mxu0 0.0
      %5276 = vmatpush.msra.mxu0 0.0
      %5277 = vmatpush.msra.mxu0 0.0
      %5278 = vmatpush.msra.mxu0 0.0
      %5279 = vmatpush.msra.mxu0 0.0
      %5280 = vmatpush.msra.mxu0 0.0
      %5281 = vmatpush.msra.mxu0 0.0
      %5282 = vmatpush.msra.mxu0 0.0
      %5283 = vmatpush.msra.mxu0 0.0
      %5284 = vmatpush.msra.mxu0 %v5264
      %5285 = vmatmul.f32.gmra.mxu0 %v4226
      %v5286 = vpop.f32.mrf.mxu0
      %v5287 = vadd.f32 0.0, %v5286
      %5288 = vmatmul.f32.gmra.mxu0 %v4228
      %v5289 = vpop.f32.mrf.mxu0
      %v5290 = vadd.f32 0.0, %v5289
      %5291 = vmatmul.f32.gmra.mxu0 %v4230
      %v5292 = vpop.f32.mrf.mxu0
      %v5293 = vadd.f32 0.0, %v5292
      %5294 = vmatmul.f32.gmra.mxu0 %v4232
      %v5295 = vpop.f32.mrf.mxu0
      %v5296 = vadd.f32 0.0, %v5295
      %5297 = vmatmul.f32.gmra.mxu0 %v4234
      %v5298 = vpop.f32.mrf.mxu0
      %v5299 = vadd.f32 0.0, %v5298
      %5300 = vmatmul.f32.gmra.mxu0 %v4236
      %v5301 = vpop.f32.mrf.mxu0
      %v5302 = vadd.f32 0.0, %v5301
      %5303 = vmatmul.f32.gmra.mxu0 %v4238
      %v5304 = vpop.f32.mrf.mxu0
      %v5305 = vadd.f32 0.0, %v5304
      %5306 = vmatmul.f32.gmra.mxu0 %v4240
      %v5307 = vpop.f32.mrf.mxu0
      %v5308 = vadd.f32 0.0, %v5307
      %5309 = vmatmul.f32.gmra.mxu0 %v4242
      %v5310 = vpop.f32.mrf.mxu0
      %v5311 = vadd.f32 0.0, %v5310
      %5312 = vmatmul.f32.gmra.mxu0 %v4244
      %v5313 = vpop.f32.mrf.mxu0
      %v5314 = vadd.f32 0.0, %v5313
      %5315 = vmatmul.f32.gmra.mxu0 %v4246
      %v5316 = vpop.f32.mrf.mxu0
      %v5317 = vadd.f32 0.0, %v5316
      %5318 = vmatmul.f32.gmra.mxu0 %v4248
      %v5319 = vpop.f32.mrf.mxu0
      %v5320 = vadd.f32 0.0, %v5319
      %5321 = vmatmul.f32.gmra.mxu0 %v4250
      %v5322 = vpop.f32.mrf.mxu0
      %v5323 = vadd.f32 0.0, %v5322
      %5324 = vmatmul.f32.gmra.mxu0 %v4252
      %v5325 = vpop.f32.mrf.mxu0
      %v5326 = vadd.f32 0.0, %v5325
      %5327 = vmatmul.f32.gmra.mxu0 %v4254
      %v5328 = vpop.f32.mrf.mxu0
      %v5329 = vadd.f32 0.0, %v5328
      %5330 = vmatmul.f32.gmra.mxu0 %v4256
      %v5331 = vpop.f32.mrf.mxu0
      %v5332 = vadd.f32 0.0, %v5331
      %5333 = vmatmul.f32.gmra.mxu0 %v4258
      %v5334 = vpop.f32.mrf.mxu0
      %v5335 = vadd.f32 0.0, %v5334
      %5336 = vmatmul.f32.gmra.mxu0 %v4260
      %v5337 = vpop.f32.mrf.mxu0
      %v5338 = vadd.f32 0.0, %v5337
      %5339 = vmatmul.f32.gmra.mxu0 %v4262
      %v5340 = vpop.f32.mrf.mxu0
      %v5341 = vadd.f32 0.0, %v5340
      %5342 = vmatmul.f32.gmra.mxu0 %v4264
      %v5343 = vpop.f32.mrf.mxu0
      %v5344 = vadd.f32 0.0, %v5343
      %5345 = vmatmul.f32.gmra.mxu0 %v4266
      %v5346 = vpop.f32.mrf.mxu0
      %v5347 = vadd.f32 0.0, %v5346
      %5348 = vmatmul.f32.gmra.mxu0 %v4268
      %v5349 = vpop.f32.mrf.mxu0
      %v5350 = vadd.f32 0.0, %v5349
      %5351 = vmatmul.f32.gmra.mxu0 %v4270
      %v5352 = vpop.f32.mrf.mxu0
      %v5353 = vadd.f32 0.0, %v5352
      %5354 = vmatmul.f32.gmra.mxu0 %v4272
      %v5355 = vpop.f32.mrf.mxu0
      %v5356 = vadd.f32 0.0, %v5355
      %5357 = vmatmul.f32.gmra.mxu0 %v4274
      %v5358 = vpop.f32.mrf.mxu0
      %v5359 = vadd.f32 0.0, %v5358
      %5360 = vmatmul.f32.gmra.mxu0 %v4276
      %v5361 = vpop.f32.mrf.mxu0
      %v5362 = vadd.f32 0.0, %v5361
      %5363 = vmatmul.f32.gmra.mxu0 %v4278
      %v5364 = vpop.f32.mrf.mxu0
      %v5365 = vadd.f32 0.0, %v5364
      %5366 = vmatmul.f32.gmra.mxu0 %v4280
      %v5367 = vpop.f32.mrf.mxu0
      %v5368 = vadd.f32 0.0, %v5367
      %5369 = vmatmul.f32.gmra.mxu0 %v4282
      %v5370 = vpop.f32.mrf.mxu0
      %v5371 = vadd.f32 0.0, %v5370
      %5372 = vmatmul.f32.gmra.mxu0 %v4284
      %v5373 = vpop.f32.mrf.mxu0
      %v5374 = vadd.f32 0.0, %v5373
      %5375 = vmatmul.f32.gmra.mxu0 %v5265
      %v5376 = vpop.f32.mrf.mxu0
      %v5377 = vadd.f32 0.0, %v5376
      %5378 = vmatmul.f32.gmra.mxu0 %v5267
      %v5379 = vpop.f32.mrf.mxu0
      %v5380 = vadd.f32 0.0, %v5379
      %5381 = vdwg.mxu0
      %v5382 = vadd.f32 %v5231, %v5287
      %v5383 = vadd.f32 %v5232, %v5290
      %v5384 = vadd.f32 %v5233, %v5293
      %v5385 = vadd.f32 %v5234, %v5296
      %v5386 = vadd.f32 %v5235, %v5299
      %v5387 = vadd.f32 %v5236, %v5302
      %v5388 = vadd.f32 %v5237, %v5305
      %v5389 = vadd.f32 %v5238, %v5308
      %v5390 = vadd.f32 %v5239, %v5311
      %v5391 = vadd.f32 %v5240, %v5314
      %v5392 = vadd.f32 %v5241, %v5317
      %v5393 = vadd.f32 %v5242, %v5320
      %v5394 = vadd.f32 %v5243, %v5323
      %v5395 = vadd.f32 %v5244, %v5326
      %v5396 = vadd.f32 %v5245, %v5329
      %v5397 = vadd.f32 %v5246, %v5332
      %v5398 = vadd.f32 %v5247, %v5335
      %v5399 = vadd.f32 %v5248, %v5338
      %v5400 = vadd.f32 %v5249, %v5341
      %v5401 = vadd.f32 %v5250, %v5344
      %v5402 = vadd.f32 %v5251, %v5347
      %v5403 = vadd.f32 %v5252, %v5350
      %v5404 = vadd.f32 %v5253, %v5353
      %v5405 = vadd.f32 %v5254, %v5356
      %v5406 = vadd.f32 %v5255, %v5359
      %v5407 = vadd.f32 %v5256, %v5362
      %v5408 = vadd.f32 %v5257, %v5365
      %v5409 = vadd.f32 %v5258, %v5368
      %v5410 = vadd.f32 %v5259, %v5371
      %v5411 = vadd.f32 %v5260, %v5374
      %v5412 = vadd.f32 %v5261, %v5377
      %v5413 = vadd.f32 %v5262, %v5380
      %v5415 = vrot.slane %v4055, 1
      %v5416 = vsel %vm1570, %v4672, %v5415
      %v5417 = vrot.slane %v4056, 1
      %v5418 = vsel %vm1570, %v5415, %v5417
      %v5421 = vsel %vm1533, %v4615, 0.0
      %v5422 = vsel %vm1534, %v4617, 0.0
      %v5423 = vsel %vm1535, %v4619, 0.0
      %v5424 = vsel %vm1536, %v4621, 0.0
      %v5425 = vsel %vm1537, %v4623, 0.0
      %v5426 = vsel %vm1538, %v4625, 0.0
      %v5427 = vsel %vm1539, %v4627, 0.0
      %v5428 = vsel %vm1540, %v4629, 0.0
      %v5429 = vsel %vm1541, %v4631, 0.0
      %v5430 = vsel %vm1542, %v4633, 0.0
      %v5431 = vsel %vm1543, %v4635, 0.0
      %v5432 = vsel %vm1544, %v4637, 0.0
      %v5433 = vsel %vm1545, %v4639, 0.0
      %v5434 = vsel %vm1546, %v4641, 0.0
      %v5435 = vsel %vm1547, %v4643, 0.0
      %v5436 = vsel %vm1548, %v4645, 0.0
      %v5437 = vsel %vm1549, %v4647, 0.0
      %v5438 = vsel %vm1550, %v4649, 0.0
      %v5439 = vsel %vm1551, %v4651, 0.0
      %v5440 = vsel %vm1552, %v4653, 0.0
      %v5441 = vsel %vm1553, %v4655, 0.0
      %v5442 = vsel %vm1554, %v4657, 0.0
      %v5443 = vsel %vm1555, %v4659, 0.0
      %v5444 = vsel %vm1556, %v4661, 0.0
      %v5445 = vsel %vm1557, %v4663, 0.0
      %v5446 = vsel %vm1558, %v4665, 0.0
      %v5447 = vsel %vm1559, %v4667, 0.0
      %v5448 = vsel %vm1560, %v4669, 0.0
      %v5449 = vsel %vm1561, %v4671, 0.0
      %v5450 = vsel %vm1562, %v4673, 0.0
      %v5451 = vsel %vm1563, %v5416, 0.0
      %v5452 = vsel %vm1564, %v5418, 0.0
      %s5453 = scalar_lea.vmem %s4, 40
      %v5454 = vld [vmem:[%s5453] sm:$0xff]
      %v5456 = vsel %vm4221, %v5421, 0
      %v5459 = vsel %vm4221, %v5422, 0
      %v5462 = vsel %vm4221, %v5423, 0
      %v5465 = vsel %vm4221, %v5424, 0
      %v5468 = vsel %vm4221, %v5425, 0
      %v5471 = vsel %vm4221, %v5426, 0
      %v5474 = vsel %vm4221, %v5427, 0
      %v5477 = vsel %vm4221, %v5428, 0
      %v5480 = vsel %vm4221, %v5429, 0
      %v5483 = vsel %vm4221, %v5430, 0
      %v5486 = vsel %vm4221, %v5431, 0
      %v5489 = vsel %vm4221, %v5432, 0
      %v5492 = vsel %vm4221, %v5433, 0
      %v5495 = vsel %vm4221, %v5434, 0
      %v5498 = vsel %vm4221, %v5435, 0
      %v5501 = vsel %vm4221, %v5436, 0
      %v5504 = vsel %vm4221, %v5437, 0
      %v5507 = vsel %vm4221, %v5438, 0
      %v5510 = vsel %vm4221, %v5439, 0
      %v5513 = vsel %vm4221, %v5440, 0
      %v5516 = vsel %vm4221, %v5441, 0
      %v5519 = vsel %vm4221, %v5442, 0
      %v5522 = vsel %vm4221, %v5443, 0
      %v5525 = vsel %vm4221, %v5444, 0
      %v5528 = vsel %vm4221, %v5445, 0
      %v5531 = vsel %vm4221, %v5446, 0
      %v5534 = vsel %vm4221, %v5447, 0
      %v5537 = vsel %vm4221, %v5448, 0
      %v5540 = vsel %vm4221, %v5449, 0
      %v5543 = vsel %vm4221, %v5450, 0
      %v5546 = vsel %vm4221, %v5451, 0
      %v5549 = vsel %vm4221, %v5452, 0
      %5551 = vmatpush.msra.mxu0 0.0
      %5552 = vmatpush.msra.mxu0 0.0
      %5553 = vmatpush.msra.mxu0 0.0
      %5554 = vmatpush.msra.mxu0 0.0
      %5555 = vmatpush.msra.mxu0 0.0
      %5556 = vmatpush.msra.mxu0 0.0
      %5557 = vmatpush.msra.mxu0 0.0
      %5558 = vmatpush.msra.mxu0 0.0
      %5559 = vmatpush.msra.mxu0 0.0
      %5560 = vmatpush.msra.mxu0 0.0
      %5561 = vmatpush.msra.mxu0 0.0
      %5562 = vmatpush.msra.mxu0 0.0
      %5563 = vmatpush.msra.mxu0 0.0
      %5564 = vmatpush.msra.mxu0 0.0
      %5565 = vmatpush.msra.mxu0 0.0
      %5566 = vmatpush.msra.mxu0 %v5454
      %5567 = vmatmul.f32.gmra.mxu0 %v5456
      %v5568 = vpop.f32.mrf.mxu0
      %v5569 = vadd.f32 0.0, %v5568
      %5570 = vmatmul.f32.gmra.mxu0 %v5459
      %v5571 = vpop.f32.mrf.mxu0
      %v5572 = vadd.f32 0.0, %v5571
      %5573 = vmatmul.f32.gmra.mxu0 %v5462
      %v5574 = vpop.f32.mrf.mxu0
      %v5575 = vadd.f32 0.0, %v5574
      %5576 = vmatmul.f32.gmra.mxu0 %v5465
      %v5577 = vpop.f32.mrf.mxu0
      %v5578 = vadd.f32 0.0, %v5577
      %5579 = vmatmul.f32.gmra.mxu0 %v5468
      %v5580 = vpop.f32.mrf.mxu0
      %v5581 = vadd.f32 0.0, %v5580
      %5582 = vmatmul.f32.gmra.mxu0 %v5471
      %v5583 = vpop.f32.mrf.mxu0
      %v5584 = vadd.f32 0.0, %v5583
      %5585 = vmatmul.f32.gmra.mxu0 %v5474
      %v5586 = vpop.f32.mrf.mxu0
      %v5587 = vadd.f32 0.0, %v5586
      %5588 = vmatmul.f32.gmra.mxu0 %v5477
      %v5589 = vpop.f32.mrf.mxu0
      %v5590 = vadd.f32 0.0, %v5589
      %5591 = vmatmul.f32.gmra.mxu0 %v5480
      %v5592 = vpop.f32.mrf.mxu0
      %v5593 = vadd.f32 0.0, %v5592
      %5594 = vmatmul.f32.gmra.mxu0 %v5483
      %v5595 = vpop.f32.mrf.mxu0
      %v5596 = vadd.f32 0.0, %v5595
      %5597 = vmatmul.f32.gmra.mxu0 %v5486
      %v5598 = vpop.f32.mrf.mxu0
      %v5599 = vadd.f32 0.0, %v5598
      %5600 = vmatmul.f32.gmra.mxu0 %v5489
      %v5601 = vpop.f32.mrf.mxu0
      %v5602 = vadd.f32 0.0, %v5601
      %5603 = vmatmul.f32.gmra.mxu0 %v5492
      %v5604 = vpop.f32.mrf.mxu0
      %v5605 = vadd.f32 0.0, %v5604
      %5606 = vmatmul.f32.gmra.mxu0 %v5495
      %v5607 = vpop.f32.mrf.mxu0
      %v5608 = vadd.f32 0.0, %v5607
      %5609 = vmatmul.f32.gmra.mxu0 %v5498
      %v5610 = vpop.f32.mrf.mxu0
      %v5611 = vadd.f32 0.0, %v5610
      %5612 = vmatmul.f32.gmra.mxu0 %v5501
      %v5613 = vpop.f32.mrf.mxu0
      %v5614 = vadd.f32 0.0, %v5613
      %5615 = vmatmul.f32.gmra.mxu0 %v5504
      %v5616 = vpop.f32.mrf.mxu0
      %v5617 = vadd.f32 0.0, %v5616
      %5618 = vmatmul.f32.gmra.mxu0 %v5507
      %v5619 = vpop.f32.mrf.mxu0
      %v5620 = vadd.f32 0.0, %v5619
      %5621 = vmatmul.f32.gmra.mxu0 %v5510
      %v5622 = vpop.f32.mrf.mxu0
      %v5623 = vadd.f32 0.0, %v5622
      %5624 = vmatmul.f32.gmra.mxu0 %v5513
      %v5625 = vpop.f32.mrf.mxu0
      %v5626 = vadd.f32 0.0, %v5625
      %5627 = vmatmul.f32.gmra.mxu0 %v5516
      %v5628 = vpop.f32.mrf.mxu0
      %v5629 = vadd.f32 0.0, %v5628
      %5630 = vmatmul.f32.gmra.mxu0 %v5519
      %v5631 = vpop.f32.mrf.mxu0
      %v5632 = vadd.f32 0.0, %v5631
      %5633 = vmatmul.f32.gmra.mxu0 %v5522
      %v5634 = vpop.f32.mrf.mxu0
      %v5635 = vadd.f32 0.0, %v5634
      %5636 = vmatmul.f32.gmra.mxu0 %v5525
      %v5637 = vpop.f32.mrf.mxu0
      %v5638 = vadd.f32 0.0, %v5637
      %5639 = vmatmul.f32.gmra.mxu0 %v5528
      %v5640 = vpop.f32.mrf.mxu0
      %v5641 = vadd.f32 0.0, %v5640
      %5642 = vmatmul.f32.gmra.mxu0 %v5531
      %v5643 = vpop.f32.mrf.mxu0
      %v5644 = vadd.f32 0.0, %v5643
      %5645 = vmatmul.f32.gmra.mxu0 %v5534
      %v5646 = vpop.f32.mrf.mxu0
      %v5647 = vadd.f32 0.0, %v5646
      %5648 = vmatmul.f32.gmra.mxu0 %v5537
      %v5649 = vpop.f32.mrf.mxu0
      %v5650 = vadd.f32 0.0, %v5649
      %5651 = vmatmul.f32.gmra.mxu0 %v5540
      %v5652 = vpop.f32.mrf.mxu0
      %v5653 = vadd.f32 0.0, %v5652
      %5654 = vmatmul.f32.gmra.mxu0 %v5543
      %v5655 = vpop.f32.mrf.mxu0
      %v5656 = vadd.f32 0.0, %v5655
      %5657 = vmatmul.f32.gmra.mxu0 %v5546
      %v5658 = vpop.f32.mrf.mxu0
      %v5659 = vadd.f32 0.0, %v5658
      %5660 = vmatmul.f32.gmra.mxu0 %v5549
      %v5661 = vpop.f32.mrf.mxu0
      %v5662 = vadd.f32 0.0, %v5661
      %5663 = vdwg.mxu0
      %v5664 = vadd.f32 %v5382, %v5569
      %v5665 = vadd.f32 %v5383, %v5572
      %v5666 = vadd.f32 %v5384, %v5575
      %v5667 = vadd.f32 %v5385, %v5578
      %v5668 = vadd.f32 %v5386, %v5581
      %v5669 = vadd.f32 %v5387, %v5584
      %v5670 = vadd.f32 %v5388, %v5587
      %v5671 = vadd.f32 %v5389, %v5590
      %v5672 = vadd.f32 %v5390, %v5593
      %v5673 = vadd.f32 %v5391, %v5596
      %v5674 = vadd.f32 %v5392, %v5599
      %v5675 = vadd.f32 %v5393, %v5602
      %v5676 = vadd.f32 %v5394, %v5605
      %v5677 = vadd.f32 %v5395, %v5608
      %v5678 = vadd.f32 %v5396, %v5611
      %v5679 = vadd.f32 %v5397, %v5614
      %v5680 = vadd.f32 %v5398, %v5617
      %v5681 = vadd.f32 %v5399, %v5620
      %v5682 = vadd.f32 %v5400, %v5623
      %v5683 = vadd.f32 %v5401, %v5626
      %v5684 = vadd.f32 %v5402, %v5629
      %v5685 = vadd.f32 %v5403, %v5632
      %v5686 = vadd.f32 %v5404, %v5635
      %v5687 = vadd.f32 %v5405, %v5638
      %v5688 = vadd.f32 %v5406, %v5641
      %v5689 = vadd.f32 %v5407, %v5644
      %v5690 = vadd.f32 %v5408, %v5647
      %v5691 = vadd.f32 %v5409, %v5650
      %v5692 = vadd.f32 %v5410, %v5653
      %v5693 = vadd.f32 %v5411, %v5656
      %v5694 = vadd.f32 %v5412, %v5659
      %v5695 = vadd.f32 %v5413, %v5662
      %v5697 = vrot.slane %v4056, 7
      %v5698 = vsel %vm807, %v4984, %v5697
      %v5699 = vrot.slane %v4057, 7
      %v5700 = vsel %vm807, %v5697, %v5699
      %v5703 = vsel %vm734, %v4099, 0.0
      %v5704 = vsel %vm735, %v4101, 0.0
      %v5705 = vsel %vm736, %v4103, 0.0
      %v5706 = vsel %vm737, %v4105, 0.0
      %v5707 = vsel %vm738, %v4107, 0.0
      %v5708 = vsel %vm739, %v4109, 0.0
      %v5709 = vsel %vm740, %v4111, 0.0
      %v5710 = vsel %vm741, %v4113, 0.0
      %v5711 = vsel %vm742, %v4115, 0.0
      %v5712 = vsel %vm743, %v4117, 0.0
      %v5713 = vsel %vm744, %v4119, 0.0
      %v5714 = vsel %vm745, %v4121, 0.0
      %v5715 = vsel %vm746, %v4123, 0.0
      %v5716 = vsel %vm747, %v4125, 0.0
      %v5717 = vsel %vm748, %v4127, 0.0
      %v5718 = vsel %vm749, %v4129, 0.0
      %v5719 = vsel %vm750, %v4131, 0.0
      %v5720 = vsel %vm751, %v4133, 0.0
      %v5721 = vsel %vm752, %v4135, 0.0
      %v5722 = vsel %vm753, %v4137, 0.0
      %v5723 = vsel %vm754, %v4139, 0.0
      %v5724 = vsel %vm755, %v4141, 0.0
      %v5725 = vsel %vm756, %v4143, 0.0
      %v5726 = vsel %vm757, %v4145, 0.0
      %v5727 = vsel %vm758, %v4147, 0.0
      %v5728 = vsel %vm759, %v4149, 0.0
      %v5729 = vsel %vm760, %v4151, 0.0
      %v5730 = vsel %vm761, %v4153, 0.0
      %v5731 = vsel %vm762, %v4983, 0.0
      %v5732 = vsel %vm763, %v4985, 0.0
      %v5733 = vsel %vm764, %v5698, 0.0
      %v5734 = vsel %vm765, %v5700, 0.0
      %s5735 = scalar_lea.vmem %s4, 48
      %v5736 = vld [vmem:[%s5735] sm:$0xff]
      %v5738 = vsel %vm4221, %v5703, 0
      %v5741 = vsel %vm4221, %v5704, 0
      %v5744 = vsel %vm4221, %v5705, 0
      %v5747 = vsel %vm4221, %v5706, 0
      %v5750 = vsel %vm4221, %v5707, 0
      %v5753 = vsel %vm4221, %v5708, 0
      %v5756 = vsel %vm4221, %v5709, 0
      %v5759 = vsel %vm4221, %v5710, 0
      %v5762 = vsel %vm4221, %v5711, 0
      %v5765 = vsel %vm4221, %v5712, 0
      %v5768 = vsel %vm4221, %v5713, 0
      %v5771 = vsel %vm4221, %v5714, 0
      %v5774 = vsel %vm4221, %v5715, 0
      %v5777 = vsel %vm4221, %v5716, 0
      %v5780 = vsel %vm4221, %v5717, 0
      %v5783 = vsel %vm4221, %v5718, 0
      %v5786 = vsel %vm4221, %v5719, 0
      %v5789 = vsel %vm4221, %v5720, 0
      %v5792 = vsel %vm4221, %v5721, 0
      %v5795 = vsel %vm4221, %v5722, 0
      %v5798 = vsel %vm4221, %v5723, 0
      %v5801 = vsel %vm4221, %v5724, 0
      %v5804 = vsel %vm4221, %v5725, 0
      %v5807 = vsel %vm4221, %v5726, 0
      %v5810 = vsel %vm4221, %v5727, 0
      %v5813 = vsel %vm4221, %v5728, 0
      %v5816 = vsel %vm4221, %v5729, 0
      %v5819 = vsel %vm4221, %v5730, 0
      %v5822 = vsel %vm4221, %v5731, 0
      %v5825 = vsel %vm4221, %v5732, 0
      %v5828 = vsel %vm4221, %v5733, 0
      %v5831 = vsel %vm4221, %v5734, 0
      %5833 = vmatpush.msra.mxu0 0.0
      %5834 = vmatpush.msra.mxu0 0.0
      %5835 = vmatpush.msra.mxu0 0.0
      %5836 = vmatpush.msra.mxu0 0.0
      %5837 = vmatpush.msra.mxu0 0.0
      %5838 = vmatpush.msra.mxu0 0.0
      %5839 = vmatpush.msra.mxu0 0.0
      %5840 = vmatpush.msra.mxu0 0.0
      %5841 = vmatpush.msra.mxu0 0.0
      %5842 = vmatpush.msra.mxu0 0.0
      %5843 = vmatpush.msra.mxu0 0.0
      %5844 = vmatpush.msra.mxu0 0.0
      %5845 = vmatpush.msra.mxu0 0.0
      %5846 = vmatpush.msra.mxu0 0.0
      %5847 = vmatpush.msra.mxu0 0.0
      %5848 = vmatpush.msra.mxu0 %v5736
      %5849 = vmatmul.f32.gmra.mxu0 %v5738
      %v5850 = vpop.f32.mrf.mxu0
      %v5851 = vadd.f32 0.0, %v5850
      %5852 = vmatmul.f32.gmra.mxu0 %v5741
      %v5853 = vpop.f32.mrf.mxu0
      %v5854 = vadd.f32 0.0, %v5853
      %5855 = vmatmul.f32.gmra.mxu0 %v5744
      %v5856 = vpop.f32.mrf.mxu0
      %v5857 = vadd.f32 0.0, %v5856
      %5858 = vmatmul.f32.gmra.mxu0 %v5747
      %v5859 = vpop.f32.mrf.mxu0
      %v5860 = vadd.f32 0.0, %v5859
      %5861 = vmatmul.f32.gmra.mxu0 %v5750
      %v5862 = vpop.f32.mrf.mxu0
      %v5863 = vadd.f32 0.0, %v5862
      %5864 = vmatmul.f32.gmra.mxu0 %v5753
      %v5865 = vpop.f32.mrf.mxu0
      %v5866 = vadd.f32 0.0, %v5865
      %5867 = vmatmul.f32.gmra.mxu0 %v5756
      %v5868 = vpop.f32.mrf.mxu0
      %v5869 = vadd.f32 0.0, %v5868
      %5870 = vmatmul.f32.gmra.mxu0 %v5759
      %v5871 = vpop.f32.mrf.mxu0
      %v5872 = vadd.f32 0.0, %v5871
      %5873 = vmatmul.f32.gmra.mxu0 %v5762
      %v5874 = vpop.f32.mrf.mxu0
      %v5875 = vadd.f32 0.0, %v5874
      %5876 = vmatmul.f32.gmra.mxu0 %v5765
      %v5877 = vpop.f32.mrf.mxu0
      %v5878 = vadd.f32 0.0, %v5877
      %5879 = vmatmul.f32.gmra.mxu0 %v5768
      %v5880 = vpop.f32.mrf.mxu0
      %v5881 = vadd.f32 0.0, %v5880
      %5882 = vmatmul.f32.gmra.mxu0 %v5771
      %v5883 = vpop.f32.mrf.mxu0
      %v5884 = vadd.f32 0.0, %v5883
      %5885 = vmatmul.f32.gmra.mxu0 %v5774
      %v5886 = vpop.f32.mrf.mxu0
      %v5887 = vadd.f32 0.0, %v5886
      %5888 = vmatmul.f32.gmra.mxu0 %v5777
      %v5889 = vpop.f32.mrf.mxu0
      %v5890 = vadd.f32 0.0, %v5889
      %5891 = vmatmul.f32.gmra.mxu0 %v5780
      %v5892 = vpop.f32.mrf.mxu0
      %v5893 = vadd.f32 0.0, %v5892
      %5894 = vmatmul.f32.gmra.mxu0 %v5783
      %v5895 = vpop.f32.mrf.mxu0
      %v5896 = vadd.f32 0.0, %v5895
      %5897 = vmatmul.f32.gmra.mxu0 %v5786
      %v5898 = vpop.f32.mrf.mxu0
      %v5899 = vadd.f32 0.0, %v5898
      %5900 = vmatmul.f32.gmra.mxu0 %v5789
      %v5901 = vpop.f32.mrf.mxu0
      %v5902 = vadd.f32 0.0, %v5901
      %5903 = vmatmul.f32.gmra.mxu0 %v5792
      %v5904 = vpop.f32.mrf.mxu0
      %v5905 = vadd.f32 0.0, %v5904
      %5906 = vmatmul.f32.gmra.mxu0 %v5795
      %v5907 = vpop.f32.mrf.mxu0
      %v5908 = vadd.f32 0.0, %v5907
      %5909 = vmatmul.f32.gmra.mxu0 %v5798
      %v5910 = vpop.f32.mrf.mxu0
      %v5911 = vadd.f32 0.0, %v5910
      %5912 = vmatmul.f32.gmra.mxu0 %v5801
      %v5913 = vpop.f32.mrf.mxu0
      %v5914 = vadd.f32 0.0, %v5913
      %5915 = vmatmul.f32.gmra.mxu0 %v5804
      %v5916 = vpop.f32.mrf.mxu0
      %v5917 = vadd.f32 0.0, %v5916
      %5918 = vmatmul.f32.gmra.mxu0 %v5807
      %v5919 = vpop.f32.mrf.mxu0
      %v5920 = vadd.f32 0.0, %v5919
      %5921 = vmatmul.f32.gmra.mxu0 %v5810
      %v5922 = vpop.f32.mrf.mxu0
      %v5923 = vadd.f32 0.0, %v5922
      %5924 = vmatmul.f32.gmra.mxu0 %v5813
      %v5925 = vpop.f32.mrf.mxu0
      %v5926 = vadd.f32 0.0, %v5925
      %5927 = vmatmul.f32.gmra.mxu0 %v5816
      %v5928 = vpop.f32.mrf.mxu0
      %v5929 = vadd.f32 0.0, %v5928
      %5930 = vmatmul.f32.gmra.mxu0 %v5819
      %v5931 = vpop.f32.mrf.mxu0
      %v5932 = vadd.f32 0.0, %v5931
      %5933 = vmatmul.f32.gmra.mxu0 %v5822
      %v5934 = vpop.f32.mrf.mxu0
      %v5935 = vadd.f32 0.0, %v5934
      %5936 = vmatmul.f32.gmra.mxu0 %v5825
      %v5937 = vpop.f32.mrf.mxu0
      %v5938 = vadd.f32 0.0, %v5937
      %5939 = vmatmul.f32.gmra.mxu0 %v5828
      %v5940 = vpop.f32.mrf.mxu0
      %v5941 = vadd.f32 0.0, %v5940
      %5942 = vmatmul.f32.gmra.mxu0 %v5831
      %v5943 = vpop.f32.mrf.mxu0
      %v5944 = vadd.f32 0.0, %v5943
      %5945 = vdwg.mxu0
      %v5946 = vadd.f32 %v5664, %v5851
      %v5947 = vadd.f32 %v5665, %v5854
      %v5948 = vadd.f32 %v5666, %v5857
      %v5949 = vadd.f32 %v5667, %v5860
      %v5950 = vadd.f32 %v5668, %v5863
      %v5951 = vadd.f32 %v5669, %v5866
      %v5952 = vadd.f32 %v5670, %v5869
      %v5953 = vadd.f32 %v5671, %v5872
      %v5954 = vadd.f32 %v5672, %v5875
      %v5955 = vadd.f32 %v5673, %v5878
      %v5956 = vadd.f32 %v5674, %v5881
      %v5957 = vadd.f32 %v5675, %v5884
      %v5958 = vadd.f32 %v5676, %v5887
      %v5959 = vadd.f32 %v5677, %v5890
      %v5960 = vadd.f32 %v5678, %v5893
      %v5961 = vadd.f32 %v5679, %v5896
      %v5962 = vadd.f32 %v5680, %v5899
      %v5963 = vadd.f32 %v5681, %v5902
      %v5964 = vadd.f32 %v5682, %v5905
      %v5965 = vadd.f32 %v5683, %v5908
      %v5966 = vadd.f32 %v5684, %v5911
      %v5967 = vadd.f32 %v5685, %v5914
      %v5968 = vadd.f32 %v5686, %v5917
      %v5969 = vadd.f32 %v5687, %v5920
      %v5970 = vadd.f32 %v5688, %v5923
      %v5971 = vadd.f32 %v5689, %v5926
      %v5972 = vadd.f32 %v5690, %v5929
      %v5973 = vadd.f32 %v5691, %v5932
      %v5974 = vadd.f32 %v5692, %v5935
      %v5975 = vadd.f32 %v5693, %v5938
      %v5976 = vadd.f32 %v5694, %v5941
      %v5977 = vadd.f32 %v5695, %v5944
      %s5978 = scalar_lea.vmem %s4, 56
      %v5979 = vld [vmem:[%s5978] sm:$0xff]
      %v5980 = vsel %vm4221, %v4056, 0
      %v5982 = vsel %vm4221, %v4057, 0
      %5984 = vmatpush.msra.mxu0 0.0
      %5985 = vmatpush.msra.mxu0 0.0
      %5986 = vmatpush.msra.mxu0 0.0
      %5987 = vmatpush.msra.mxu0 0.0
      %5988 = vmatpush.msra.mxu0 0.0
      %5989 = vmatpush.msra.mxu0 0.0
      %5990 = vmatpush.msra.mxu0 0.0
      %5991 = vmatpush.msra.mxu0 0.0
      %5992 = vmatpush.msra.mxu0 0.0
      %5993 = vmatpush.msra.mxu0 0.0
      %5994 = vmatpush.msra.mxu0 0.0
      %5995 = vmatpush.msra.mxu0 0.0
      %5996 = vmatpush.msra.mxu0 0.0
      %5997 = vmatpush.msra.mxu0 0.0
      %5998 = vmatpush.msra.mxu0 0.0
      %5999 = vmatpush.msra.mxu0 %v5979
      %6000 = vmatmul.f32.gmra.mxu0 %v4230
      %v6001 = vpop.f32.mrf.mxu0
      %v6002 = vadd.f32 0.0, %v6001
      %6003 = vmatmul.f32.gmra.mxu0 %v4232
      %v6004 = vpop.f32.mrf.mxu0
      %v6005 = vadd.f32 0.0, %v6004
      %6006 = vmatmul.f32.gmra.mxu0 %v4234
      %v6007 = vpop.f32.mrf.mxu0
      %v6008 = vadd.f32 0.0, %v6007
      %6009 = vmatmul.f32.gmra.mxu0 %v4236
      %v6010 = vpop.f32.mrf.mxu0
      %v6011 = vadd.f32 0.0, %v6010
      %6012 = vmatmul.f32.gmra.mxu0 %v4238
      %v6013 = vpop.f32.mrf.mxu0
      %v6014 = vadd.f32 0.0, %v6013
      %6015 = vmatmul.f32.gmra.mxu0 %v4240
      %v6016 = vpop.f32.mrf.mxu0
      %v6017 = vadd.f32 0.0, %v6016
      %6018 = vmatmul.f32.gmra.mxu0 %v4242
      %v6019 = vpop.f32.mrf.mxu0
      %v6020 = vadd.f32 0.0, %v6019
      %6021 = vmatmul.f32.gmra.mxu0 %v4244
      %v6022 = vpop.f32.mrf.mxu0
      %v6023 = vadd.f32 0.0, %v6022
      %6024 = vmatmul.f32.gmra.mxu0 %v4246
      %v6025 = vpop.f32.mrf.mxu0
      %v6026 = vadd.f32 0.0, %v6025
      %6027 = vmatmul.f32.gmra.mxu0 %v4248
      %v6028 = vpop.f32.mrf.mxu0
      %v6029 = vadd.f32 0.0, %v6028
      %6030 = vmatmul.f32.gmra.mxu0 %v4250
      %v6031 = vpop.f32.mrf.mxu0
      %v6032 = vadd.f32 0.0, %v6031
      %6033 = vmatmul.f32.gmra.mxu0 %v4252
      %v6034 = vpop.f32.mrf.mxu0
      %v6035 = vadd.f32 0.0, %v6034
      %6036 = vmatmul.f32.gmra.mxu0 %v4254
      %v6037 = vpop.f32.mrf.mxu0
      %v6038 = vadd.f32 0.0, %v6037
      %6039 = vmatmul.f32.gmra.mxu0 %v4256
      %v6040 = vpop.f32.mrf.mxu0
      %v6041 = vadd.f32 0.0, %v6040
      %6042 = vmatmul.f32.gmra.mxu0 %v4258
      %v6043 = vpop.f32.mrf.mxu0
      %v6044 = vadd.f32 0.0, %v6043
      %6045 = vmatmul.f32.gmra.mxu0 %v4260
      %v6046 = vpop.f32.mrf.mxu0
      %v6047 = vadd.f32 0.0, %v6046
      %6048 = vmatmul.f32.gmra.mxu0 %v4262
      %v6049 = vpop.f32.mrf.mxu0
      %v6050 = vadd.f32 0.0, %v6049
      %6051 = vmatmul.f32.gmra.mxu0 %v4264
      %v6052 = vpop.f32.mrf.mxu0
      %v6053 = vadd.f32 0.0, %v6052
      %6054 = vmatmul.f32.gmra.mxu0 %v4266
      %v6055 = vpop.f32.mrf.mxu0
      %v6056 = vadd.f32 0.0, %v6055
      %6057 = vmatmul.f32.gmra.mxu0 %v4268
      %v6058 = vpop.f32.mrf.mxu0
      %v6059 = vadd.f32 0.0, %v6058
      %6060 = vmatmul.f32.gmra.mxu0 %v4270
      %v6061 = vpop.f32.mrf.mxu0
      %v6062 = vadd.f32 0.0, %v6061
      %6063 = vmatmul.f32.gmra.mxu0 %v4272
      %v6064 = vpop.f32.mrf.mxu0
      %v6065 = vadd.f32 0.0, %v6064
      %6066 = vmatmul.f32.gmra.mxu0 %v4274
      %v6067 = vpop.f32.mrf.mxu0
      %v6068 = vadd.f32 0.0, %v6067
      %6069 = vmatmul.f32.gmra.mxu0 %v4276
      %v6070 = vpop.f32.mrf.mxu0
      %v6071 = vadd.f32 0.0, %v6070
      %6072 = vmatmul.f32.gmra.mxu0 %v4278
      %v6073 = vpop.f32.mrf.mxu0
      %v6074 = vadd.f32 0.0, %v6073
      %6075 = vmatmul.f32.gmra.mxu0 %v4280
      %v6076 = vpop.f32.mrf.mxu0
      %v6077 = vadd.f32 0.0, %v6076
      %6078 = vmatmul.f32.gmra.mxu0 %v4282
      %v6079 = vpop.f32.mrf.mxu0
      %v6080 = vadd.f32 0.0, %v6079
      %6081 = vmatmul.f32.gmra.mxu0 %v4284
      %v6082 = vpop.f32.mrf.mxu0
      %v6083 = vadd.f32 0.0, %v6082
      %6084 = vmatmul.f32.gmra.mxu0 %v5265
      %v6085 = vpop.f32.mrf.mxu0
      %v6086 = vadd.f32 0.0, %v6085
      %6087 = vmatmul.f32.gmra.mxu0 %v5267
      %v6088 = vpop.f32.mrf.mxu0
      %v6089 = vadd.f32 0.0, %v6088
      %6090 = vmatmul.f32.gmra.mxu0 %v5980
      %v6091 = vpop.f32.mrf.mxu0
      %v6092 = vadd.f32 0.0, %v6091
      %6093 = vmatmul.f32.gmra.mxu0 %v5982
      %v6094 = vpop.f32.mrf.mxu0
      %v6095 = vadd.f32 0.0, %v6094
      %6096 = vdwg.mxu0
      %v6097 = vadd.f32 %v5946, %v6002
      %v6098 = vadd.f32 %v5947, %v6005
      %v6099 = vadd.f32 %v5948, %v6008
      %v6100 = vadd.f32 %v5949, %v6011
      %v6101 = vadd.f32 %v5950, %v6014
      %v6102 = vadd.f32 %v5951, %v6017
      %v6103 = vadd.f32 %v5952, %v6020
      %v6104 = vadd.f32 %v5953, %v6023
      %v6105 = vadd.f32 %v5954, %v6026
      %v6106 = vadd.f32 %v5955, %v6029
      %v6107 = vadd.f32 %v5956, %v6032
      %v6108 = vadd.f32 %v5957, %v6035
      %v6109 = vadd.f32 %v5958, %v6038
      %v6110 = vadd.f32 %v5959, %v6041
      %v6111 = vadd.f32 %v5960, %v6044
      %v6112 = vadd.f32 %v5961, %v6047
      %v6113 = vadd.f32 %v5962, %v6050
      %v6114 = vadd.f32 %v5963, %v6053
      %v6115 = vadd.f32 %v5964, %v6056
      %v6116 = vadd.f32 %v5965, %v6059
      %v6117 = vadd.f32 %v5966, %v6062
      %v6118 = vadd.f32 %v5967, %v6065
      %v6119 = vadd.f32 %v5968, %v6068
      %v6120 = vadd.f32 %v5969, %v6071
      %v6121 = vadd.f32 %v5970, %v6074
      %v6122 = vadd.f32 %v5971, %v6077
      %v6123 = vadd.f32 %v5972, %v6080
      %v6124 = vadd.f32 %v5973, %v6083
      %v6125 = vadd.f32 %v5974, %v6086
      %v6126 = vadd.f32 %v5975, %v6089
      %v6127 = vadd.f32 %v5976, %v6092
      %v6128 = vadd.f32 %v5977, %v6095
      %v6129 = vrot.slane %v4057, 1
      %v6130 = vsel %vm1570, %v5417, %v6129
      %v6131 = vsel %vm1570, %v6129, %v3271
      %v6134 = vsel %vm1533, %v4619, 0.0
      %v6135 = vsel %vm1534, %v4621, 0.0
      %v6136 = vsel %vm1535, %v4623, 0.0
      %v6137 = vsel %vm1536, %v4625, 0.0
      %v6138 = vsel %vm1537, %v4627, 0.0
      %v6139 = vsel %vm1538, %v4629, 0.0
      %v6140 = vsel %vm1539, %v4631, 0.0
      %v6141 = vsel %vm1540, %v4633, 0.0
      %v6142 = vsel %vm1541, %v4635, 0.0
      %v6143 = vsel %vm1542, %v4637, 0.0
      %v6144 = vsel %vm1543, %v4639, 0.0
      %v6145 = vsel %vm1544, %v4641, 0.0
      %v6146 = vsel %vm1545, %v4643, 0.0
      %v6147 = vsel %vm1546, %v4645, 0.0
      %v6148 = vsel %vm1547, %v4647, 0.0
      %v6149 = vsel %vm1548, %v4649, 0.0
      %v6150 = vsel %vm1549, %v4651, 0.0
      %v6151 = vsel %vm1550, %v4653, 0.0
      %v6152 = vsel %vm1551, %v4655, 0.0
      %v6153 = vsel %vm1552, %v4657, 0.0
      %v6154 = vsel %vm1553, %v4659, 0.0
      %v6155 = vsel %vm1554, %v4661, 0.0
      %v6156 = vsel %vm1555, %v4663, 0.0
      %v6157 = vsel %vm1556, %v4665, 0.0
      %v6158 = vsel %vm1557, %v4667, 0.0
      %v6159 = vsel %vm1558, %v4669, 0.0
      %v6160 = vsel %vm1559, %v4671, 0.0
      %v6161 = vsel %vm1560, %v4673, 0.0
      %v6162 = vsel %vm1561, %v5416, 0.0
      %v6163 = vsel %vm1562, %v5418, 0.0
      %v6164 = vsel %vm1563, %v6130, 0.0
      %v6165 = vsel %vm1564, %v6131, 0.0
      %s6166 = scalar_lea.vmem %s4, 64
      %v6167 = vld [vmem:[%s6166] sm:$0xff]
      %v6169 = vsel %vm4221, %v6134, 0
      %v6172 = vsel %vm4221, %v6135, 0
      %v6175 = vsel %vm4221, %v6136, 0
      %v6178 = vsel %vm4221, %v6137, 0
      %v6181 = vsel %vm4221, %v6138, 0
      %v6184 = vsel %vm4221, %v6139, 0
      %v6187 = vsel %vm4221, %v6140, 0
      %v6190 = vsel %vm4221, %v6141, 0
      %v6193 = vsel %vm4221, %v6142, 0
      %v6196 = vsel %vm4221, %v6143, 0
      %v6199 = vsel %vm4221, %v6144, 0
      %v6202 = vsel %vm4221, %v6145, 0
      %v6205 = vsel %vm4221, %v6146, 0
      %v6208 = vsel %vm4221, %v6147, 0
      %v6211 = vsel %vm4221, %v6148, 0
      %v6214 = vsel %vm4221, %v6149, 0
      %v6217 = vsel %vm4221, %v6150, 0
      %v6220 = vsel %vm4221, %v6151, 0
      %v6223 = vsel %vm4221, %v6152, 0
      %v6226 = vsel %vm4221, %v6153, 0
      %v6229 = vsel %vm4221, %v6154, 0
      %v6232 = vsel %vm4221, %v6155, 0
      %v6235 = vsel %vm4221, %v6156, 0
      %v6238 = vsel %vm4221, %v6157, 0
      %v6241 = vsel %vm4221, %v6158, 0
      %v6244 = vsel %vm4221, %v6159, 0
      %v6247 = vsel %vm4221, %v6160, 0
      %v6250 = vsel %vm4221, %v6161, 0
      %v6253 = vsel %vm4221, %v6162, 0
      %v6256 = vsel %vm4221, %v6163, 0
      %v6259 = vsel %vm4221, %v6164, 0
      %v6262 = vsel %vm4221, %v6165, 0
      %6264 = vmatpush.msra.mxu0 0.0
      %6265 = vmatpush.msra.mxu0 0.0
      %6266 = vmatpush.msra.mxu0 0.0
      %6267 = vmatpush.msra.mxu0 0.0
      %6268 = vmatpush.msra.mxu0 0.0
      %6269 = vmatpush.msra.mxu0 0.0
      %6270 = vmatpush.msra.mxu0 0.0
      %6271 = vmatpush.msra.mxu0 0.0
      %6272 = vmatpush.msra.mxu0 0.0
      %6273 = vmatpush.msra.mxu0 0.0
      %6274 = vmatpush.msra.mxu0 0.0
      %6275 = vmatpush.msra.mxu0 0.0
      %6276 = vmatpush.msra.mxu0 0.0
      %6277 = vmatpush.msra.mxu0 0.0
      %6278 = vmatpush.msra.mxu0 0.0
      %6279 = vmatpush.msra.mxu0 %v6167
      %6280 = vmatmul.f32.gmra.mxu0 %v6169
      %v6281 = vpop.f32.mrf.mxu0
      %v6282 = vadd.f32 0.0, %v6281
      %6283 = vmatmul.f32.gmra.mxu0 %v6172
      %v6284 = vpop.f32.mrf.mxu0
      %v6285 = vadd.f32 0.0, %v6284
      %6286 = vmatmul.f32.gmra.mxu0 %v6175
      %v6287 = vpop.f32.mrf.mxu0
      %v6288 = vadd.f32 0.0, %v6287
      %6289 = vmatmul.f32.gmra.mxu0 %v6178
      %v6290 = vpop.f32.mrf.mxu0
      %v6291 = vadd.f32 0.0, %v6290
      %6292 = vmatmul.f32.gmra.mxu0 %v6181
      %v6293 = vpop.f32.mrf.mxu0
      %v6294 = vadd.f32 0.0, %v6293
      %6295 = vmatmul.f32.gmra.mxu0 %v6184
      %v6296 = vpop.f32.mrf.mxu0
      %v6297 = vadd.f32 0.0, %v6296
      %6298 = vmatmul.f32.gmra.mxu0 %v6187
      %v6299 = vpop.f32.mrf.mxu0
      %v6300 = vadd.f32 0.0, %v6299
      %6301 = vmatmul.f32.gmra.mxu0 %v6190
      %v6302 = vpop.f32.mrf.mxu0
      %v6303 = vadd.f32 0.0, %v6302
      %6304 = vmatmul.f32.gmra.mxu0 %v6193
      %v6305 = vpop.f32.mrf.mxu0
      %v6306 = vadd.f32 0.0, %v6305
      %6307 = vmatmul.f32.gmra.mxu0 %v6196
      %v6308 = vpop.f32.mrf.mxu0
      %v6309 = vadd.f32 0.0, %v6308
      %6310 = vmatmul.f32.gmra.mxu0 %v6199
      %v6311 = vpop.f32.mrf.mxu0
      %v6312 = vadd.f32 0.0, %v6311
      %6313 = vmatmul.f32.gmra.mxu0 %v6202
      %v6314 = vpop.f32.mrf.mxu0
      %v6315 = vadd.f32 0.0, %v6314
      %6316 = vmatmul.f32.gmra.mxu0 %v6205
      %v6317 = vpop.f32.mrf.mxu0
      %v6318 = vadd.f32 0.0, %v6317
      %6319 = vmatmul.f32.gmra.mxu0 %v6208
      %v6320 = vpop.f32.mrf.mxu0
      %v6321 = vadd.f32 0.0, %v6320
      %6322 = vmatmul.f32.gmra.mxu0 %v6211
      %v6323 = vpop.f32.mrf.mxu0
      %v6324 = vadd.f32 0.0, %v6323
      %6325 = vmatmul.f32.gmra.mxu0 %v6214
      %v6326 = vpop.f32.mrf.mxu0
      %v6327 = vadd.f32 0.0, %v6326
      %6328 = vmatmul.f32.gmra.mxu0 %v6217
      %v6329 = vpop.f32.mrf.mxu0
      %v6330 = vadd.f32 0.0, %v6329
      %6331 = vmatmul.f32.gmra.mxu0 %v6220
      %v6332 = vpop.f32.mrf.mxu0
      %v6333 = vadd.f32 0.0, %v6332
      %6334 = vmatmul.f32.gmra.mxu0 %v6223
      %v6335 = vpop.f32.mrf.mxu0
      %v6336 = vadd.f32 0.0, %v6335
      %6337 = vmatmul.f32.gmra.mxu0 %v6226
      %v6338 = vpop.f32.mrf.mxu0
      %v6339 = vadd.f32 0.0, %v6338
      %6340 = vmatmul.f32.gmra.mxu0 %v6229
      %v6341 = vpop.f32.mrf.mxu0
      %v6342 = vadd.f32 0.0, %v6341
      %6343 = vmatmul.f32.gmra.mxu0 %v6232
      %v6344 = vpop.f32.mrf.mxu0
      %v6345 = vadd.f32 0.0, %v6344
      %6346 = vmatmul.f32.gmra.mxu0 %v6235
      %v6347 = vpop.f32.mrf.mxu0
      %v6348 = vadd.f32 0.0, %v6347
      %6349 = vmatmul.f32.gmra.mxu0 %v6238
      %v6350 = vpop.f32.mrf.mxu0
      %v6351 = vadd.f32 0.0, %v6350
      %6352 = vmatmul.f32.gmra.mxu0 %v6241
      %v6353 = vpop.f32.mrf.mxu0
      %v6354 = vadd.f32 0.0, %v6353
      %6355 = vmatmul.f32.gmra.mxu0 %v6244
      %v6356 = vpop.f32.mrf.mxu0
      %v6357 = vadd.f32 0.0, %v6356
      %6358 = vmatmul.f32.gmra.mxu0 %v6247
      %v6359 = vpop.f32.mrf.mxu0
      %v6360 = vadd.f32 0.0, %v6359
      %6361 = vmatmul.f32.gmra.mxu0 %v6250
      %v6362 = vpop.f32.mrf.mxu0
      %v6363 = vadd.f32 0.0, %v6362
      %6364 = vmatmul.f32.gmra.mxu0 %v6253
      %v6365 = vpop.f32.mrf.mxu0
      %v6366 = vadd.f32 0.0, %v6365
      %6367 = vmatmul.f32.gmra.mxu0 %v6256
      %v6368 = vpop.f32.mrf.mxu0
      %v6369 = vadd.f32 0.0, %v6368
      %6370 = vmatmul.f32.gmra.mxu0 %v6259
      %v6371 = vpop.f32.mrf.mxu0
      %v6372 = vadd.f32 0.0, %v6371
      %6373 = vmatmul.f32.gmra.mxu0 %v6262
      %v6374 = vpop.f32.mrf.mxu0
      %v6375 = vadd.f32 0.0, %v6374
      %6376 = vdwg.mxu0
      %v6377 = vadd.f32 %v6097, %v6282
      %v6378 = vadd.f32 %v6098, %v6285
      %v6379 = vadd.f32 %v6099, %v6288
      %v6380 = vadd.f32 %v6100, %v6291
      %v6381 = vadd.f32 %v6101, %v6294
      %v6382 = vadd.f32 %v6102, %v6297
      %v6383 = vadd.f32 %v6103, %v6300
      %v6384 = vadd.f32 %v6104, %v6303
      %v6385 = vadd.f32 %v6105, %v6306
      %v6386 = vadd.f32 %v6106, %v6309
      %v6387 = vadd.f32 %v6107, %v6312
      %v6388 = vadd.f32 %v6108, %v6315
      %v6389 = vadd.f32 %v6109, %v6318
      %v6390 = vadd.f32 %v6110, %v6321
      %v6391 = vadd.f32 %v6111, %v6324
      %v6392 = vadd.f32 %v6112, %v6327
      %v6393 = vadd.f32 %v6113, %v6330
      %v6394 = vadd.f32 %v6114, %v6333
      %v6395 = vadd.f32 %v6115, %v6336
      %v6396 = vadd.f32 %v6116, %v6339
      %v6397 = vadd.f32 %v6117, %v6342
      %v6398 = vadd.f32 %v6118, %v6345
      %v6399 = vadd.f32 %v6119, %v6348
      %v6400 = vadd.f32 %v6120, %v6351
      %v6401 = vadd.f32 %v6121, %v6354
      %v6402 = vadd.f32 %v6122, %v6357
      %v6403 = vadd.f32 %v6123, %v6360
      %v6404 = vadd.f32 %v6124, %v6363
      %v6405 = vadd.f32 %v6125, %v6366
      %v6406 = vadd.f32 %v6126, %v6369
      %v6407 = vadd.f32 %v6127, %v6372
      %v6408 = vadd.f32 %v6128, %v6375
      %v6409 = vld [vmem:[%s6] sm:$0xff]
      %v6410 = vld [vmem:[%s6 + $0x8] sm:$0xff]
      %6411 = vmatpush.msra.mxu0 0.0
      %6412 = vmatpush.msra.mxu0 0.0
      %6413 = vmatpush.msra.mxu0 0.0
      %6414 = vmatpush.msra.mxu0 0.0
      %6415 = vmatpush.msra.mxu0 0.0
      %6416 = vmatpush.msra.mxu0 0.0
      %6417 = vmatpush.msra.mxu0 0.0
      %6418 = vmatpush.msra.mxu0 0.0
      %6419 = vmatpush.msra.mxu0 0.0
      %6420 = vmatpush.msra.mxu0 0.0
      %6421 = vmatpush.msra.mxu0 0.0
      %6422 = vmatpush.msra.mxu0 0.0
      %6423 = vmatpush.msra.mxu0 0.0
      %6424 = vmatpush.msra.mxu0 0.0
      %6425 = vmatpush.msra.mxu0 %v6410
      %6426 = vmatpush.msra.mxu0 %v6409
      %6427 = vmatmul.f32.gmra.mxu0 %v967
      %v6428 = vpop.f32.mrf.mxu0
      %v6429 = vadd.f32 0.0, %v6428
      %6430 = vmatmul.f32.gmra.mxu0 %v969
      %v6431 = vpop.f32.mrf.mxu0
      %v6432 = vadd.f32 0.0, %v6431
      %6433 = vmatmul.f32.gmra.mxu0 %v971
      %v6434 = vpop.f32.mrf.mxu0
      %v6435 = vadd.f32 0.0, %v6434
      %6436 = vmatmul.f32.gmra.mxu0 %v973
      %v6437 = vpop.f32.mrf.mxu0
      %v6438 = vadd.f32 0.0, %v6437
      %6439 = vmatmul.f32.gmra.mxu0 %v975
      %v6440 = vpop.f32.mrf.mxu0
      %v6441 = vadd.f32 0.0, %v6440
      %6442 = vmatmul.f32.gmra.mxu0 %v977
      %v6443 = vpop.f32.mrf.mxu0
      %v6444 = vadd.f32 0.0, %v6443
      %6445 = vmatmul.f32.gmra.mxu0 %v979
      %v6446 = vpop.f32.mrf.mxu0
      %v6447 = vadd.f32 0.0, %v6446
      %6448 = vmatmul.f32.gmra.mxu0 %v981
      %v6449 = vpop.f32.mrf.mxu0
      %v6450 = vadd.f32 0.0, %v6449
      %6451 = vmatmul.f32.gmra.mxu0 %v983
      %v6452 = vpop.f32.mrf.mxu0
      %v6453 = vadd.f32 0.0, %v6452
      %6454 = vmatmul.f32.gmra.mxu0 %v985
      %v6455 = vpop.f32.mrf.mxu0
      %v6456 = vadd.f32 0.0, %v6455
      %6457 = vmatmul.f32.gmra.mxu0 %v987
      %v6458 = vpop.f32.mrf.mxu0
      %v6459 = vadd.f32 0.0, %v6458
      %6460 = vmatmul.f32.gmra.mxu0 %v989
      %v6461 = vpop.f32.mrf.mxu0
      %v6462 = vadd.f32 0.0, %v6461
      %6463 = vmatmul.f32.gmra.mxu0 %v991
      %v6464 = vpop.f32.mrf.mxu0
      %v6465 = vadd.f32 0.0, %v6464
      %6466 = vmatmul.f32.gmra.mxu0 %v993
      %v6467 = vpop.f32.mrf.mxu0
      %v6468 = vadd.f32 0.0, %v6467
      %6469 = vmatmul.f32.gmra.mxu0 %v995
      %v6470 = vpop.f32.mrf.mxu0
      %v6471 = vadd.f32 0.0, %v6470
      %6472 = vmatmul.f32.gmra.mxu0 %v997
      %v6473 = vpop.f32.mrf.mxu0
      %v6474 = vadd.f32 0.0, %v6473
      %6475 = vmatmul.f32.gmra.mxu0 %v999
      %v6476 = vpop.f32.mrf.mxu0
      %v6477 = vadd.f32 0.0, %v6476
      %6478 = vmatmul.f32.gmra.mxu0 %v1001
      %v6479 = vpop.f32.mrf.mxu0
      %v6480 = vadd.f32 0.0, %v6479
      %6481 = vmatmul.f32.gmra.mxu0 %v1003
      %v6482 = vpop.f32.mrf.mxu0
      %v6483 = vadd.f32 0.0, %v6482
      %6484 = vmatmul.f32.gmra.mxu0 %v1005
      %v6485 = vpop.f32.mrf.mxu0
      %v6486 = vadd.f32 0.0, %v6485
      %6487 = vmatmul.f32.gmra.mxu0 %v1007
      %v6488 = vpop.f32.mrf.mxu0
      %v6489 = vadd.f32 0.0, %v6488
      %6490 = vmatmul.f32.gmra.mxu0 %v1009
      %v6491 = vpop.f32.mrf.mxu0
      %v6492 = vadd.f32 0.0, %v6491
      %6493 = vmatmul.f32.gmra.mxu0 %v1011
      %v6494 = vpop.f32.mrf.mxu0
      %v6495 = vadd.f32 0.0, %v6494
      %6496 = vmatmul.f32.gmra.mxu0 %v1013
      %v6497 = vpop.f32.mrf.mxu0
      %v6498 = vadd.f32 0.0, %v6497
      %6499 = vmatmul.f32.gmra.mxu0 %v1015
      %v6500 = vpop.f32.mrf.mxu0
      %v6501 = vadd.f32 0.0, %v6500
      %6502 = vmatmul.f32.gmra.mxu0 %v1017
      %v6503 = vpop.f32.mrf.mxu0
      %v6504 = vadd.f32 0.0, %v6503
      %6505 = vmatmul.f32.gmra.mxu0 %v1019
      %v6506 = vpop.f32.mrf.mxu0
      %v6507 = vadd.f32 0.0, %v6506
      %6508 = vmatmul.f32.gmra.mxu0 %v1021
      %v6509 = vpop.f32.mrf.mxu0
      %v6510 = vadd.f32 0.0, %v6509
      %6511 = vmatmul.f32.gmra.mxu0 %v1023
      %v6512 = vpop.f32.mrf.mxu0
      %v6513 = vadd.f32 0.0, %v6512
      %6514 = vmatmul.f32.gmra.mxu0 %v1025
      %v6515 = vpop.f32.mrf.mxu0
      %v6516 = vadd.f32 0.0, %v6515
      %6517 = vmatmul.f32.gmra.mxu0 %v1027
      %v6518 = vpop.f32.mrf.mxu0
      %v6519 = vadd.f32 0.0, %v6518
      %6520 = vmatmul.f32.gmra.mxu0 %v1029
      %v6521 = vpop.f32.mrf.mxu0
      %v6522 = vadd.f32 0.0, %v6521
      %6523 = vdwg.mxu0
      %v6524 = vadd.f32 %v6377, %v6429
      %v6525 = vadd.f32 %v6378, %v6432
      %v6526 = vadd.f32 %v6379, %v6435
      %v6527 = vadd.f32 %v6380, %v6438
      %v6528 = vadd.f32 %v6381, %v6441
      %v6529 = vadd.f32 %v6382, %v6444
      %v6530 = vadd.f32 %v6383, %v6447
      %v6531 = vadd.f32 %v6384, %v6450
      %v6532 = vadd.f32 %v6385, %v6453
      %v6533 = vadd.f32 %v6386, %v6456
      %v6534 = vadd.f32 %v6387, %v6459
      %v6535 = vadd.f32 %v6388, %v6462
      %v6536 = vadd.f32 %v6389, %v6465
      %v6537 = vadd.f32 %v6390, %v6468
      %v6538 = vadd.f32 %v6391, %v6471
      %v6539 = vadd.f32 %v6392, %v6474
      %v6540 = vadd.f32 %v6393, %v6477
      %v6541 = vadd.f32 %v6394, %v6480
      %v6542 = vadd.f32 %v6395, %v6483
      %v6543 = vadd.f32 %v6396, %v6486
      %v6544 = vadd.f32 %v6397, %v6489
      %v6545 = vadd.f32 %v6398, %v6492
      %v6546 = vadd.f32 %v6399, %v6495
      %v6547 = vadd.f32 %v6400, %v6498
      %v6548 = vadd.f32 %v6401, %v6501
      %v6549 = vadd.f32 %v6402, %v6504
      %v6550 = vadd.f32 %v6403, %v6507
      %v6551 = vadd.f32 %v6404, %v6510
      %v6552 = vadd.f32 %v6405, %v6513
      %v6553 = vadd.f32 %v6406, %v6516
      %v6554 = vadd.f32 %v6407, %v6519
      %v6555 = vadd.f32 %v6408, %v6522
      %v6556 = vld [vmem:[%s5] sm:$0x1]
      %v6558 = vperm.slane %v6556, 0
      %v6560 = vadd.f32 %v6524, %v6558
      %v6561 = vadd.f32 %v6525, %v6558
      %v6562 = vadd.f32 %v6526, %v6558
      %v6563 = vadd.f32 %v6527, %v6558
      %v6564 = vadd.f32 %v6528, %v6558
      %v6565 = vadd.f32 %v6529, %v6558
      %v6566 = vadd.f32 %v6530, %v6558
      %v6567 = vadd.f32 %v6531, %v6558
      %v6568 = vadd.f32 %v6532, %v6558
      %v6569 = vadd.f32 %v6533, %v6558
      %v6570 = vadd.f32 %v6534, %v6558
      %v6571 = vadd.f32 %v6535, %v6558
      %v6572 = vadd.f32 %v6536, %v6558
      %v6573 = vadd.f32 %v6537, %v6558
      %v6574 = vadd.f32 %v6538, %v6558
      %v6575 = vadd.f32 %v6539, %v6558
      %v6576 = vadd.f32 %v6540, %v6558
      %v6577 = vadd.f32 %v6541, %v6558
      %v6578 = vadd.f32 %v6542, %v6558
      %v6579 = vadd.f32 %v6543, %v6558
      %v6580 = vadd.f32 %v6544, %v6558
      %v6581 = vadd.f32 %v6545, %v6558
      %v6582 = vadd.f32 %v6546, %v6558
      %v6583 = vadd.f32 %v6547, %v6558
      %v6584 = vadd.f32 %v6548, %v6558
      %v6585 = vadd.f32 %v6549, %v6558
      %v6586 = vadd.f32 %v6550, %v6558
      %v6587 = vadd.f32 %v6551, %v6558
      %v6588 = vadd.f32 %v6552, %v6558
      %v6589 = vadd.f32 %v6553, %v6558
      %v6590 = vadd.f32 %v6554, %v6558
      %v6591 = vadd.f32 %v6555, %v6558
      %v6592 = vmax.f32 %v6560, 0.0
      %v6593 = vmax.f32 %v6561, 0.0
      %v6594 = vmax.f32 %v6562, 0.0
      %v6595 = vmax.f32 %v6563, 0.0
      %v6596 = vmax.f32 %v6564, 0.0
      %v6597 = vmax.f32 %v6565, 0.0
      %v6598 = vmax.f32 %v6566, 0.0
      %v6599 = vmax.f32 %v6567, 0.0
      %v6600 = vmax.f32 %v6568, 0.0
      %v6601 = vmax.f32 %v6569, 0.0
      %v6602 = vmax.f32 %v6570, 0.0
      %v6603 = vmax.f32 %v6571, 0.0
      %v6604 = vmax.f32 %v6572, 0.0
      %v6605 = vmax.f32 %v6573, 0.0
      %v6606 = vmax.f32 %v6574, 0.0
      %v6607 = vmax.f32 %v6575, 0.0
      %v6608 = vmax.f32 %v6576, 0.0
      %v6609 = vmax.f32 %v6577, 0.0
      %v6610 = vmax.f32 %v6578, 0.0
      %v6611 = vmax.f32 %v6579, 0.0
      %v6612 = vmax.f32 %v6580, 0.0
      %v6613 = vmax.f32 %v6581, 0.0
      %v6614 = vmax.f32 %v6582, 0.0
      %v6615 = vmax.f32 %v6583, 0.0
      %v6616 = vmax.f32 %v6584, 0.0
      %v6617 = vmax.f32 %v6585, 0.0
      %v6618 = vmax.f32 %v6586, 0.0
      %v6619 = vmax.f32 %v6587, 0.0
      %v6620 = vmax.f32 %v6588, 0.0
      %v6621 = vmax.f32 %v6589, 0.0
      %v6622 = vmax.f32 %v6590, 0.0
      %v6623 = vmax.f32 %v6591, 0.0
      %6624 = vst.msk [vmem:[%s440] sm:$0xff] %vm4221, %v6592
      %6625 = vst.msk [vmem:[%s440 + $0x8] sm:$0xff] %vm4221, %v6593
      %6626 = vst.msk [vmem:[%s440 + $0x10] sm:$0xff] %vm4221, %v6594
      %6627 = vst.msk [vmem:[%s440 + $0x18] sm:$0xff] %vm4221, %v6595
      %6628 = vst.msk [vmem:[%s440 + $0x20] sm:$0xff] %vm4221, %v6596
      %6629 = vst.msk [vmem:[%s440 + $0x28] sm:$0xff] %vm4221, %v6597
      %6630 = vst.msk [vmem:[%s440 + $0x30] sm:$0xff] %vm4221, %v6598
      %6631 = vst.msk [vmem:[%s440 + $0x38] sm:$0xff] %vm4221, %v6599
      %6632 = vst.msk [vmem:[%s440 + $0x40] sm:$0xff] %vm4221, %v6600
      %6633 = vst.msk [vmem:[%s440 + $0x48] sm:$0xff] %vm4221, %v6601
      %6634 = vst.msk [vmem:[%s440 + $0x50] sm:$0xff] %vm4221, %v6602
      %6635 = vst.msk [vmem:[%s440 + $0x58] sm:$0xff] %vm4221, %v6603
      %6636 = vst.msk [vmem:[%s440 + $0x60] sm:$0xff] %vm4221, %v6604
      %6637 = vst.msk [vmem:[%s440 + $0x68] sm:$0xff] %vm4221, %v6605
      %6638 = vst.msk [vmem:[%s440 + $0x70] sm:$0xff] %vm4221, %v6606
      %6639 = vst.msk [vmem:[%s440 + $0x78] sm:$0xff] %vm4221, %v6607
      %6640 = vst.msk [vmem:[%s440 + $0x80] sm:$0xff] %vm4221, %v6608
      %6641 = vst.msk [vmem:[%s440 + $0x88] sm:$0xff] %vm4221, %v6609
      %6642 = vst.msk [vmem:[%s440 + $0x90] sm:$0xff] %vm4221, %v6610
      %6643 = vst.msk [vmem:[%s440 + $0x98] sm:$0xff] %vm4221, %v6611
      %6644 = vst.msk [vmem:[%s440 + $0xa0] sm:$0xff] %vm4221, %v6612
      %6645 = vst.msk [vmem:[%s440 + $0xa8] sm:$0xff] %vm4221, %v6613
      %6646 = vst.msk [vmem:[%s440 + $0xb0] sm:$0xff] %vm4221, %v6614
      %6647 = vst.msk [vmem:[%s440 + $0xb8] sm:$0xff] %vm4221, %v6615
      %6648 = vst.msk [vmem:[%s440 + $0xc0] sm:$0xff] %vm4221, %v6616
      %6649 = vst.msk [vmem:[%s440 + $0xc8] sm:$0xff] %vm4221, %v6617
      %6650 = vst.msk [vmem:[%s440 + $0xd0] sm:$0xff] %vm4221, %v6618
      %6651 = vst.msk [vmem:[%s440 + $0xd8] sm:$0xff] %vm4221, %v6619
      %6652 = vst.msk [vmem:[%s440 + $0xe0] sm:$0xff] %vm4221, %v6620
      %6653 = vst.msk [vmem:[%s440 + $0xe8] sm:$0xff] %vm4221, %v6621
      %6654 = vst.msk [vmem:[%s440 + $0xf0] sm:$0xff] %vm4221, %v6622
      %6655 = vst.msk [vmem:[%s440 + $0xf8] sm:$0xff] %vm4221, %v6623
      %s6656 = smul.u32 32, %s25
      %p6657 = scmp.lt.s32.totalorder %s24, 1
      %s6658 = scalar_select %p6657, %s24, 1
      %p6659 = scmp.lt.s32.totalorder %s6656, 31
      %s6660 = scalar_select %p6659, %s6656, 31
      %s6661 = smul.addr %s6658, 32
      %s6662 = sadd.s32 %s6660, %s6661
      %s6663 = smul.addr %s6662, 8
      %s6664 = scalar_lea.vmem %s9, %s6663
      // Predicated region
      $region57: #{_lambda_.3} parent=55 // pred_check
        %p6665 = pneg %p259
      $region58: #{_lambda_.3} parent=55 // pred_check_branch
        %6667 = sbr.rel (%p6665) target = $region60
      $region59: #{_lambda_.3} parent=55 // pred_region
        %s6668 = smul.u32 32, %s25
      $region60: #{_lambda_.3} parent=55 // pred_fallthru
        _
    $region56: #{_lambda_.3} parent=5 // pred_fallthru
      _
    %p6669 = scmp.le.s32.totalorder 2, %s15
    // Predicated region
    $region61: #{_lambda_.3} parent=5 // pred_check
      %p6670 = pneg %p6669
    $region62: #{_lambda_.3} parent=5 // pred_check_branch
      %6672 = sbr.rel (%p6670) target = $region64
    $region63: #{_lambda_.3} parent=5 // pred_region
      %s6673 = ssub.s32 %s15, 2
      // Predicated region
      $region65: #{_lambda_.3} parent=63 // pred_check
        %p6674 = pneg %p265
      $region66: #{_lambda_.3} parent=63 // pred_check_branch
        %6676 = sbr.rel (%p6674) target = $region68
      $region67: #{_lambda_.3} parent=63 // pred_region
        %s6677 = smul.u32 32, %s27
        %p6678 = scmp.lt.s32.totalorder %s26, 1
        %s6679 = scalar_select %p6678, %s26, 1
        %p6680 = scmp.lt.s32.totalorder %s6677, 31
        %s6681 = scalar_select %p6680, %s6677, 31
        %s6682 = smul.addr %s6679, 32
        %s6683 = sadd.s32 %s6681, %s6682
        %s6684 = smul.addr %s6683, 8
        %s6685 = scalar_lea.vmem %s9, %s6684
      $region68: #{_lambda_.3} parent=63 // pred_fallthru
        _
    $region64: #{_lambda_.3} parent=5 // pred_fallthru
      _
  $region6: #{_lambda_.3} parent=0 // loop_footer
    %s19 = sadd.s32 1, %s15
  $region7: #{_lambda_.3} parent=0 // loop_footer_branch
    %14 = sbr.rel target = $region3
  $region8: #{_lambda_.3} parent=0 // loop_exit
    _

</llo_original>
